<compile_context>
chip_gen: v6e
topology: v6e:2x2x1
jax: 0.10.0
libtpu: 0.0.40
codegen_flags: <defaults>
</compile_context>

<pallas_src>
import math

import numpy as np
import jax
import jax.numpy as jnp
from jax.experimental import pallas as pl
from jax.experimental.pallas import tpu as pltpu


# ----------------------------- math helpers --------------------------------

_SQRT1_2 = 0.7071067811865476


def _erf(x):
    # Abramowitz & Stegun 7.1.26 polynomial, |err| <= 1.5e-7: float32-accurate
    # stand-in for exact erf so GELU matches nn.GELU() (exact formulation).
    a = jnp.abs(x)
    t = 1.0 / (1.0 + 0.3275911 * a)
    poly = t * (0.254829592 + t * (-0.284496736 + t * (
        1.421413741 + t * (-1.453152027 + t * 1.061405429))))
    e = 1.0 - poly * jnp.exp(-a * a)
    return jnp.where(x < 0.0, -e, e)


def _gelu(x):
    return 0.5 * x * (1.0 + _erf(x * _SQRT1_2))


# ------------------------- host-side constant builders ---------------------

def _tap_masks_np(H, W, Bb):
    # (9, Bb*H*W) validity mask per 3x3 tap: 1.0 where the tapped pixel is
    # inside the image (zero-padding semantics of padding=1 / 'same').
    # Tiled Bb times along lanes so it also zeroes roll-wrap across the folded
    # batch boundaries.
    L = H * W
    hh = np.arange(L) // W
    ww = np.arange(L) % W
    masks = np.zeros((9, L), np.float32)
    for t in range(9):
        dh, dw = t // 3 - 1, t % 3 - 1
        ok = (hh + dh >= 0) & (hh + dh < H) & (ww + dw >= 0) & (ww + dw < W)
        masks[t] = ok.astype(np.float32)
    return np.tile(masks, (1, Bb))


def _parity_masks_np(H, W, Bb):
    # (4, Bb*H*W) 0/1 masks selecting the (h%2, w%2) parity class of each
    # position; used to fuse stride-2 pick + nearest 2x upsample into
    # "copy the top-left value of every 2x2 block".
    L = H * W
    hh = np.arange(L) // W
    ww = np.arange(L) % W
    par = (hh % 2) * 2 + (ww % 2)
    masks = np.zeros((4, L), np.float32)
    for p in range(4):
        masks[p] = (par == p).astype(np.float32)
    return np.tile(masks, (1, Bb))


# ------------------------------ fused kernel --------------------------------

def _make_fused_kernel(C, H, W, Bb):
    L = H * W
    Lt = Bb * L

    def kernel(x_ref, keep_ref, tap_ref, par_ref, emb_ref,
               wc1_ref, wf1_ref, wd1_ref, wt4_ref,
               g_ref, b_ref, o_ref, stack_ref):
        x = x_ref[...]                      # (C, Lt)
        keep = keep_ref[...]                # (1, Lt): 1 where NOT padded
        tap = tap_ref[...]                  # (9, Lt)
        par = par_ref[...]                  # (4, Lt)
        emb = emb_ref[...]                  # (2C, 2C) identity
        wc1 = wc1_ref[...]                  # (C, 9C) packed
        wf1 = wf1_ref[...]                  # (C, C)   1x1 conv
        wd1 = wd1_ref[...]                  # (C, 9C) packed
        wt4 = wt4_ref[...]                  # (C, 9C) packed
        g_all = g_ref[...]                  # (C, 4)  [ln1a, ln1b, ln1c, ln4a]
        b_all = b_ref[...]                  # (C, 4)
        inv_c = jnp.full((1, C), 1.0 / C, jnp.float32)

        def conv3x3(inp, w_packed):
            # im2col stack in VMEM: row block t holds roll_t(inp) * tap_t.
            # One K=9C MXU dot per conv instead of 9 tiny K=C dots.
            for t in range(9):
                dh, dw = t // 3 - 1, t % 3 - 1
                d = dh * W + dw             # flattened tap offset
                if d == 0:
                    s = inp
                else:
                    # s[l] = inp[l + d]; cross-row / cross-image wrap values
                    # are zeroed by the tap validity mask.
                    s = pltpu.roll(inp, (-d) % Lt, axis=1)
                stack_ref[t * C:(t + 1) * C, :] = s * tap[t:t + 1, :]
            return jnp.dot(w_packed, stack_ref[...],
                           preferred_element_type=jnp.float32)

        def ln_gelu(h, idx):
            # Channel LayerNorm (reduce over axis 0 == C): moments via (1,C)
            # dots on the otherwise-idle MXU slot (XLU is busy with rolls).
            # eps matches the reference LayerNorm: (x-u)/sqrt(var + 1e-6).
            u = jnp.dot(inv_c, h, preferred_element_type=jnp.float32)
            d = h - u
            s = jnp.dot(inv_c, d * d, preferred_element_type=jnp.float32)
            y = d * jax.lax.rsqrt(s + 1e-6)
            return _gelu(g_all[:, idx:idx + 1] * y + b_all[:, idx:idx + 1])

        # ---- cnns1 branch (cnn_type == 0) --------------------------------
        # stage A: mask -> c1 -> LN -> GELU -> + residual
        y = x
        h = conv3x3(y * keep, wc1)
        y = ln_gelu(h, 0) + y
        # stage B: same block again (c1 weights are shared in the reference)
        h = conv3x3(y * keep, wc1)
        y = ln_gelu(h, 1) + y
        # stage C: mask -> f1 (1x1 nn.Conv2d) -> +residual -> LN -> GELU
        h = jnp.dot(wf1, y * keep, preferred_element_type=jnp.float32) + y
        t_ver2 = ln_gelu(h, 2)              # no post-GELU residual (flag off)

        # ---- cnns4 branch (cnn_type == 3), flag=4 -> no masking ----------
        full = conv3x3(x, wd1)              # stride-1 'same' conv
        # stride-2 pick + nearest 2x upsample fused: each position takes the
        # top-left value of its 2x2 block (LN/GELU are per-position, so they
        # commute with this duplication -> identical to the reference order).
        q = full * par[0:1, :]
        q = q + pltpu.roll(full, 1, axis=1) * par[1:2, :]
        q = q + pltpu.roll(full, W, axis=1) * par[2:3, :]
        q = q + pltpu.roll(full, W + 1, axis=1) * par[3:4, :]
        iup = ln_gelu(q, 3)
        # NOTE: the reference also computes t_se[2] (second stride-2 conv +
        # LN + GELU) which is never consumed by the output; dead path removed.
        tse0 = conv3x3(iup, wt4)            # t4_trans

        # ---- channel concat + final masked_fill as ONE full-tile store ----
        # emb == I_{2C}; two tiny MXU dots place the halves into a (2C, Lt)
        # register block so the output store is a single unmasked vst.
        o_ref[...] = (jnp.dot(emb[:, :C], t_ver2,
                              preferred_element_type=jnp.float32)
                      + jnp.dot(emb[:, C:], tse0,
                                preferred_element_type=jnp.float32)) * keep

    return kernel


# ------------------------------ forward -------------------------------------

def mask_cnn_1_forward(x, mask, params):
    B, C, H, W = x.shape
    assert H % 2 == 0 and W % 2 == 0, (
        "stride-2 conv + nearest-upsample path assumes even H and W")
    L = H * W

    # Grid / batch-fold policy: keep >= 2 "parallel" grid steps when possible
    # (both v7x TensorCores busy), fold the remaining batches into the lane
    # axis (Bb*L lanes per step) to amortize per-issue cost on v5e/v6e.
    if B % 2 == 0:
        n_blk = 2
    elif B == 1:
        n_blk = 1
    else:
        n_blk = B
    Bb = B // n_blk
    Lt = Bb * L

    x_f = (x.astype(jnp.float32).reshape(n_blk, Bb, C, L)
           .transpose(0, 2, 1, 3).reshape(n_blk, C, Lt))
    keep_f = ((1.0 - mask.astype(jnp.float32)).reshape(n_blk, Bb, 1, L)
              .transpose(0, 2, 1, 3).reshape(n_blk, 1, Lt))

    # Small constant operands (built host-side, O(L) each — no dense L x L/4
    # subsample/upsample matrices anymore).
    tap = jnp.asarray(_tap_masks_np(H, W, Bb))        # (9, Lt)
    par = jnp.asarray(_parity_masks_np(H, W, Bb))     # (4, Lt)
    emb = jnp.eye(2 * C, dtype=jnp.float32)           # (2C, 2C)

    def pack9(w):
        # (Co, Ci, 3, 3) -> (Co, 9*Ci); column index = (kh*3 + kw)*Ci + ci,
        # matching the im2col stack row order inside the kernel.
        return jnp.transpose(w, (0, 2, 3, 1)).reshape(C, 9 * C)

    wc1 = pack9(params['wc1'])
    wd1 = pack9(params['wd1'])
    wt4 = pack9(params['wt4'])
    wf1 = params['wf1'].reshape(C, C)                 # 1x1 conv

    ln_g = jnp.concatenate([params['ln1a_g'], params['ln1b_g'],
                            params['ln1c_g'], params['ln4a_g']], axis=1)
    ln_b = jnp.concatenate([params['ln1a_b'], params['ln1b_b'],
                            params['ln1c_b'], params['ln4a_b']], axis=1)

    kernel = _make_fused_kernel(C, H, W, Bb)
    const2 = lambda b: (0, 0)

    out = pl.pallas_call(
        kernel,
        out_shape=jax.ShapeDtypeStruct((n_blk, 2 * C, Lt), jnp.float32),
        grid=(n_blk,),
        in_specs=[
            pl.BlockSpec((None, C, Lt), lambda b: (b, 0, 0)),   # x (folded)
            pl.BlockSpec((None, 1, Lt), lambda b: (b, 0, 0)),   # keep mask
            pl.BlockSpec((9, Lt), const2),                      # tap validity
            pl.BlockSpec((4, Lt), const2),                      # 2x2 parity
            pl.BlockSpec((2 * C, 2 * C), const2),               # I_{2C}
            pl.BlockSpec((C, 9 * C), const2),                   # wc1 packed
            pl.BlockSpec((C, C), const2),                       # wf1 (1x1)
            pl.BlockSpec((C, 9 * C), const2),                   # wd1 packed
            pl.BlockSpec((C, 9 * C), const2),                   # wt4 packed
            pl.BlockSpec((C, 4), const2),                       # LN gammas
            pl.BlockSpec((C, 4), const2),                       # LN betas
        ],
        out_specs=pl.BlockSpec((None, 2 * C, Lt), lambda b: (b, 0, 0)),
        scratch_shapes=[pltpu.VMEM((9 * C, Lt), jnp.float32)],  # im2col stack
        compiler_params=pltpu.CompilerParams(
            dimension_semantics=("parallel",)),
    )(x_f, keep_f, tap, par, emb, wc1, wf1, wd1, wt4, ln_g, ln_b)

    return (out.reshape(n_blk, 2 * C, Bb, L).transpose(0, 2, 1, 3)
            .reshape(B, 2 * C, H, W))


# ------------------------------ params --------------------------------------

def init_params(key, C):
    ks = jax.random.split(key, 5)

    def conv_w(k, cin, cout, ksz):
        fan_in = cin * ksz * ksz
        bound = 1.0 / math.sqrt(fan_in)
        return jax.random.uniform(k, (cout, cin, ksz, ksz), jnp.float32,
                                  -bound, bound)

    params = {
        'wc1': conv_w(ks[0], C, C, 3),   # c1 (Conv2d_selfAdapt approx., shared)
        'wf1': conv_w(ks[1], C, C, 1),   # f1 (1x1 nn.Conv2d, bias=False)
        'wd1': conv_w(ks[2], C, C, 3),   # cnns4 stride-2 conv #1
        'wt4': conv_w(ks[3], C, C, 3),   # t4_trans (bias=False)
        # cnns4's second stride-2 conv + its LayerNorm (t_se[2]) are dead
        # w.r.t. the module output and are intentionally not instantiated.
    }
    for name in ('ln1a', 'ln1b', 'ln1c', 'ln4a'):
        params[name + '_g'] = jnp.ones((C, 1), jnp.float32)   # LN weight = 1
        params[name + '_b'] = jnp.zeros((C, 1), jnp.float32)  # LN bias   = 0
    return params


# ------------------------------ main -----------------------------------------

if __name__ == "__main__":
    B, C, H, W = 2, 4, 16, 16

    key = jax.random.PRNGKey(0)
    k_x, k_p = jax.random.split(key)
    x = jax.random.normal(k_x, (B, C, H, W), jnp.float32)

    # mask: bsz x 1 x H x W (broadcasts over channels incl. the 2C concat),
    # True = pad position.
    mask = jnp.zeros((B, 1, H, W), jnp.bool_)
    mask = mask.at[:, :, :, W - 4:].set(True)
    mask = mask.at[:, :, H - 3:, :].set(True)

    params = init_params(k_p, C)

    fwd = jax.jit(mask_cnn_1_forward)
    out = fwd(x, mask, params)
    jax.block_until_ready(out)

    assert out.shape == (B, 2 * C, H, W)
    assert out.dtype == jnp.float32
    print("KERNEL_OK")
</pallas_src>

<mosaic_0001>
module attributes {stable_mosaic.version = 11 : i64} {
  func.func @kernel(%arg0: i32, %arg1: memref<1x4x256xf32, #tpu.memory_space<vmem>>, %arg2: memref<1x1x256xf32, #tpu.memory_space<vmem>>, %arg3: memref<9x256xf32, #tpu.memory_space<vmem>>, %arg4: memref<4x256xf32, #tpu.memory_space<vmem>>, %arg5: memref<8x8xf32, #tpu.memory_space<vmem>>, %arg6: memref<4x36xf32, #tpu.memory_space<vmem>>, %arg7: memref<4x4xf32, #tpu.memory_space<vmem>>, %arg8: memref<4x36xf32, #tpu.memory_space<vmem>>, %arg9: memref<4x36xf32, #tpu.memory_space<vmem>>, %arg10: memref<4x4xf32, #tpu.memory_space<vmem>>, %arg11: memref<4x4xf32, #tpu.memory_space<vmem>>, %arg12: memref<1x8x256xf32, #tpu.memory_space<vmem>>, %arg13: memref<36x256xf32, #tpu.memory_space<vmem>>) attributes {dimension_semantics = [#tpu.dimension_semantics<parallel>], iteration_bounds = array<i64: 2>, scalar_prefetch = 0 : i64, scratch_operands = 1 : i64, tpu.core_type = #tpu.core_type<tc>, window_params = [{transform_indices = @transform_0, window_bounds = array<i64: 1, 4, 256>}, {transform_indices = @transform_1, window_bounds = array<i64: 1, 1, 256>}, {pipeline_mode = #tpu.pipeline_mode<synchronous>, transform_indices = @transform_2, window_bounds = array<i64: 9, 256>}, {pipeline_mode = #tpu.pipeline_mode<synchronous>, transform_indices = @transform_3, window_bounds = array<i64: 4, 256>}, {pipeline_mode = #tpu.pipeline_mode<synchronous>, transform_indices = @transform_4, window_bounds = array<i64: 8, 8>}, {pipeline_mode = #tpu.pipeline_mode<synchronous>, transform_indices = @transform_5, window_bounds = array<i64: 4, 36>}, {pipeline_mode = #tpu.pipeline_mode<synchronous>, transform_indices = @transform_6, window_bounds = array<i64: 4, 4>}, {pipeline_mode = #tpu.pipeline_mode<synchronous>, transform_indices = @transform_7, window_bounds = array<i64: 4, 36>}, {pipeline_mode = #tpu.pipeline_mode<synchronous>, transform_indices = @transform_8, window_bounds = array<i64: 4, 36>}, {pipeline_mode = #tpu.pipeline_mode<synchronous>, transform_indices = @transform_9, window_bounds = array<i64: 4, 4>}, {pipeline_mode = #tpu.pipeline_mode<synchronous>, transform_indices = @transform_10, window_bounds = array<i64: 4, 4>}, {transform_indices = @transform_11, window_bounds = array<i64: 1, 8, 256>}]} {
    %c0 = arith.constant 0 : index
    %c0_0 = arith.constant 0 : index
    %c0_1 = arith.constant 0 : index
    %0 = vector.load %arg1[%c0, %c0_0, %c0_1] : memref<1x4x256xf32, #tpu.memory_space<vmem>>, vector<1x4x256xf32>
    %1 = vector.shape_cast %0 : vector<1x4x256xf32> to vector<4x256xf32>
    %c0_2 = arith.constant 0 : index
    %c0_3 = arith.constant 0 : index
    %c0_4 = arith.constant 0 : index
    %2 = vector.load %arg2[%c0_2, %c0_3, %c0_4] : memref<1x1x256xf32, #tpu.memory_space<vmem>>, vector<1x1x256xf32>
    %3 = vector.shape_cast %2 : vector<1x1x256xf32> to vector<1x256xf32>
    %c0_5 = arith.constant 0 : index
    %c0_6 = arith.constant 0 : index
    %4 = vector.load %arg3[%c0_5, %c0_6] : memref<9x256xf32, #tpu.memory_space<vmem>>, vector<9x256xf32>
    %c0_7 = arith.constant 0 : index
    %c0_8 = arith.constant 0 : index
    %5 = vector.load %arg4[%c0_7, %c0_8] : memref<4x256xf32, #tpu.memory_space<vmem>>, vector<4x256xf32>
    %c0_9 = arith.constant 0 : index
    %c0_10 = arith.constant 0 : index
    %6 = vector.load %arg5[%c0_9, %c0_10] : memref<8x8xf32, #tpu.memory_space<vmem>>, vector<8x8xf32>
    %c0_11 = arith.constant 0 : index
    %c0_12 = arith.constant 0 : index
    %7 = vector.load %arg6[%c0_11, %c0_12] : memref<4x36xf32, #tpu.memory_space<vmem>>, vector<4x36xf32>
    %c0_13 = arith.constant 0 : index
    %c0_14 = arith.constant 0 : index
    %8 = vector.load %arg7[%c0_13, %c0_14] : memref<4x4xf32, #tpu.memory_space<vmem>>, vector<4x4xf32>
    %c0_15 = arith.constant 0 : index
    %c0_16 = arith.constant 0 : index
    %9 = vector.load %arg8[%c0_15, %c0_16] : memref<4x36xf32, #tpu.memory_space<vmem>>, vector<4x36xf32>
    %c0_17 = arith.constant 0 : index
    %c0_18 = arith.constant 0 : index
    %10 = vector.load %arg9[%c0_17, %c0_18] : memref<4x36xf32, #tpu.memory_space<vmem>>, vector<4x36xf32>
    %c0_19 = arith.constant 0 : index
    %c0_20 = arith.constant 0 : index
    %11 = vector.load %arg10[%c0_19, %c0_20] : memref<4x4xf32, #tpu.memory_space<vmem>>, vector<4x4xf32>
    %c0_21 = arith.constant 0 : index
    %c0_22 = arith.constant 0 : index
    %12 = vector.load %arg11[%c0_21, %c0_22] : memref<4x4xf32, #tpu.memory_space<vmem>>, vector<4x4xf32>
    %cst = arith.constant 2.500000e-01 : f32
    %13 = vector.broadcast %cst : f32 to vector<1x4xf32>
    %14 = vector.broadcast %3 : vector<1x256xf32> to vector<4x256xf32>
    %15 = arith.mulf %1, %14 : vector<4x256xf32>
    %c17_i32 = arith.constant 17 : i32
    %16 = tpu.dynamic_rotate %15 by %c17_i32 dim 1 : vector<4x256xf32>, i32 -> vector<4x256xf32>
    %17 = vector.extract_strided_slice %4 {offsets = [0, 0], sizes = [1, 256], strides = [1, 1]} : vector<9x256xf32> to vector<1x256xf32>
    %18 = vector.broadcast %17 : vector<1x256xf32> to vector<4x256xf32>
    %19 = arith.mulf %16, %18 : vector<4x256xf32>
    %c0_23 = arith.constant 0 : index
    %c0_24 = arith.constant 0 : index
    %20 = vector.load %arg13[%c0_23, %c0_24] : memref<36x256xf32, #tpu.memory_space<vmem>>, vector<4x256xf32>
    tpu.vector_store %arg13[%c0_23, %c0_24], %19 {strides = array<i32>} : memref<36x256xf32, #tpu.memory_space<vmem>>, vector<4x256xf32>,
    %c16_i32 = arith.constant 16 : i32
    %21 = tpu.dynamic_rotate %15 by %c16_i32 dim 1 : vector<4x256xf32>, i32 -> vector<4x256xf32>
    %22 = vector.extract_strided_slice %4 {offsets = [1, 0], sizes = [1, 256], strides = [1, 1]} : vector<9x256xf32> to vector<1x256xf32>
    %23 = vector.broadcast %22 : vector<1x256xf32> to vector<4x256xf32>
    %24 = arith.mulf %21, %23 : vector<4x256xf32>
    %c4 = arith.constant 4 : index
    %c0_25 = arith.constant 0 : index
    %25 = vector.load %arg13[%c4, %c0_25] : memref<36x256xf32, #tpu.memory_space<vmem>>, vector<4x256xf32>
    tpu.vector_store %arg13[%c4, %c0_25], %24 {strides = array<i32>} : memref<36x256xf32, #tpu.memory_space<vmem>>, vector<4x256xf32>,
    %c15_i32 = arith.constant 15 : i32
    %26 = tpu.dynamic_rotate %15 by %c15_i32 dim 1 : vector<4x256xf32>, i32 -> vector<4x256xf32>
    %27 = vector.extract_strided_slice %4 {offsets = [2, 0], sizes = [1, 256], strides = [1, 1]} : vector<9x256xf32> to vector<1x256xf32>
    %28 = vector.broadcast %27 : vector<1x256xf32> to vector<4x256xf32>
    %29 = arith.mulf %26, %28 : vector<4x256xf32>
    %c8 = arith.constant 8 : index
    %c0_26 = arith.constant 0 : index
    %30 = vector.load %arg13[%c8, %c0_26] : memref<36x256xf32, #tpu.memory_space<vmem>>, vector<4x256xf32>
    tpu.vector_store %arg13[%c8, %c0_26], %29 {strides = array<i32>} : memref<36x256xf32, #tpu.memory_space<vmem>>, vector<4x256xf32>,
    %c1_i32 = arith.constant 1 : i32
    %31 = tpu.dynamic_rotate %15 by %c1_i32 dim 1 : vector<4x256xf32>, i32 -> vector<4x256xf32>
    %32 = vector.extract_strided_slice %4 {offsets = [3, 0], sizes = [1, 256], strides = [1, 1]} : vector<9x256xf32> to vector<1x256xf32>
    %33 = vector.broadcast %32 : vector<1x256xf32> to vector<4x256xf32>
    %34 = arith.mulf %31, %33 : vector<4x256xf32>
    %c12 = arith.constant 12 : index
    %c0_27 = arith.constant 0 : index
    %35 = vector.load %arg13[%c12, %c0_27] : memref<36x256xf32, #tpu.memory_space<vmem>>, vector<4x256xf32>
    tpu.vector_store %arg13[%c12, %c0_27], %34 {strides = array<i32>} : memref<36x256xf32, #tpu.memory_space<vmem>>, vector<4x256xf32>,
    %36 = vector.extract_strided_slice %4 {offsets = [4, 0], sizes = [1, 256], strides = [1, 1]} : vector<9x256xf32> to vector<1x256xf32>
    %37 = vector.broadcast %36 : vector<1x256xf32> to vector<4x256xf32>
    %38 = arith.mulf %15, %37 : vector<4x256xf32>
    %c16 = arith.constant 16 : index
    %c0_28 = arith.constant 0 : index
    %39 = vector.load %arg13[%c16, %c0_28] : memref<36x256xf32, #tpu.memory_space<vmem>>, vector<4x256xf32>
    tpu.vector_store %arg13[%c16, %c0_28], %38 {strides = array<i32>} : memref<36x256xf32, #tpu.memory_space<vmem>>, vector<4x256xf32>,
    %c255_i32 = arith.constant 255 : i32
    %40 = tpu.dynamic_rotate %15 by %c255_i32 dim 1 : vector<4x256xf32>, i32 -> vector<4x256xf32>
    %41 = vector.extract_strided_slice %4 {offsets = [5, 0], sizes = [1, 256], strides = [1, 1]} : vector<9x256xf32> to vector<1x256xf32>
    %42 = vector.broadcast %41 : vector<1x256xf32> to vector<4x256xf32>
    %43 = arith.mulf %40, %42 : vector<4x256xf32>
    %c20 = arith.constant 20 : index
    %c0_29 = arith.constant 0 : index
    %44 = vector.load %arg13[%c20, %c0_29] : memref<36x256xf32, #tpu.memory_space<vmem>>, vector<4x256xf32>
    tpu.vector_store %arg13[%c20, %c0_29], %43 {strides = array<i32>} : memref<36x256xf32, #tpu.memory_space<vmem>>, vector<4x256xf32>,
    %c241_i32 = arith.constant 241 : i32
    %45 = tpu.dynamic_rotate %15 by %c241_i32 dim 1 : vector<4x256xf32>, i32 -> vector<4x256xf32>
    %46 = vector.extract_strided_slice %4 {offsets = [6, 0], sizes = [1, 256], strides = [1, 1]} : vector<9x256xf32> to vector<1x256xf32>
    %47 = vector.broadcast %46 : vector<1x256xf32> to vector<4x256xf32>
    %48 = arith.mulf %45, %47 : vector<4x256xf32>
    %c24 = arith.constant 24 : index
    %c0_30 = arith.constant 0 : index
    %49 = vector.load %arg13[%c24, %c0_30] : memref<36x256xf32, #tpu.memory_space<vmem>>, vector<4x256xf32>
    tpu.vector_store %arg13[%c24, %c0_30], %48 {strides = array<i32>} : memref<36x256xf32, #tpu.memory_space<vmem>>, vector<4x256xf32>,
    %c240_i32 = arith.constant 240 : i32
    %50 = tpu.dynamic_rotate %15 by %c240_i32 dim 1 : vector<4x256xf32>, i32 -> vector<4x256xf32>
    %51 = vector.extract_strided_slice %4 {offsets = [7, 0], sizes = [1, 256], strides = [1, 1]} : vector<9x256xf32> to vector<1x256xf32>
    %52 = vector.broadcast %51 : vector<1x256xf32> to vector<4x256xf32>
    %53 = arith.mulf %50, %52 : vector<4x256xf32>
    %c28 = arith.constant 28 : index
    %c0_31 = arith.constant 0 : index
    %54 = vector.load %arg13[%c28, %c0_31] : memref<36x256xf32, #tpu.memory_space<vmem>>, vector<4x256xf32>
    tpu.vector_store %arg13[%c28, %c0_31], %53 {strides = array<i32>} : memref<36x256xf32, #tpu.memory_space<vmem>>, vector<4x256xf32>,
    %c239_i32 = arith.constant 239 : i32
    %55 = tpu.dynamic_rotate %15 by %c239_i32 dim 1 : vector<4x256xf32>, i32 -> vector<4x256xf32>
    %56 = vector.extract_strided_slice %4 {offsets = [8, 0], sizes = [1, 256], strides = [1, 1]} : vector<9x256xf32> to vector<1x256xf32>
    %57 = vector.broadcast %56 : vector<1x256xf32> to vector<4x256xf32>
    %58 = arith.mulf %55, %57 : vector<4x256xf32>
    %c32 = arith.constant 32 : index
    %c0_32 = arith.constant 0 : index
    %59 = vector.load %arg13[%c32, %c0_32] : memref<36x256xf32, #tpu.memory_space<vmem>>, vector<4x256xf32>
    tpu.vector_store %arg13[%c32, %c0_32], %58 {strides = array<i32>} : memref<36x256xf32, #tpu.memory_space<vmem>>, vector<4x256xf32>,
    %c0_33 = arith.constant 0 : index
    %c0_34 = arith.constant 0 : index
    %60 = vector.load %arg13[%c0_33, %c0_34] : memref<36x256xf32, #tpu.memory_space<vmem>>, vector<36x256xf32>
    %cst_35 = arith.constant dense<0.000000e+00> : vector<4x256xf32>
    %61 = tpu.matmul %7, %60, %cst_35 {dimension_numbers = #tpu.dot_dimension_numbers<[1], [0], [0], [1], [0, 0, 1, 1], [], []>} : vector<4x36xf32>, vector<36x256xf32>, vector<4x256xf32> -> vector<4x256xf32>
    %cst_36 = arith.constant dense<0.000000e+00> : vector<1x256xf32>
    %62 = tpu.matmul %13, %61, %cst_36 {dimension_numbers = #tpu.dot_dimension_numbers<[1], [0], [0], [1], [0, 0, 1, 1], [], []>} : vector<1x4xf32>, vector<4x256xf32>, vector<1x256xf32> -> vector<1x256xf32>
    %63 = vector.broadcast %62 : vector<1x256xf32> to vector<4x256xf32>
    %64 = arith.subf %61, %63 : vector<4x256xf32>
    %65 = arith.mulf %64, %64 : vector<4x256xf32>
    %cst_37 = arith.constant dense<0.000000e+00> : vector<1x256xf32>
    %66 = tpu.matmul %13, %65, %cst_37 {dimension_numbers = #tpu.dot_dimension_numbers<[1], [0], [0], [1], [0, 0, 1, 1], [], []>} : vector<1x4xf32>, vector<4x256xf32>, vector<1x256xf32> -> vector<1x256xf32>
    %cst_38 = arith.constant 9.99999997E-7 : f32
    %67 = vector.broadcast %cst_38 : f32 to vector<1x256xf32>
    %68 = arith.addf %66, %67 : vector<1x256xf32>
    %69 = math.rsqrt %68 : vector<1x256xf32>
    %70 = vector.broadcast %69 : vector<1x256xf32> to vector<4x256xf32>
    %71 = arith.mulf %64, %70 : vector<4x256xf32>
    %72 = vector.extract_strided_slice %11 {offsets = [0, 0], sizes = [4, 1], strides = [1, 1]} : vector<4x4xf32> to vector<4x1xf32>
    %73 = vector.broadcast %72 : vector<4x1xf32> to vector<4x256xf32>
    %74 = arith.mulf %73, %71 : vector<4x256xf32>
    %75 = vector.extract_strided_slice %12 {offsets = [0, 0], sizes = [4, 1], strides = [1, 1]} : vector<4x4xf32> to vector<4x1xf32>
    %76 = vector.broadcast %75 : vector<4x1xf32> to vector<4x256xf32>
    %77 = arith.addf %74, %76 : vector<4x256xf32>
    %cst_39 = arith.constant 5.000000e-01 : f32
    %78 = vector.broadcast %cst_39 : f32 to vector<4x256xf32>
    %79 = arith.mulf %78, %77 : vector<4x256xf32>
    %cst_40 = arith.constant 0.707106769 : f32
    %80 = vector.broadcast %cst_40 : f32 to vector<4x256xf32>
    %81 = arith.mulf %77, %80 : vector<4x256xf32>
    %82 = math.absf %81 : vector<4x256xf32>
    %cst_41 = arith.constant 0.327591091 : f32
    %83 = vector.broadcast %cst_41 : f32 to vector<4x256xf32>
    %84 = arith.mulf %83, %82 : vector<4x256xf32>
    %cst_42 = arith.constant 1.000000e+00 : f32
    %85 = vector.broadcast %cst_42 : f32 to vector<4x256xf32>
    %86 = arith.addf %85, %84 : vector<4x256xf32>
    %cst_43 = arith.constant 1.000000e+00 : f32
    %87 = vector.broadcast %cst_43 : f32 to vector<4x256xf32>
    %88 = arith.divf %87, %86 : vector<4x256xf32>
    %cst_44 = arith.constant 1.06140542 : f32
    %89 = vector.broadcast %cst_44 : f32 to vector<4x256xf32>
    %90 = arith.mulf %88, %89 : vector<4x256xf32>
    %cst_45 = arith.constant -1.45315206 : f32
    %91 = vector.broadcast %cst_45 : f32 to vector<4x256xf32>
    %92 = arith.addf %91, %90 : vector<4x256xf32>
    %93 = arith.mulf %88, %92 : vector<4x256xf32>
    %cst_46 = arith.constant 1.42141378 : f32
    %94 = vector.broadcast %cst_46 : f32 to vector<4x256xf32>
    %95 = arith.addf %94, %93 : vector<4x256xf32>
    %96 = arith.mulf %88, %95 : vector<4x256xf32>
    %cst_47 = arith.constant -0.284496725 : f32
    %97 = vector.broadcast %cst_47 : f32 to vector<4x256xf32>
    %98 = arith.addf %97, %96 : vector<4x256xf32>
    %99 = arith.mulf %88, %98 : vector<4x256xf32>
    %cst_48 = arith.constant 0.254829586 : f32
    %100 = vector.broadcast %cst_48 : f32 to vector<4x256xf32>
    %101 = arith.addf %100, %99 : vector<4x256xf32>
    %102 = arith.mulf %88, %101 : vector<4x256xf32>
    %cst_49 = arith.constant 0.000000e+00 : f32
    %103 = vector.broadcast %cst_49 : f32 to vector<4x256xf32>
    %104 = arith.subf %103, %82 : vector<4x256xf32>
    %105 = arith.mulf %104, %82 : vector<4x256xf32>
    %106 = math.exp %105 : vector<4x256xf32>
    %107 = arith.mulf %102, %106 : vector<4x256xf32>
    %cst_50 = arith.constant 1.000000e+00 : f32
    %108 = vector.broadcast %cst_50 : f32 to vector<4x256xf32>
    %109 = arith.subf %108, %107 : vector<4x256xf32>
    %cst_51 = arith.constant 0.000000e+00 : f32
    %110 = vector.broadcast %cst_51 : f32 to vector<4x256xf32>
    %111 = arith.cmpf olt, %81, %110 : vector<4x256xf32>
    %cst_52 = arith.constant 0.000000e+00 : f32
    %112 = vector.broadcast %cst_52 : f32 to vector<4x256xf32>
    %113 = arith.subf %112, %109 : vector<4x256xf32>
    %114 = arith.select %111, %113, %109 : vector<4x256xi1>, vector<4x256xf32>
    %cst_53 = arith.constant 1.000000e+00 : f32
    %115 = vector.broadcast %cst_53 : f32 to vector<4x256xf32>
    %116 = arith.addf %115, %114 : vector<4x256xf32>
    %117 = arith.mulf %79, %116 : vector<4x256xf32>
    %118 = arith.addf %117, %1 : vector<4x256xf32>
    %119 = vector.broadcast %3 : vector<1x256xf32> to vector<4x256xf32>
    %120 = arith.mulf %118, %119 : vector<4x256xf32>
    %c17_i32_54 = arith.constant 17 : i32
    %121 = tpu.dynamic_rotate %120 by %c17_i32_54 dim 1 : vector<4x256xf32>, i32 -> vector<4x256xf32>
    %122 = vector.extract_strided_slice %4 {offsets = [0, 0], sizes = [1, 256], strides = [1, 1]} : vector<9x256xf32> to vector<1x256xf32>
    %123 = vector.broadcast %122 : vector<1x256xf32> to vector<4x256xf32>
    %124 = arith.mulf %121, %123 : vector<4x256xf32>
    %c0_55 = arith.constant 0 : index
    %c0_56 = arith.constant 0 : index
    %125 = vector.load %arg13[%c0_55, %c0_56] : memref<36x256xf32, #tpu.memory_space<vmem>>, vector<4x256xf32>
    tpu.vector_store %arg13[%c0_55, %c0_56], %124 {strides = array<i32>} : memref<36x256xf32, #tpu.memory_space<vmem>>, vector<4x256xf32>,
    %c16_i32_57 = arith.constant 16 : i32
    %126 = tpu.dynamic_rotate %120 by %c16_i32_57 dim 1 : vector<4x256xf32>, i32 -> vector<4x256xf32>
    %127 = vector.extract_strided_slice %4 {offsets = [1, 0], sizes = [1, 256], strides = [1, 1]} : vector<9x256xf32> to vector<1x256xf32>
    %128 = vector.broadcast %127 : vector<1x256xf32> to vector<4x256xf32>
    %129 = arith.mulf %126, %128 : vector<4x256xf32>
    %c4_58 = arith.constant 4 : index
    %c0_59 = arith.constant 0 : index
    %130 = vector.load %arg13[%c4_58, %c0_59] : memref<36x256xf32, #tpu.memory_space<vmem>>, vector<4x256xf32>
    tpu.vector_store %arg13[%c4_58, %c0_59], %129 {strides = array<i32>} : memref<36x256xf32, #tpu.memory_space<vmem>>, vector<4x256xf32>,
    %c15_i32_60 = arith.constant 15 : i32
    %131 = tpu.dynamic_rotate %120 by %c15_i32_60 dim 1 : vector<4x256xf32>, i32 -> vector<4x256xf32>
    %132 = vector.extract_strided_slice %4 {offsets = [2, 0], sizes = [1, 256], strides = [1, 1]} : vector<9x256xf32> to vector<1x256xf32>
    %133 = vector.broadcast %132 : vector<1x256xf32> to vector<4x256xf32>
    %134 = arith.mulf %131, %133 : vector<4x256xf32>
    %c8_61 = arith.constant 8 : index
    %c0_62 = arith.constant 0 : index
    %135 = vector.load %arg13[%c8_61, %c0_62] : memref<36x256xf32, #tpu.memory_space<vmem>>, vector<4x256xf32>
    tpu.vector_store %arg13[%c8_61, %c0_62], %134 {strides = array<i32>} : memref<36x256xf32, #tpu.memory_space<vmem>>, vector<4x256xf32>,
    %c1_i32_63 = arith.constant 1 : i32
    %136 = tpu.dynamic_rotate %120 by %c1_i32_63 dim 1 : vector<4x256xf32>, i32 -> vector<4x256xf32>
    %137 = vector.extract_strided_slice %4 {offsets = [3, 0], sizes = [1, 256], strides = [1, 1]} : vector<9x256xf32> to vector<1x256xf32>
    %138 = vector.broadcast %137 : vector<1x256xf32> to vector<4x256xf32>
    %139 = arith.mulf %136, %138 : vector<4x256xf32>
    %c12_64 = arith.constant 12 : index
    %c0_65 = arith.constant 0 : index
    %140 = vector.load %arg13[%c12_64, %c0_65] : memref<36x256xf32, #tpu.memory_space<vmem>>, vector<4x256xf32>
    tpu.vector_store %arg13[%c12_64, %c0_65], %139 {strides = array<i32>} : memref<36x256xf32, #tpu.memory_space<vmem>>, vector<4x256xf32>,
    %141 = vector.extract_strided_slice %4 {offsets = [4, 0], sizes = [1, 256], strides = [1, 1]} : vector<9x256xf32> to vector<1x256xf32>
    %142 = vector.broadcast %141 : vector<1x256xf32> to vector<4x256xf32>
    %143 = arith.mulf %120, %142 : vector<4x256xf32>
    %c16_66 = arith.constant 16 : index
    %c0_67 = arith.constant 0 : index
    %144 = vector.load %arg13[%c16_66, %c0_67] : memref<36x256xf32, #tpu.memory_space<vmem>>, vector<4x256xf32>
    tpu.vector_store %arg13[%c16_66, %c0_67], %143 {strides = array<i32>} : memref<36x256xf32, #tpu.memory_space<vmem>>, vector<4x256xf32>,
    %c255_i32_68 = arith.constant 255 : i32
    %145 = tpu.dynamic_rotate %120 by %c255_i32_68 dim 1 : vector<4x256xf32>, i32 -> vector<4x256xf32>
    %146 = vector.extract_strided_slice %4 {offsets = [5, 0], sizes = [1, 256], strides = [1, 1]} : vector<9x256xf32> to vector<1x256xf32>
    %147 = vector.broadcast %146 : vector<1x256xf32> to vector<4x256xf32>
    %148 = arith.mulf %145, %147 : vector<4x256xf32>
    %c20_69 = arith.constant 20 : index
    %c0_70 = arith.constant 0 : index
    %149 = vector.load %arg13[%c20_69, %c0_70] : memref<36x256xf32, #tpu.memory_space<vmem>>, vector<4x256xf32>
    tpu.vector_store %arg13[%c20_69, %c0_70], %148 {strides = array<i32>} : memref<36x256xf32, #tpu.memory_space<vmem>>, vector<4x256xf32>,
    %c241_i32_71 = arith.constant 241 : i32
    %150 = tpu.dynamic_rotate %120 by %c241_i32_71 dim 1 : vector<4x256xf32>, i32 -> vector<4x256xf32>
    %151 = vector.extract_strided_slice %4 {offsets = [6, 0], sizes = [1, 256], strides = [1, 1]} : vector<9x256xf32> to vector<1x256xf32>
    %152 = vector.broadcast %151 : vector<1x256xf32> to vector<4x256xf32>
    %153 = arith.mulf %150, %152 : vector<4x256xf32>
    %c24_72 = arith.constant 24 : index
    %c0_73 = arith.constant 0 : index
    %154 = vector.load %arg13[%c24_72, %c0_73] : memref<36x256xf32, #tpu.memory_space<vmem>>, vector<4x256xf32>
    tpu.vector_store %arg13[%c24_72, %c0_73], %153 {strides = array<i32>} : memref<36x256xf32, #tpu.memory_space<vmem>>, vector<4x256xf32>,
    %c240_i32_74 = arith.constant 240 : i32
    %155 = tpu.dynamic_rotate %120 by %c240_i32_74 dim 1 : vector<4x256xf32>, i32 -> vector<4x256xf32>
    %156 = vector.extract_strided_slice %4 {offsets = [7, 0], sizes = [1, 256], strides = [1, 1]} : vector<9x256xf32> to vector<1x256xf32>
    %157 = vector.broadcast %156 : vector<1x256xf32> to vector<4x256xf32>
    %158 = arith.mulf %155, %157 : vector<4x256xf32>
    %c28_75 = arith.constant 28 : index
    %c0_76 = arith.constant 0 : index
    %159 = vector.load %arg13[%c28_75, %c0_76] : memref<36x256xf32, #tpu.memory_space<vmem>>, vector<4x256xf32>
    tpu.vector_store %arg13[%c28_75, %c0_76], %158 {strides = array<i32>} : memref<36x256xf32, #tpu.memory_space<vmem>>, vector<4x256xf32>,
    %c239_i32_77 = arith.constant 239 : i32
    %160 = tpu.dynamic_rotate %120 by %c239_i32_77 dim 1 : vector<4x256xf32>, i32 -> vector<4x256xf32>
    %161 = vector.extract_strided_slice %4 {offsets = [8, 0], sizes = [1, 256], strides = [1, 1]} : vector<9x256xf32> to vector<1x256xf32>
    %162 = vector.broadcast %161 : vector<1x256xf32> to vector<4x256xf32>
    %163 = arith.mulf %160, %162 : vector<4x256xf32>
    %c32_78 = arith.constant 32 : index
    %c0_79 = arith.constant 0 : index
    %164 = vector.load %arg13[%c32_78, %c0_79] : memref<36x256xf32, #tpu.memory_space<vmem>>, vector<4x256xf32>
    tpu.vector_store %arg13[%c32_78, %c0_79], %163 {strides = array<i32>} : memref<36x256xf32, #tpu.memory_space<vmem>>, vector<4x256xf32>,
    %c0_80 = arith.constant 0 : index
    %c0_81 = arith.constant 0 : index
    %165 = vector.load %arg13[%c0_80, %c0_81] : memref<36x256xf32, #tpu.memory_space<vmem>>, vector<36x256xf32>
    %cst_82 = arith.constant dense<0.000000e+00> : vector<4x256xf32>
    %166 = tpu.matmul %7, %165, %cst_82 {dimension_numbers = #tpu.dot_dimension_numbers<[1], [0], [0], [1], [0, 0, 1, 1], [], []>} : vector<4x36xf32>, vector<36x256xf32>, vector<4x256xf32> -> vector<4x256xf32>
    %cst_83 = arith.constant dense<0.000000e+00> : vector<1x256xf32>
    %167 = tpu.matmul %13, %166, %cst_83 {dimension_numbers = #tpu.dot_dimension_numbers<[1], [0], [0], [1], [0, 0, 1, 1], [], []>} : vector<1x4xf32>, vector<4x256xf32>, vector<1x256xf32> -> vector<1x256xf32>
    %168 = vector.broadcast %167 : vector<1x256xf32> to vector<4x256xf32>
    %169 = arith.subf %166, %168 : vector<4x256xf32>
    %170 = arith.mulf %169, %169 : vector<4x256xf32>
    %cst_84 = arith.constant dense<0.000000e+00> : vector<1x256xf32>
    %171 = tpu.matmul %13, %170, %cst_84 {dimension_numbers = #tpu.dot_dimension_numbers<[1], [0], [0], [1], [0, 0, 1, 1], [], []>} : vector<1x4xf32>, vector<4x256xf32>, vector<1x256xf32> -> vector<1x256xf32>
    %cst_85 = arith.constant 9.99999997E-7 : f32
    %172 = vector.broadcast %cst_85 : f32 to vector<1x256xf32>
    %173 = arith.addf %171, %172 : vector<1x256xf32>
    %174 = math.rsqrt %173 : vector<1x256xf32>
    %175 = vector.broadcast %174 : vector<1x256xf32> to vector<4x256xf32>
    %176 = arith.mulf %169, %175 : vector<4x256xf32>
    %177 = vector.extract_strided_slice %11 {offsets = [0, 1], sizes = [4, 1], strides = [1, 1]} : vector<4x4xf32> to vector<4x1xf32>
    %178 = vector.broadcast %177 : vector<4x1xf32> to vector<4x256xf32>
    %179 = arith.mulf %178, %176 : vector<4x256xf32>
    %180 = vector.extract_strided_slice %12 {offsets = [0, 1], sizes = [4, 1], strides = [1, 1]} : vector<4x4xf32> to vector<4x1xf32>
    %181 = vector.broadcast %180 : vector<4x1xf32> to vector<4x256xf32>
    %182 = arith.addf %179, %181 : vector<4x256xf32>
    %cst_86 = arith.constant 5.000000e-01 : f32
    %183 = vector.broadcast %cst_86 : f32 to vector<4x256xf32>
    %184 = arith.mulf %183, %182 : vector<4x256xf32>
    %cst_87 = arith.constant 0.707106769 : f32
    %185 = vector.broadcast %cst_87 : f32 to vector<4x256xf32>
    %186 = arith.mulf %182, %185 : vector<4x256xf32>
    %187 = math.absf %186 : vector<4x256xf32>
    %cst_88 = arith.constant 0.327591091 : f32
    %188 = vector.broadcast %cst_88 : f32 to vector<4x256xf32>
    %189 = arith.mulf %188, %187 : vector<4x256xf32>
    %cst_89 = arith.constant 1.000000e+00 : f32
    %190 = vector.broadcast %cst_89 : f32 to vector<4x256xf32>
    %191 = arith.addf %190, %189 : vector<4x256xf32>
    %cst_90 = arith.constant 1.000000e+00 : f32
    %192 = vector.broadcast %cst_90 : f32 to vector<4x256xf32>
    %193 = arith.divf %192, %191 : vector<4x256xf32>
    %cst_91 = arith.constant 1.06140542 : f32
    %194 = vector.broadcast %cst_91 : f32 to vector<4x256xf32>
    %195 = arith.mulf %193, %194 : vector<4x256xf32>
    %cst_92 = arith.constant -1.45315206 : f32
    %196 = vector.broadcast %cst_92 : f32 to vector<4x256xf32>
    %197 = arith.addf %196, %195 : vector<4x256xf32>
    %198 = arith.mulf %193, %197 : vector<4x256xf32>
    %cst_93 = arith.constant 1.42141378 : f32
    %199 = vector.broadcast %cst_93 : f32 to vector<4x256xf32>
    %200 = arith.addf %199, %198 : vector<4x256xf32>
    %201 = arith.mulf %193, %200 : vector<4x256xf32>
    %cst_94 = arith.constant -0.284496725 : f32
    %202 = vector.broadcast %cst_94 : f32 to vector<4x256xf32>
    %203 = arith.addf %202, %201 : vector<4x256xf32>
    %204 = arith.mulf %193, %203 : vector<4x256xf32>
    %cst_95 = arith.constant 0.254829586 : f32
    %205 = vector.broadcast %cst_95 : f32 to vector<4x256xf32>
    %206 = arith.addf %205, %204 : vector<4x256xf32>
    %207 = arith.mulf %193, %206 : vector<4x256xf32>
    %cst_96 = arith.constant 0.000000e+00 : f32
    %208 = vector.broadcast %cst_96 : f32 to vector<4x256xf32>
    %209 = arith.subf %208, %187 : vector<4x256xf32>
    %210 = arith.mulf %209, %187 : vector<4x256xf32>
    %211 = math.exp %210 : vector<4x256xf32>
    %212 = arith.mulf %207, %211 : vector<4x256xf32>
    %cst_97 = arith.constant 1.000000e+00 : f32
    %213 = vector.broadcast %cst_97 : f32 to vector<4x256xf32>
    %214 = arith.subf %213, %212 : vector<4x256xf32>
    %cst_98 = arith.constant 0.000000e+00 : f32
    %215 = vector.broadcast %cst_98 : f32 to vector<4x256xf32>
    %216 = arith.cmpf olt, %186, %215 : vector<4x256xf32>
    %cst_99 = arith.constant 0.000000e+00 : f32
    %217 = vector.broadcast %cst_99 : f32 to vector<4x256xf32>
    %218 = arith.subf %217, %214 : vector<4x256xf32>
    %219 = arith.select %216, %218, %214 : vector<4x256xi1>, vector<4x256xf32>
    %cst_100 = arith.constant 1.000000e+00 : f32
    %220 = vector.broadcast %cst_100 : f32 to vector<4x256xf32>
    %221 = arith.addf %220, %219 : vector<4x256xf32>
    %222 = arith.mulf %184, %221 : vector<4x256xf32>
    %223 = arith.addf %222, %118 : vector<4x256xf32>
    %224 = vector.broadcast %3 : vector<1x256xf32> to vector<4x256xf32>
    %225 = arith.mulf %223, %224 : vector<4x256xf32>
    %cst_101 = arith.constant dense<0.000000e+00> : vector<4x256xf32>
    %226 = tpu.matmul %8, %225, %cst_101 {dimension_numbers = #tpu.dot_dimension_numbers<[1], [0], [0], [1], [0, 0, 1, 1], [], []>} : vector<4x4xf32>, vector<4x256xf32>, vector<4x256xf32> -> vector<4x256xf32>
    %227 = arith.addf %226, %223 : vector<4x256xf32>
    %cst_102 = arith.constant dense<0.000000e+00> : vector<1x256xf32>
    %228 = tpu.matmul %13, %227, %cst_102 {dimension_numbers = #tpu.dot_dimension_numbers<[1], [0], [0], [1], [0, 0, 1, 1], [], []>} : vector<1x4xf32>, vector<4x256xf32>, vector<1x256xf32> -> vector<1x256xf32>
    %229 = vector.broadcast %228 : vector<1x256xf32> to vector<4x256xf32>
    %230 = arith.subf %227, %229 : vector<4x256xf32>
    %231 = arith.mulf %230, %230 : vector<4x256xf32>
    %cst_103 = arith.constant dense<0.000000e+00> : vector<1x256xf32>
    %232 = tpu.matmul %13, %231, %cst_103 {dimension_numbers = #tpu.dot_dimension_numbers<[1], [0], [0], [1], [0, 0, 1, 1], [], []>} : vector<1x4xf32>, vector<4x256xf32>, vector<1x256xf32> -> vector<1x256xf32>
    %cst_104 = arith.constant 9.99999997E-7 : f32
    %233 = vector.broadcast %cst_104 : f32 to vector<1x256xf32>
    %234 = arith.addf %232, %233 : vector<1x256xf32>
    %235 = math.rsqrt %234 : vector<1x256xf32>
    %236 = vector.broadcast %235 : vector<1x256xf32> to vector<4x256xf32>
    %237 = arith.mulf %230, %236 : vector<4x256xf32>
    %238 = vector.extract_strided_slice %11 {offsets = [0, 2], sizes = [4, 1], strides = [1, 1]} : vector<4x4xf32> to vector<4x1xf32>
    %239 = vector.broadcast %238 : vector<4x1xf32> to vector<4x256xf32>
    %240 = arith.mulf %239, %237 : vector<4x256xf32>
    %241 = vector.extract_strided_slice %12 {offsets = [0, 2], sizes = [4, 1], strides = [1, 1]} : vector<4x4xf32> to vector<4x1xf32>
    %242 = vector.broadcast %241 : vector<4x1xf32> to vector<4x256xf32>
    %243 = arith.addf %240, %242 : vector<4x256xf32>
    %cst_105 = arith.constant 5.000000e-01 : f32
    %244 = vector.broadcast %cst_105 : f32 to vector<4x256xf32>
    %245 = arith.mulf %244, %243 : vector<4x256xf32>
    %cst_106 = arith.constant 0.707106769 : f32
    %246 = vector.broadcast %cst_106 : f32 to vector<4x256xf32>
    %247 = arith.mulf %243, %246 : vector<4x256xf32>
    %248 = math.absf %247 : vector<4x256xf32>
    %cst_107 = arith.constant 0.327591091 : f32
    %249 = vector.broadcast %cst_107 : f32 to vector<4x256xf32>
    %250 = arith.mulf %249, %248 : vector<4x256xf32>
    %cst_108 = arith.constant 1.000000e+00 : f32
    %251 = vector.broadcast %cst_108 : f32 to vector<4x256xf32>
    %252 = arith.addf %251, %250 : vector<4x256xf32>
    %cst_109 = arith.constant 1.000000e+00 : f32
    %253 = vector.broadcast %cst_109 : f32 to vector<4x256xf32>
    %254 = arith.divf %253, %252 : vector<4x256xf32>
    %cst_110 = arith.constant 1.06140542 : f32
    %255 = vector.broadcast %cst_110 : f32 to vector<4x256xf32>
    %256 = arith.mulf %254, %255 : vector<4x256xf32>
    %cst_111 = arith.constant -1.45315206 : f32
    %257 = vector.broadcast %cst_111 : f32 to vector<4x256xf32>
    %258 = arith.addf %257, %256 : vector<4x256xf32>
    %259 = arith.mulf %254, %258 : vector<4x256xf32>
    %cst_112 = arith.constant 1.42141378 : f32
    %260 = vector.broadcast %cst_112 : f32 to vector<4x256xf32>
    %261 = arith.addf %260, %259 : vector<4x256xf32>
    %262 = arith.mulf %254, %261 : vector<4x256xf32>
    %cst_113 = arith.constant -0.284496725 : f32
    %263 = vector.broadcast %cst_113 : f32 to vector<4x256xf32>
    %264 = arith.addf %263, %262 : vector<4x256xf32>
    %265 = arith.mulf %254, %264 : vector<4x256xf32>
    %cst_114 = arith.constant 0.254829586 : f32
    %266 = vector.broadcast %cst_114 : f32 to vector<4x256xf32>
    %267 = arith.addf %266, %265 : vector<4x256xf32>
    %268 = arith.mulf %254, %267 : vector<4x256xf32>
    %cst_115 = arith.constant 0.000000e+00 : f32
    %269 = vector.broadcast %cst_115 : f32 to vector<4x256xf32>
    %270 = arith.subf %269, %248 : vector<4x256xf32>
    %271 = arith.mulf %270, %248 : vector<4x256xf32>
    %272 = math.exp %271 : vector<4x256xf32>
    %273 = arith.mulf %268, %272 : vector<4x256xf32>
    %cst_116 = arith.constant 1.000000e+00 : f32
    %274 = vector.broadcast %cst_116 : f32 to vector<4x256xf32>
    %275 = arith.subf %274, %273 : vector<4x256xf32>
    %cst_117 = arith.constant 0.000000e+00 : f32
    %276 = vector.broadcast %cst_117 : f32 to vector<4x256xf32>
    %277 = arith.cmpf olt, %247, %276 : vector<4x256xf32>
    %cst_118 = arith.constant 0.000000e+00 : f32
    %278 = vector.broadcast %cst_118 : f32 to vector<4x256xf32>
    %279 = arith.subf %278, %275 : vector<4x256xf32>
    %280 = arith.select %277, %279, %275 : vector<4x256xi1>, vector<4x256xf32>
    %cst_119 = arith.constant 1.000000e+00 : f32
    %281 = vector.broadcast %cst_119 : f32 to vector<4x256xf32>
    %282 = arith.addf %281, %280 : vector<4x256xf32>
    %283 = arith.mulf %245, %282 : vector<4x256xf32>
    %c17_i32_120 = arith.constant 17 : i32
    %284 = tpu.dynamic_rotate %1 by %c17_i32_120 dim 1 : vector<4x256xf32>, i32 -> vector<4x256xf32>
    %285 = vector.extract_strided_slice %4 {offsets = [0, 0], sizes = [1, 256], strides = [1, 1]} : vector<9x256xf32> to vector<1x256xf32>
    %286 = vector.broadcast %285 : vector<1x256xf32> to vector<4x256xf32>
    %287 = arith.mulf %284, %286 : vector<4x256xf32>
    %c0_121 = arith.constant 0 : index
    %c0_122 = arith.constant 0 : index
    %288 = vector.load %arg13[%c0_121, %c0_122] : memref<36x256xf32, #tpu.memory_space<vmem>>, vector<4x256xf32>
    tpu.vector_store %arg13[%c0_121, %c0_122], %287 {strides = array<i32>} : memref<36x256xf32, #tpu.memory_space<vmem>>, vector<4x256xf32>,
    %c16_i32_123 = arith.constant 16 : i32
    %289 = tpu.dynamic_rotate %1 by %c16_i32_123 dim 1 : vector<4x256xf32>, i32 -> vector<4x256xf32>
    %290 = vector.extract_strided_slice %4 {offsets = [1, 0], sizes = [1, 256], strides = [1, 1]} : vector<9x256xf32> to vector<1x256xf32>
    %291 = vector.broadcast %290 : vector<1x256xf32> to vector<4x256xf32>
    %292 = arith.mulf %289, %291 : vector<4x256xf32>
    %c4_124 = arith.constant 4 : index
    %c0_125 = arith.constant 0 : index
    %293 = vector.load %arg13[%c4_124, %c0_125] : memref<36x256xf32, #tpu.memory_space<vmem>>, vector<4x256xf32>
    tpu.vector_store %arg13[%c4_124, %c0_125], %292 {strides = array<i32>} : memref<36x256xf32, #tpu.memory_space<vmem>>, vector<4x256xf32>,
    %c15_i32_126 = arith.constant 15 : i32
    %294 = tpu.dynamic_rotate %1 by %c15_i32_126 dim 1 : vector<4x256xf32>, i32 -> vector<4x256xf32>
    %295 = vector.extract_strided_slice %4 {offsets = [2, 0], sizes = [1, 256], strides = [1, 1]} : vector<9x256xf32> to vector<1x256xf32>
    %296 = vector.broadcast %295 : vector<1x256xf32> to vector<4x256xf32>
    %297 = arith.mulf %294, %296 : vector<4x256xf32>
    %c8_127 = arith.constant 8 : index
    %c0_128 = arith.constant 0 : index
    %298 = vector.load %arg13[%c8_127, %c0_128] : memref<36x256xf32, #tpu.memory_space<vmem>>, vector<4x256xf32>
    tpu.vector_store %arg13[%c8_127, %c0_128], %297 {strides = array<i32>} : memref<36x256xf32, #tpu.memory_space<vmem>>, vector<4x256xf32>,
    %c1_i32_129 = arith.constant 1 : i32
    %299 = tpu.dynamic_rotate %1 by %c1_i32_129 dim 1 : vector<4x256xf32>, i32 -> vector<4x256xf32>
    %300 = vector.extract_strided_slice %4 {offsets = [3, 0], sizes = [1, 256], strides = [1, 1]} : vector<9x256xf32> to vector<1x256xf32>
    %301 = vector.broadcast %300 : vector<1x256xf32> to vector<4x256xf32>
    %302 = arith.mulf %299, %301 : vector<4x256xf32>
    %c12_130 = arith.constant 12 : index
    %c0_131 = arith.constant 0 : index
    %303 = vector.load %arg13[%c12_130, %c0_131] : memref<36x256xf32, #tpu.memory_space<vmem>>, vector<4x256xf32>
    tpu.vector_store %arg13[%c12_130, %c0_131], %302 {strides = array<i32>} : memref<36x256xf32, #tpu.memory_space<vmem>>, vector<4x256xf32>,
    %304 = vector.extract_strided_slice %4 {offsets = [4, 0], sizes = [1, 256], strides = [1, 1]} : vector<9x256xf32> to vector<1x256xf32>
    %305 = vector.broadcast %304 : vector<1x256xf32> to vector<4x256xf32>
    %306 = arith.mulf %1, %305 : vector<4x256xf32>
    %c16_132 = arith.constant 16 : index
    %c0_133 = arith.constant 0 : index
    %307 = vector.load %arg13[%c16_132, %c0_133] : memref<36x256xf32, #tpu.memory_space<vmem>>, vector<4x256xf32>
    tpu.vector_store %arg13[%c16_132, %c0_133], %306 {strides = array<i32>} : memref<36x256xf32, #tpu.memory_space<vmem>>, vector<4x256xf32>,
    %c255_i32_134 = arith.constant 255 : i32
    %308 = tpu.dynamic_rotate %1 by %c255_i32_134 dim 1 : vector<4x256xf32>, i32 -> vector<4x256xf32>
    %309 = vector.extract_strided_slice %4 {offsets = [5, 0], sizes = [1, 256], strides = [1, 1]} : vector<9x256xf32> to vector<1x256xf32>
    %310 = vector.broadcast %309 : vector<1x256xf32> to vector<4x256xf32>
    %311 = arith.mulf %308, %310 : vector<4x256xf32>
    %c20_135 = arith.constant 20 : index
    %c0_136 = arith.constant 0 : index
    %312 = vector.load %arg13[%c20_135, %c0_136] : memref<36x256xf32, #tpu.memory_space<vmem>>, vector<4x256xf32>
    tpu.vector_store %arg13[%c20_135, %c0_136], %311 {strides = array<i32>} : memref<36x256xf32, #tpu.memory_space<vmem>>, vector<4x256xf32>,
    %c241_i32_137 = arith.constant 241 : i32
    %313 = tpu.dynamic_rotate %1 by %c241_i32_137 dim 1 : vector<4x256xf32>, i32 -> vector<4x256xf32>
    %314 = vector.extract_strided_slice %4 {offsets = [6, 0], sizes = [1, 256], strides = [1, 1]} : vector<9x256xf32> to vector<1x256xf32>
    %315 = vector.broadcast %314 : vector<1x256xf32> to vector<4x256xf32>
    %316 = arith.mulf %313, %315 : vector<4x256xf32>
    %c24_138 = arith.constant 24 : index
    %c0_139 = arith.constant 0 : index
    %317 = vector.load %arg13[%c24_138, %c0_139] : memref<36x256xf32, #tpu.memory_space<vmem>>, vector<4x256xf32>
    tpu.vector_store %arg13[%c24_138, %c0_139], %316 {strides = array<i32>} : memref<36x256xf32, #tpu.memory_space<vmem>>, vector<4x256xf32>,
    %c240_i32_140 = arith.constant 240 : i32
    %318 = tpu.dynamic_rotate %1 by %c240_i32_140 dim 1 : vector<4x256xf32>, i32 -> vector<4x256xf32>
    %319 = vector.extract_strided_slice %4 {offsets = [7, 0], sizes = [1, 256], strides = [1, 1]} : vector<9x256xf32> to vector<1x256xf32>
    %320 = vector.broadcast %319 : vector<1x256xf32> to vector<4x256xf32>
    %321 = arith.mulf %318, %320 : vector<4x256xf32>
    %c28_141 = arith.constant 28 : index
    %c0_142 = arith.constant 0 : index
    %322 = vector.load %arg13[%c28_141, %c0_142] : memref<36x256xf32, #tpu.memory_space<vmem>>, vector<4x256xf32>
    tpu.vector_store %arg13[%c28_141, %c0_142], %321 {strides = array<i32>} : memref<36x256xf32, #tpu.memory_space<vmem>>, vector<4x256xf32>,
    %c239_i32_143 = arith.constant 239 : i32
    %323 = tpu.dynamic_rotate %1 by %c239_i32_143 dim 1 : vector<4x256xf32>, i32 -> vector<4x256xf32>
    %324 = vector.extract_strided_slice %4 {offsets = [8, 0], sizes = [1, 256], strides = [1, 1]} : vector<9x256xf32> to vector<1x256xf32>
    %325 = vector.broadcast %324 : vector<1x256xf32> to vector<4x256xf32>
    %326 = arith.mulf %323, %325 : vector<4x256xf32>
    %c32_144 = arith.constant 32 : index
    %c0_145 = arith.constant 0 : index
    %327 = vector.load %arg13[%c32_144, %c0_145] : memref<36x256xf32, #tpu.memory_space<vmem>>, vector<4x256xf32>
    tpu.vector_store %arg13[%c32_144, %c0_145], %326 {strides = array<i32>} : memref<36x256xf32, #tpu.memory_space<vmem>>, vector<4x256xf32>,
    %c0_146 = arith.constant 0 : index
    %c0_147 = arith.constant 0 : index
    %328 = vector.load %arg13[%c0_146, %c0_147] : memref<36x256xf32, #tpu.memory_space<vmem>>, vector<36x256xf32>
    %cst_148 = arith.constant dense<0.000000e+00> : vector<4x256xf32>
    %329 = tpu.matmul %9, %328, %cst_148 {dimension_numbers = #tpu.dot_dimension_numbers<[1], [0], [0], [1], [0, 0, 1, 1], [], []>} : vector<4x36xf32>, vector<36x256xf32>, vector<4x256xf32> -> vector<4x256xf32>
    %330 = vector.extract_strided_slice %5 {offsets = [0, 0], sizes = [1, 256], strides = [1, 1]} : vector<4x256xf32> to vector<1x256xf32>
    %331 = vector.broadcast %330 : vector<1x256xf32> to vector<4x256xf32>
    %332 = arith.mulf %329, %331 : vector<4x256xf32>
    %c1_i32_149 = arith.constant 1 : i32
    %333 = tpu.dynamic_rotate %329 by %c1_i32_149 dim 1 : vector<4x256xf32>, i32 -> vector<4x256xf32>
    %334 = vector.extract_strided_slice %5 {offsets = [1, 0], sizes = [1, 256], strides = [1, 1]} : vector<4x256xf32> to vector<1x256xf32>
    %335 = vector.broadcast %334 : vector<1x256xf32> to vector<4x256xf32>
    %336 = arith.mulf %333, %335 : vector<4x256xf32>
    %337 = arith.addf %332, %336 : vector<4x256xf32>
    %c16_i32_150 = arith.constant 16 : i32
    %338 = tpu.dynamic_rotate %329 by %c16_i32_150 dim 1 : vector<4x256xf32>, i32 -> vector<4x256xf32>
    %339 = vector.extract_strided_slice %5 {offsets = [2, 0], sizes = [1, 256], strides = [1, 1]} : vector<4x256xf32> to vector<1x256xf32>
    %340 = vector.broadcast %339 : vector<1x256xf32> to vector<4x256xf32>
    %341 = arith.mulf %338, %340 : vector<4x256xf32>
    %342 = arith.addf %337, %341 : vector<4x256xf32>
    %c17_i32_151 = arith.constant 17 : i32
    %343 = tpu.dynamic_rotate %329 by %c17_i32_151 dim 1 : vector<4x256xf32>, i32 -> vector<4x256xf32>
    %344 = vector.extract_strided_slice %5 {offsets = [3, 0], sizes = [1, 256], strides = [1, 1]} : vector<4x256xf32> to vector<1x256xf32>
    %345 = vector.broadcast %344 : vector<1x256xf32> to vector<4x256xf32>
    %346 = arith.mulf %343, %345 : vector<4x256xf32>
    %347 = arith.addf %342, %346 : vector<4x256xf32>
    %cst_152 = arith.constant dense<0.000000e+00> : vector<1x256xf32>
    %348 = tpu.matmul %13, %347, %cst_152 {dimension_numbers = #tpu.dot_dimension_numbers<[1], [0], [0], [1], [0, 0, 1, 1], [], []>} : vector<1x4xf32>, vector<4x256xf32>, vector<1x256xf32> -> vector<1x256xf32>
    %349 = vector.broadcast %348 : vector<1x256xf32> to vector<4x256xf32>
    %350 = arith.subf %347, %349 : vector<4x256xf32>
    %351 = arith.mulf %350, %350 : vector<4x256xf32>
    %cst_153 = arith.constant dense<0.000000e+00> : vector<1x256xf32>
    %352 = tpu.matmul %13, %351, %cst_153 {dimension_numbers = #tpu.dot_dimension_numbers<[1], [0], [0], [1], [0, 0, 1, 1], [], []>} : vector<1x4xf32>, vector<4x256xf32>, vector<1x256xf32> -> vector<1x256xf32>
    %cst_154 = arith.constant 9.99999997E-7 : f32
    %353 = vector.broadcast %cst_154 : f32 to vector<1x256xf32>
    %354 = arith.addf %352, %353 : vector<1x256xf32>
    %355 = math.rsqrt %354 : vector<1x256xf32>
    %356 = vector.broadcast %355 : vector<1x256xf32> to vector<4x256xf32>
    %357 = arith.mulf %350, %356 : vector<4x256xf32>
    %358 = vector.extract_strided_slice %11 {offsets = [0, 3], sizes = [4, 1], strides = [1, 1]} : vector<4x4xf32> to vector<4x1xf32>
    %359 = vector.broadcast %358 : vector<4x1xf32> to vector<4x256xf32>
    %360 = arith.mulf %359, %357 : vector<4x256xf32>
    %361 = vector.extract_strided_slice %12 {offsets = [0, 3], sizes = [4, 1], strides = [1, 1]} : vector<4x4xf32> to vector<4x1xf32>
    %362 = vector.broadcast %361 : vector<4x1xf32> to vector<4x256xf32>
    %363 = arith.addf %360, %362 : vector<4x256xf32>
    %cst_155 = arith.constant 5.000000e-01 : f32
    %364 = vector.broadcast %cst_155 : f32 to vector<4x256xf32>
    %365 = arith.mulf %364, %363 : vector<4x256xf32>
    %cst_156 = arith.constant 0.707106769 : f32
    %366 = vector.broadcast %cst_156 : f32 to vector<4x256xf32>
    %367 = arith.mulf %363, %366 : vector<4x256xf32>
    %368 = math.absf %367 : vector<4x256xf32>
    %cst_157 = arith.constant 0.327591091 : f32
    %369 = vector.broadcast %cst_157 : f32 to vector<4x256xf32>
    %370 = arith.mulf %369, %368 : vector<4x256xf32>
    %cst_158 = arith.constant 1.000000e+00 : f32
    %371 = vector.broadcast %cst_158 : f32 to vector<4x256xf32>
    %372 = arith.addf %371, %370 : vector<4x256xf32>
    %cst_159 = arith.constant 1.000000e+00 : f32
    %373 = vector.broadcast %cst_159 : f32 to vector<4x256xf32>
    %374 = arith.divf %373, %372 : vector<4x256xf32>
    %cst_160 = arith.constant 1.06140542 : f32
    %375 = vector.broadcast %cst_160 : f32 to vector<4x256xf32>
    %376 = arith.mulf %374, %375 : vector<4x256xf32>
    %cst_161 = arith.constant -1.45315206 : f32
    %377 = vector.broadcast %cst_161 : f32 to vector<4x256xf32>
    %378 = arith.addf %377, %376 : vector<4x256xf32>
    %379 = arith.mulf %374, %378 : vector<4x256xf32>
    %cst_162 = arith.constant 1.42141378 : f32
    %380 = vector.broadcast %cst_162 : f32 to vector<4x256xf32>
    %381 = arith.addf %380, %379 : vector<4x256xf32>
    %382 = arith.mulf %374, %381 : vector<4x256xf32>
    %cst_163 = arith.constant -0.284496725 : f32
    %383 = vector.broadcast %cst_163 : f32 to vector<4x256xf32>
    %384 = arith.addf %383, %382 : vector<4x256xf32>
    %385 = arith.mulf %374, %384 : vector<4x256xf32>
    %cst_164 = arith.constant 0.254829586 : f32
    %386 = vector.broadcast %cst_164 : f32 to vector<4x256xf32>
    %387 = arith.addf %386, %385 : vector<4x256xf32>
    %388 = arith.mulf %374, %387 : vector<4x256xf32>
    %cst_165 = arith.constant 0.000000e+00 : f32
    %389 = vector.broadcast %cst_165 : f32 to vector<4x256xf32>
    %390 = arith.subf %389, %368 : vector<4x256xf32>
    %391 = arith.mulf %390, %368 : vector<4x256xf32>
    %392 = math.exp %391 : vector<4x256xf32>
    %393 = arith.mulf %388, %392 : vector<4x256xf32>
    %cst_166 = arith.constant 1.000000e+00 : f32
    %394 = vector.broadcast %cst_166 : f32 to vector<4x256xf32>
    %395 = arith.subf %394, %393 : vector<4x256xf32>
    %cst_167 = arith.constant 0.000000e+00 : f32
    %396 = vector.broadcast %cst_167 : f32 to vector<4x256xf32>
    %397 = arith.cmpf olt, %367, %396 : vector<4x256xf32>
    %cst_168 = arith.constant 0.000000e+00 : f32
    %398 = vector.broadcast %cst_168 : f32 to vector<4x256xf32>
    %399 = arith.subf %398, %395 : vector<4x256xf32>
    %400 = arith.select %397, %399, %395 : vector<4x256xi1>, vector<4x256xf32>
    %cst_169 = arith.constant 1.000000e+00 : f32
    %401 = vector.broadcast %cst_169 : f32 to vector<4x256xf32>
    %402 = arith.addf %401, %400 : vector<4x256xf32>
    %403 = arith.mulf %365, %402 : vector<4x256xf32>
    %c17_i32_170 = arith.constant 17 : i32
    %404 = tpu.dynamic_rotate %403 by %c17_i32_170 dim 1 : vector<4x256xf32>, i32 -> vector<4x256xf32>
    %405 = vector.extract_strided_slice %4 {offsets = [0, 0], sizes = [1, 256], strides = [1, 1]} : vector<9x256xf32> to vector<1x256xf32>
    %406 = vector.broadcast %405 : vector<1x256xf32> to vector<4x256xf32>
    %407 = arith.mulf %404, %406 : vector<4x256xf32>
    %c0_171 = arith.constant 0 : index
    %c0_172 = arith.constant 0 : index
    %408 = vector.load %arg13[%c0_171, %c0_172] : memref<36x256xf32, #tpu.memory_space<vmem>>, vector<4x256xf32>
    tpu.vector_store %arg13[%c0_171, %c0_172], %407 {strides = array<i32>} : memref<36x256xf32, #tpu.memory_space<vmem>>, vector<4x256xf32>,
    %c16_i32_173 = arith.constant 16 : i32
    %409 = tpu.dynamic_rotate %403 by %c16_i32_173 dim 1 : vector<4x256xf32>, i32 -> vector<4x256xf32>
    %410 = vector.extract_strided_slice %4 {offsets = [1, 0], sizes = [1, 256], strides = [1, 1]} : vector<9x256xf32> to vector<1x256xf32>
    %411 = vector.broadcast %410 : vector<1x256xf32> to vector<4x256xf32>
    %412 = arith.mulf %409, %411 : vector<4x256xf32>
    %c4_174 = arith.constant 4 : index
    %c0_175 = arith.constant 0 : index
    %413 = vector.load %arg13[%c4_174, %c0_175] : memref<36x256xf32, #tpu.memory_space<vmem>>, vector<4x256xf32>
    tpu.vector_store %arg13[%c4_174, %c0_175], %412 {strides = array<i32>} : memref<36x256xf32, #tpu.memory_space<vmem>>, vector<4x256xf32>,
    %c15_i32_176 = arith.constant 15 : i32
    %414 = tpu.dynamic_rotate %403 by %c15_i32_176 dim 1 : vector<4x256xf32>, i32 -> vector<4x256xf32>
    %415 = vector.extract_strided_slice %4 {offsets = [2, 0], sizes = [1, 256], strides = [1, 1]} : vector<9x256xf32> to vector<1x256xf32>
    %416 = vector.broadcast %415 : vector<1x256xf32> to vector<4x256xf32>
    %417 = arith.mulf %414, %416 : vector<4x256xf32>
    %c8_177 = arith.constant 8 : index
    %c0_178 = arith.constant 0 : index
    %418 = vector.load %arg13[%c8_177, %c0_178] : memref<36x256xf32, #tpu.memory_space<vmem>>, vector<4x256xf32>
    tpu.vector_store %arg13[%c8_177, %c0_178], %417 {strides = array<i32>} : memref<36x256xf32, #tpu.memory_space<vmem>>, vector<4x256xf32>,
    %c1_i32_179 = arith.constant 1 : i32
    %419 = tpu.dynamic_rotate %403 by %c1_i32_179 dim 1 : vector<4x256xf32>, i32 -> vector<4x256xf32>
    %420 = vector.extract_strided_slice %4 {offsets = [3, 0], sizes = [1, 256], strides = [1, 1]} : vector<9x256xf32> to vector<1x256xf32>
    %421 = vector.broadcast %420 : vector<1x256xf32> to vector<4x256xf32>
    %422 = arith.mulf %419, %421 : vector<4x256xf32>
    %c12_180 = arith.constant 12 : index
    %c0_181 = arith.constant 0 : index
    %423 = vector.load %arg13[%c12_180, %c0_181] : memref<36x256xf32, #tpu.memory_space<vmem>>, vector<4x256xf32>
    tpu.vector_store %arg13[%c12_180, %c0_181], %422 {strides = array<i32>} : memref<36x256xf32, #tpu.memory_space<vmem>>, vector<4x256xf32>,
    %424 = vector.extract_strided_slice %4 {offsets = [4, 0], sizes = [1, 256], strides = [1, 1]} : vector<9x256xf32> to vector<1x256xf32>
    %425 = vector.broadcast %424 : vector<1x256xf32> to vector<4x256xf32>
    %426 = arith.mulf %403, %425 : vector<4x256xf32>
    %c16_182 = arith.constant 16 : index
    %c0_183 = arith.constant 0 : index
    %427 = vector.load %arg13[%c16_182, %c0_183] : memref<36x256xf32, #tpu.memory_space<vmem>>, vector<4x256xf32>
    tpu.vector_store %arg13[%c16_182, %c0_183], %426 {strides = array<i32>} : memref<36x256xf32, #tpu.memory_space<vmem>>, vector<4x256xf32>,
    %c255_i32_184 = arith.constant 255 : i32
    %428 = tpu.dynamic_rotate %403 by %c255_i32_184 dim 1 : vector<4x256xf32>, i32 -> vector<4x256xf32>
    %429 = vector.extract_strided_slice %4 {offsets = [5, 0], sizes = [1, 256], strides = [1, 1]} : vector<9x256xf32> to vector<1x256xf32>
    %430 = vector.broadcast %429 : vector<1x256xf32> to vector<4x256xf32>
    %431 = arith.mulf %428, %430 : vector<4x256xf32>
    %c20_185 = arith.constant 20 : index
    %c0_186 = arith.constant 0 : index
    %432 = vector.load %arg13[%c20_185, %c0_186] : memref<36x256xf32, #tpu.memory_space<vmem>>, vector<4x256xf32>
    tpu.vector_store %arg13[%c20_185, %c0_186], %431 {strides = array<i32>} : memref<36x256xf32, #tpu.memory_space<vmem>>, vector<4x256xf32>,
    %c241_i32_187 = arith.constant 241 : i32
    %433 = tpu.dynamic_rotate %403 by %c241_i32_187 dim 1 : vector<4x256xf32>, i32 -> vector<4x256xf32>
    %434 = vector.extract_strided_slice %4 {offsets = [6, 0], sizes = [1, 256], strides = [1, 1]} : vector<9x256xf32> to vector<1x256xf32>
    %435 = vector.broadcast %434 : vector<1x256xf32> to vector<4x256xf32>
    %436 = arith.mulf %433, %435 : vector<4x256xf32>
    %c24_188 = arith.constant 24 : index
    %c0_189 = arith.constant 0 : index
    %437 = vector.load %arg13[%c24_188, %c0_189] : memref<36x256xf32, #tpu.memory_space<vmem>>, vector<4x256xf32>
    tpu.vector_store %arg13[%c24_188, %c0_189], %436 {strides = array<i32>} : memref<36x256xf32, #tpu.memory_space<vmem>>, vector<4x256xf32>,
    %c240_i32_190 = arith.constant 240 : i32
    %438 = tpu.dynamic_rotate %403 by %c240_i32_190 dim 1 : vector<4x256xf32>, i32 -> vector<4x256xf32>
    %439 = vector.extract_strided_slice %4 {offsets = [7, 0], sizes = [1, 256], strides = [1, 1]} : vector<9x256xf32> to vector<1x256xf32>
    %440 = vector.broadcast %439 : vector<1x256xf32> to vector<4x256xf32>
    %441 = arith.mulf %438, %440 : vector<4x256xf32>
    %c28_191 = arith.constant 28 : index
    %c0_192 = arith.constant 0 : index
    %442 = vector.load %arg13[%c28_191, %c0_192] : memref<36x256xf32, #tpu.memory_space<vmem>>, vector<4x256xf32>
    tpu.vector_store %arg13[%c28_191, %c0_192], %441 {strides = array<i32>} : memref<36x256xf32, #tpu.memory_space<vmem>>, vector<4x256xf32>,
    %c239_i32_193 = arith.constant 239 : i32
    %443 = tpu.dynamic_rotate %403 by %c239_i32_193 dim 1 : vector<4x256xf32>, i32 -> vector<4x256xf32>
    %444 = vector.extract_strided_slice %4 {offsets = [8, 0], sizes = [1, 256], strides = [1, 1]} : vector<9x256xf32> to vector<1x256xf32>
    %445 = vector.broadcast %444 : vector<1x256xf32> to vector<4x256xf32>
    %446 = arith.mulf %443, %445 : vector<4x256xf32>
    %c32_194 = arith.constant 32 : index
    %c0_195 = arith.constant 0 : index
    %447 = vector.load %arg13[%c32_194, %c0_195] : memref<36x256xf32, #tpu.memory_space<vmem>>, vector<4x256xf32>
    tpu.vector_store %arg13[%c32_194, %c0_195], %446 {strides = array<i32>} : memref<36x256xf32, #tpu.memory_space<vmem>>, vector<4x256xf32>,
    %c0_196 = arith.constant 0 : index
    %c0_197 = arith.constant 0 : index
    %448 = vector.load %arg13[%c0_196, %c0_197] : memref<36x256xf32, #tpu.memory_space<vmem>>, vector<36x256xf32>
    %cst_198 = arith.constant dense<0.000000e+00> : vector<4x256xf32>
    %449 = tpu.matmul %10, %448, %cst_198 {dimension_numbers = #tpu.dot_dimension_numbers<[1], [0], [0], [1], [0, 0, 1, 1], [], []>} : vector<4x36xf32>, vector<36x256xf32>, vector<4x256xf32> -> vector<4x256xf32>
    %450 = vector.extract_strided_slice %6 {offsets = [0, 0], sizes = [8, 4], strides = [1, 1]} : vector<8x8xf32> to vector<8x4xf32>
    %cst_199 = arith.constant dense<0.000000e+00> : vector<8x256xf32>
    %451 = tpu.matmul %450, %283, %cst_199 {dimension_numbers = #tpu.dot_dimension_numbers<[1], [0], [0], [1], [0, 0, 1, 1], [], []>} : vector<8x4xf32>, vector<4x256xf32>, vector<8x256xf32> -> vector<8x256xf32>
    %452 = vector.extract_strided_slice %6 {offsets = [0, 4], sizes = [8, 4], strides = [1, 1]} : vector<8x8xf32> to vector<8x4xf32>
    %cst_200 = arith.constant dense<0.000000e+00> : vector<8x256xf32>
    %453 = tpu.matmul %452, %449, %cst_200 {dimension_numbers = #tpu.dot_dimension_numbers<[1], [0], [0], [1], [0, 0, 1, 1], [], []>} : vector<8x4xf32>, vector<4x256xf32>, vector<8x256xf32> -> vector<8x256xf32>
    %454 = arith.addf %451, %453 : vector<8x256xf32>
    %455 = vector.broadcast %3 : vector<1x256xf32> to vector<8x256xf32>
    %456 = arith.mulf %454, %455 : vector<8x256xf32>
    %c0_201 = arith.constant 0 : index
    %c0_202 = arith.constant 0 : index
    %c0_203 = arith.constant 0 : index
    %457 = vector.load %arg12[%c0_201, %c0_202, %c0_203] : memref<1x8x256xf32, #tpu.memory_space<vmem>>, vector<1x8x256xf32>
    %458 = vector.shape_cast %457 : vector<1x8x256xf32> to vector<8x256xf32>
    %459 = vector.shape_cast %456 : vector<8x256xf32> to vector<1x8x256xf32>
    tpu.vector_store %arg12[%c0_201, %c0_202, %c0_203], %459 {strides = array<i32>} : memref<1x8x256xf32, #tpu.memory_space<vmem>>, vector<1x8x256xf32>,
    return
  }
  func.func @transform_0(%arg0: i32) -> (i32, i32, i32) {
    %c0_i32 = arith.constant 0 : i32
    %c0_i32_0 = arith.constant 0 : i32
    %c0_i32_1 = arith.constant 0 : i32
    return %arg0, %c0_i32, %c0_i32_0 : i32, i32, i32
  }
  func.func @transform_1(%arg0: i32) -> (i32, i32, i32) {
    %c0_i32 = arith.constant 0 : i32
    %c0_i32_0 = arith.constant 0 : i32
    %c0_i32_1 = arith.constant 0 : i32
    return %arg0, %c0_i32, %c0_i32_0 : i32, i32, i32
  }
  func.func @transform_2(%arg0: i32) -> (i32, i32) {
    %c0_i32 = arith.constant 0 : i32
    %c0_i32_0 = arith.constant 0 : i32
    %c0_i32_1 = arith.constant 0 : i32
    return %c0_i32, %c0_i32_0 : i32, i32
  }
  func.func @transform_3(%arg0: i32) -> (i32, i32) {
    %c0_i32 = arith.constant 0 : i32
    %c0_i32_0 = arith.constant 0 : i32
    %c0_i32_1 = arith.constant 0 : i32
    return %c0_i32, %c0_i32_0 : i32, i32
  }
  func.func @transform_4(%arg0: i32) -> (i32, i32) {
    %c0_i32 = arith.constant 0 : i32
    %c0_i32_0 = arith.constant 0 : i32
    %c0_i32_1 = arith.constant 0 : i32
    return %c0_i32, %c0_i32_0 : i32, i32
  }
  func.func @transform_5(%arg0: i32) -> (i32, i32) {
    %c0_i32 = arith.constant 0 : i32
    %c0_i32_0 = arith.constant 0 : i32
    %c0_i32_1 = arith.constant 0 : i32
    return %c0_i32, %c0_i32_0 : i32, i32
  }
  func.func @transform_6(%arg0: i32) -> (i32, i32) {
    %c0_i32 = arith.constant 0 : i32
    %c0_i32_0 = arith.constant 0 : i32
    %c0_i32_1 = arith.constant 0 : i32
    return %c0_i32, %c0_i32_0 : i32, i32
  }
  func.func @transform_7(%arg0: i32) -> (i32, i32) {
    %c0_i32 = arith.constant 0 : i32
    %c0_i32_0 = arith.constant 0 : i32
    %c0_i32_1 = arith.constant 0 : i32
    return %c0_i32, %c0_i32_0 : i32, i32
  }
  func.func @transform_8(%arg0: i32) -> (i32, i32) {
    %c0_i32 = arith.constant 0 : i32
    %c0_i32_0 = arith.constant 0 : i32
    %c0_i32_1 = arith.constant 0 : i32
    return %c0_i32, %c0_i32_0 : i32, i32
  }
  func.func @transform_9(%arg0: i32) -> (i32, i32) {
    %c0_i32 = arith.constant 0 : i32
    %c0_i32_0 = arith.constant 0 : i32
    %c0_i32_1 = arith.constant 0 : i32
    return %c0_i32, %c0_i32_0 : i32, i32
  }
  func.func @transform_10(%arg0: i32) -> (i32, i32) {
    %c0_i32 = arith.constant 0 : i32
    %c0_i32_0 = arith.constant 0 : i32
    %c0_i32_1 = arith.constant 0 : i32
    return %c0_i32, %c0_i32_0 : i32, i32
  }
  func.func @transform_11(%arg0: i32) -> (i32, i32, i32) {
    %c0_i32 = arith.constant 0 : i32
    %c0_i32_0 = arith.constant 0 : i32
    %c0_i32_1 = arith.constant 0 : i32
    return %arg0, %c0_i32, %c0_i32_0 : i32, i32, i32
  }
}

</mosaic_0001>

<llo_original>
// kernel: mask_cnn_1_forward.1
$region0: #{mask_cnn_1_forward.1}
  #allocation0 [shape = 'u32[]', space=smem, size = 0x4, offset = 0x4, fixed_abs, tag = 'smem constant byte address 0x4 - core index']
  #allocation1 [shape = 'u32[144,128]{1,0:T(1,128)}', space=vmem, size = 0x12000, scoped, tag = 'internal scratch']
  #allocation2 [shape = 'f32[36,256]{1,0:T(8,128)}', space=vmem, size = 0xa000, scoped, tag = 'scratch operand']
  %s0 = inlined_call_operand.vmem [shape: f32[2,4,256], index: 0, kind: input, shape index: {}]
  %s1 = inlined_call_operand.vmem [shape: f32[2,1,256], index: 1, kind: input, shape index: {}]
  %s2 = inlined_call_operand.vmem [shape: f32[9,256], index: 2, kind: input, shape index: {}]
  %s3 = inlined_call_operand.vmem [shape: f32[4,256], index: 3, kind: input, shape index: {}]
  %s4 = inlined_call_operand.vmem [shape: f32[8,8], index: 4, kind: input, shape index: {}]
  %s5 = inlined_call_operand.vmem [shape: f32[4,36], index: 5, kind: input, shape index: {}]
  %s6 = inlined_call_operand.vmem [shape: f32[4,4], index: 6, kind: input, shape index: {}]
  %s7 = inlined_call_operand.vmem [shape: f32[4,36], index: 7, kind: input, shape index: {}]
  %s8 = inlined_call_operand.vmem [shape: f32[4,36], index: 8, kind: input, shape index: {}]
  %s9 = inlined_call_operand.vmem [shape: f32[4,4], index: 9, kind: input, shape index: {}]
  %s10 = inlined_call_operand.vmem [shape: f32[4,4], index: 10, kind: input, shape index: {}]
  %s11 = inlined_call_operand.vmem [shape: f32[2,8,256], index: 11, kind: output, shape index: {}]
  %s12 = sld [smem:[#allocation0]]
  $region77: #{mask_cnn_1_forward.1} parent=0
    _
  %s14 = ssub.s32 1, %s12
  %s15 = scalar_select 0, %s14, %s12
  loop: start=0, step=1, limit=4
  $region2: #{mask_cnn_1_forward.1} parent=0 // loop_pre_header
    _
  $region3: #{mask_cnn_1_forward.1} parent=0 // loop_header
    %s17 = sphi 0, %s21
    %p18 = scmp.ge.s32.totalorder %s17, 4
    %s27 = sphi 0, %s29
    %s30 = sphi 0, %s27
    %s31 = sphi 0, %s30
    %s47 = sphi 0, %s31
    %s53 = sphi 0, %s55
    %s56 = sphi 0, %s53
    %s57 = sphi 0, %s56
    %s73 = sphi 0, %s57
    %s77 = sphi 0, %s77
    %s79 = sphi 0, %s77
    %s80 = sphi 0, %s79
    %s94 = sphi 0, %s80
    %s98 = sphi 0, %s98
    %s100 = sphi 0, %s98
    %s101 = sphi 0, %s100
    %s115 = sphi 0, %s101
    %s119 = sphi 0, %s119
    %s121 = sphi 0, %s119
    %s122 = sphi 0, %s121
    %s136 = sphi 0, %s122
    %s140 = sphi 0, %s140
    %s142 = sphi 0, %s140
    %s143 = sphi 0, %s142
    %s157 = sphi 0, %s143
    %s161 = sphi 0, %s161
    %s163 = sphi 0, %s161
    %s164 = sphi 0, %s163
    %s178 = sphi 0, %s164
    %s182 = sphi 0, %s182
    %s184 = sphi 0, %s182
    %s185 = sphi 0, %s184
    %s199 = sphi 0, %s185
    %s203 = sphi 0, %s203
    %s205 = sphi 0, %s203
    %s206 = sphi 0, %s205
    %s220 = sphi 0, %s206
    %s224 = sphi 0, %s224
    %s226 = sphi 0, %s224
    %s227 = sphi 0, %s226
    %s241 = sphi 0, %s227
    %s245 = sphi 0, %s245
    %s247 = sphi 0, %s245
    %s248 = sphi 0, %s247
    %s262 = sphi 0, %s248
    %s268 = sphi 0, %s270
    %s271 = sphi 0, %s268
    %s272 = sphi 0, %s271
    %s288 = sphi 0, %s272
  $region4: #{mask_cnn_1_forward.1} parent=0 // loop_header_branch
    %20 = sbr.rel (%p18) target = $region8
  $region5: #{mask_cnn_1_forward.1} parent=0 // loop_body
    %s22 = ssub.s32 %s17, 1
    %s23 = ssub.s32 %s17, 2
    %s24 = sadd.s32 %s17, 1
    %s25 = ssub.s32 %s17, %s24
    %p26 = scmp.eq.s32.totalorder %s25, 0
    %s28 = sadd.s32 %s27, 1
    %s29 = scalar_select %p26, %s27, %s28
    %p32 = pneg %p26
    %p33 = scmp.eq.s32.totalorder %s17, 1
    %p34 = por %p32, %p33
    %p35 = scmp.ne.s32.totalorder %s27, %s30
    %p36 = scmp.eq.s32.totalorder %s17, 0
    %p37 = por %p35, %p36
    %p38 = scmp.ne.s32.totalorder %s27, %s30
    %p39 = scmp.eq.s32.totalorder %s22, 1
    %p40 = por %p38, %p39
    %p41 = scmp.ne.s32.totalorder %s30, %s31
    %p42 = scmp.eq.s32.totalorder %s22, 0
    %p43 = por %p41, %p42
    %p44 = scmp.ne.s32.totalorder %s30, %s31
    %p45 = scmp.eq.s32.totalorder %s23, 1
    %p46 = por %p44, %p45
    %p48 = scmp.ne.s32.totalorder %s31, %s47
    %p49 = scmp.eq.s32.totalorder %s23, 0
    %p50 = por %p48, %p49
    %s51 = ssub.s32 %s17, %s24
    %p52 = scmp.eq.s32.totalorder %s51, 0
    %s54 = sadd.s32 %s53, 1
    %s55 = scalar_select %p52, %s53, %s54
    %p58 = pneg %p52
    %p59 = scmp.eq.s32.totalorder %s17, 1
    %p60 = por %p58, %p59
    %p61 = scmp.ne.s32.totalorder %s53, %s56
    %p62 = scmp.eq.s32.totalorder %s17, 0
    %p63 = por %p61, %p62
    %p64 = scmp.ne.s32.totalorder %s53, %s56
    %p65 = scmp.eq.s32.totalorder %s22, 1
    %p66 = por %p64, %p65
    %p67 = scmp.ne.s32.totalorder %s56, %s57
    %p68 = scmp.eq.s32.totalorder %s22, 0
    %p69 = por %p67, %p68
    %p70 = scmp.ne.s32.totalorder %s56, %s57
    %p71 = scmp.eq.s32.totalorder %s23, 1
    %p72 = por %p70, %p71
    %p74 = scmp.ne.s32.totalorder %s57, %s73
    %p75 = scmp.eq.s32.totalorder %s23, 0
    %p76 = por %p74, %p75
    %s78 = sadd.s32 %s77, 1
    %p81 = scmp.eq.s32.totalorder %s17, 1
    %p82 = scmp.ne.s32.totalorder %s77, %s79
    %p83 = scmp.eq.s32.totalorder %s17, 0
    %p84 = por %p82, %p83
    %p85 = scmp.ne.s32.totalorder %s77, %s79
    %p86 = scmp.eq.s32.totalorder %s22, 1
    %p87 = por %p85, %p86
    %p88 = scmp.ne.s32.totalorder %s79, %s80
    %p89 = scmp.eq.s32.totalorder %s22, 0
    %p90 = por %p88, %p89
    %p91 = scmp.ne.s32.totalorder %s79, %s80
    %p92 = scmp.eq.s32.totalorder %s23, 1
    %p93 = por %p91, %p92
    %p95 = scmp.ne.s32.totalorder %s80, %s94
    %p96 = scmp.eq.s32.totalorder %s23, 0
    %p97 = por %p95, %p96
    %s99 = sadd.s32 %s98, 1
    %p102 = scmp.eq.s32.totalorder %s17, 1
    %p103 = scmp.ne.s32.totalorder %s98, %s100
    %p104 = scmp.eq.s32.totalorder %s17, 0
    %p105 = por %p103, %p104
    %p106 = scmp.ne.s32.totalorder %s98, %s100
    %p107 = scmp.eq.s32.totalorder %s22, 1
    %p108 = por %p106, %p107
    %p109 = scmp.ne.s32.totalorder %s100, %s101
    %p110 = scmp.eq.s32.totalorder %s22, 0
    %p111 = por %p109, %p110
    %p112 = scmp.ne.s32.totalorder %s100, %s101
    %p113 = scmp.eq.s32.totalorder %s23, 1
    %p114 = por %p112, %p113
    %p116 = scmp.ne.s32.totalorder %s101, %s115
    %p117 = scmp.eq.s32.totalorder %s23, 0
    %p118 = por %p116, %p117
    %s120 = sadd.s32 %s119, 1
    %p123 = scmp.eq.s32.totalorder %s17, 1
    %p124 = scmp.ne.s32.totalorder %s119, %s121
    %p125 = scmp.eq.s32.totalorder %s17, 0
    %p126 = por %p124, %p125
    %p127 = scmp.ne.s32.totalorder %s119, %s121
    %p128 = scmp.eq.s32.totalorder %s22, 1
    %p129 = por %p127, %p128
    %p130 = scmp.ne.s32.totalorder %s121, %s122
    %p131 = scmp.eq.s32.totalorder %s22, 0
    %p132 = por %p130, %p131
    %p133 = scmp.ne.s32.totalorder %s121, %s122
    %p134 = scmp.eq.s32.totalorder %s23, 1
    %p135 = por %p133, %p134
    %p137 = scmp.ne.s32.totalorder %s122, %s136
    %p138 = scmp.eq.s32.totalorder %s23, 0
    %p139 = por %p137, %p138
    %s141 = sadd.s32 %s140, 1
    %p144 = scmp.eq.s32.totalorder %s17, 1
    %p145 = scmp.ne.s32.totalorder %s140, %s142
    %p146 = scmp.eq.s32.totalorder %s17, 0
    %p147 = por %p145, %p146
    %p148 = scmp.ne.s32.totalorder %s140, %s142
    %p149 = scmp.eq.s32.totalorder %s22, 1
    %p150 = por %p148, %p149
    %p151 = scmp.ne.s32.totalorder %s142, %s143
    %p152 = scmp.eq.s32.totalorder %s22, 0
    %p153 = por %p151, %p152
    %p154 = scmp.ne.s32.totalorder %s142, %s143
    %p155 = scmp.eq.s32.totalorder %s23, 1
    %p156 = por %p154, %p155
    %p158 = scmp.ne.s32.totalorder %s143, %s157
    %p159 = scmp.eq.s32.totalorder %s23, 0
    %p160 = por %p158, %p159
    %s162 = sadd.s32 %s161, 1
    %p165 = scmp.eq.s32.totalorder %s17, 1
    %p166 = scmp.ne.s32.totalorder %s161, %s163
    %p167 = scmp.eq.s32.totalorder %s17, 0
    %p168 = por %p166, %p167
    %p169 = scmp.ne.s32.totalorder %s161, %s163
    %p170 = scmp.eq.s32.totalorder %s22, 1
    %p171 = por %p169, %p170
    %p172 = scmp.ne.s32.totalorder %s163, %s164
    %p173 = scmp.eq.s32.totalorder %s22, 0
    %p174 = por %p172, %p173
    %p175 = scmp.ne.s32.totalorder %s163, %s164
    %p176 = scmp.eq.s32.totalorder %s23, 1
    %p177 = por %p175, %p176
    %p179 = scmp.ne.s32.totalorder %s164, %s178
    %p180 = scmp.eq.s32.totalorder %s23, 0
    %p181 = por %p179, %p180
    %s183 = sadd.s32 %s182, 1
    %p186 = scmp.eq.s32.totalorder %s17, 1
    %p187 = scmp.ne.s32.totalorder %s182, %s184
    %p188 = scmp.eq.s32.totalorder %s17, 0
    %p189 = por %p187, %p188
    %p190 = scmp.ne.s32.totalorder %s182, %s184
    %p191 = scmp.eq.s32.totalorder %s22, 1
    %p192 = por %p190, %p191
    %p193 = scmp.ne.s32.totalorder %s184, %s185
    %p194 = scmp.eq.s32.totalorder %s22, 0
    %p195 = por %p193, %p194
    %p196 = scmp.ne.s32.totalorder %s184, %s185
    %p197 = scmp.eq.s32.totalorder %s23, 1
    %p198 = por %p196, %p197
    %p200 = scmp.ne.s32.totalorder %s185, %s199
    %p201 = scmp.eq.s32.totalorder %s23, 0
    %p202 = por %p200, %p201
    %s204 = sadd.s32 %s203, 1
    %p207 = scmp.eq.s32.totalorder %s17, 1
    %p208 = scmp.ne.s32.totalorder %s203, %s205
    %p209 = scmp.eq.s32.totalorder %s17, 0
    %p210 = por %p208, %p209
    %p211 = scmp.ne.s32.totalorder %s203, %s205
    %p212 = scmp.eq.s32.totalorder %s22, 1
    %p213 = por %p211, %p212
    %p214 = scmp.ne.s32.totalorder %s205, %s206
    %p215 = scmp.eq.s32.totalorder %s22, 0
    %p216 = por %p214, %p215
    %p217 = scmp.ne.s32.totalorder %s205, %s206
    %p218 = scmp.eq.s32.totalorder %s23, 1
    %p219 = por %p217, %p218
    %p221 = scmp.ne.s32.totalorder %s206, %s220
    %p222 = scmp.eq.s32.totalorder %s23, 0
    %p223 = por %p221, %p222
    %s225 = sadd.s32 %s224, 1
    %p228 = scmp.eq.s32.totalorder %s17, 1
    %p229 = scmp.ne.s32.totalorder %s224, %s226
    %p230 = scmp.eq.s32.totalorder %s17, 0
    %p231 = por %p229, %p230
    %p232 = scmp.ne.s32.totalorder %s224, %s226
    %p233 = scmp.eq.s32.totalorder %s22, 1
    %p234 = por %p232, %p233
    %p235 = scmp.ne.s32.totalorder %s226, %s227
    %p236 = scmp.eq.s32.totalorder %s22, 0
    %p237 = por %p235, %p236
    %p238 = scmp.ne.s32.totalorder %s226, %s227
    %p239 = scmp.eq.s32.totalorder %s23, 1
    %p240 = por %p238, %p239
    %p242 = scmp.ne.s32.totalorder %s227, %s241
    %p243 = scmp.eq.s32.totalorder %s23, 0
    %p244 = por %p242, %p243
    %s246 = sadd.s32 %s245, 1
    %p249 = scmp.eq.s32.totalorder %s17, 1
    %p250 = scmp.ne.s32.totalorder %s245, %s247
    %p251 = scmp.eq.s32.totalorder %s17, 0
    %p252 = por %p250, %p251
    %p253 = scmp.ne.s32.totalorder %s245, %s247
    %p254 = scmp.eq.s32.totalorder %s22, 1
    %p255 = por %p253, %p254
    %p256 = scmp.ne.s32.totalorder %s247, %s248
    %p257 = scmp.eq.s32.totalorder %s22, 0
    %p258 = por %p256, %p257
    %p259 = scmp.ne.s32.totalorder %s247, %s248
    %p260 = scmp.eq.s32.totalorder %s23, 1
    %p261 = por %p259, %p260
    %p263 = scmp.ne.s32.totalorder %s248, %s262
    %p264 = scmp.eq.s32.totalorder %s23, 0
    %p265 = por %p263, %p264
    %s266 = ssub.s32 %s17, %s24
    %p267 = scmp.eq.s32.totalorder %s266, 0
    %s269 = sadd.s32 %s268, 1
    %s270 = scalar_select %p267, %s268, %s269
    %p273 = pneg %p267
    %p274 = scmp.eq.s32.totalorder %s17, 1
    %p275 = por %p273, %p274
    %p276 = scmp.ne.s32.totalorder %s268, %s271
    %p277 = scmp.eq.s32.totalorder %s17, 0
    %p278 = por %p276, %p277
    %p279 = scmp.ne.s32.totalorder %s268, %s271
    %p280 = scmp.eq.s32.totalorder %s22, 1
    %p281 = por %p279, %p280
    %p282 = scmp.ne.s32.totalorder %s271, %s272
    %p283 = scmp.eq.s32.totalorder %s22, 0
    %p284 = por %p282, %p283
    %p285 = scmp.ne.s32.totalorder %s271, %s272
    %p286 = scmp.eq.s32.totalorder %s23, 1
    %p287 = por %p285, %p286
    %p289 = scmp.ne.s32.totalorder %s272, %s288
    %p290 = scmp.eq.s32.totalorder %s23, 0
    %p291 = por %p289, %p290
    %p292 = scmp.le.s32.totalorder 1, %s17
    %p293 = scmp.lt.s32.totalorder %s17, 3
    %p294 = pnand %p292, %p293
    %p295 = pneg %p294
    // Predicated region
    $region9: #{mask_cnn_1_forward.1} parent=5 // pred_check
      _
    $region10: #{mask_cnn_1_forward.1} parent=5 // pred_check_branch
      %297 = sbr.rel (%p294) target = $region12
    $region11: #{mask_cnn_1_forward.1} parent=5 // pred_region
      %s298 = ssub.s32 %s17, 1
      // Predicated region
      $region13: #{mask_cnn_1_forward.1} parent=11 // pred_check
        %p299 = pneg %p90
      $region14: #{mask_cnn_1_forward.1} parent=11 // pred_check_branch
        %301 = sbr.rel (%p299) target = $region16
      $region15: #{mask_cnn_1_forward.1} parent=11 // pred_region
        _
      $region16: #{mask_cnn_1_forward.1} parent=11 // pred_fallthru
        _
      // Predicated region
      $region17: #{mask_cnn_1_forward.1} parent=11 // pred_check
        %p302 = pneg %p111
      $region18: #{mask_cnn_1_forward.1} parent=11 // pred_check_branch
        %304 = sbr.rel (%p302) target = $region20
      $region19: #{mask_cnn_1_forward.1} parent=11 // pred_region
        _
      $region20: #{mask_cnn_1_forward.1} parent=11 // pred_fallthru
        _
      // Predicated region
      $region21: #{mask_cnn_1_forward.1} parent=11 // pred_check
        %p305 = pneg %p132
      $region22: #{mask_cnn_1_forward.1} parent=11 // pred_check_branch
        %307 = sbr.rel (%p305) target = $region24
      $region23: #{mask_cnn_1_forward.1} parent=11 // pred_region
        _
      $region24: #{mask_cnn_1_forward.1} parent=11 // pred_fallthru
        _
      // Predicated region
      $region25: #{mask_cnn_1_forward.1} parent=11 // pred_check
        %p308 = pneg %p153
      $region26: #{mask_cnn_1_forward.1} parent=11 // pred_check_branch
        %310 = sbr.rel (%p308) target = $region28
      $region27: #{mask_cnn_1_forward.1} parent=11 // pred_region
        _
      $region28: #{mask_cnn_1_forward.1} parent=11 // pred_fallthru
        _
      // Predicated region
      $region29: #{mask_cnn_1_forward.1} parent=11 // pred_check
        %p311 = pneg %p174
      $region30: #{mask_cnn_1_forward.1} parent=11 // pred_check_branch
        %313 = sbr.rel (%p311) target = $region32
      $region31: #{mask_cnn_1_forward.1} parent=11 // pred_region
        _
      $region32: #{mask_cnn_1_forward.1} parent=11 // pred_fallthru
        _
      // Predicated region
      $region33: #{mask_cnn_1_forward.1} parent=11 // pred_check
        %p314 = pneg %p195
      $region34: #{mask_cnn_1_forward.1} parent=11 // pred_check_branch
        %316 = sbr.rel (%p314) target = $region36
      $region35: #{mask_cnn_1_forward.1} parent=11 // pred_region
        _
      $region36: #{mask_cnn_1_forward.1} parent=11 // pred_fallthru
        _
      // Predicated region
      $region37: #{mask_cnn_1_forward.1} parent=11 // pred_check
        %p317 = pneg %p216
      $region38: #{mask_cnn_1_forward.1} parent=11 // pred_check_branch
        %319 = sbr.rel (%p317) target = $region40
      $region39: #{mask_cnn_1_forward.1} parent=11 // pred_region
        _
      $region40: #{mask_cnn_1_forward.1} parent=11 // pred_fallthru
        _
      // Predicated region
      $region41: #{mask_cnn_1_forward.1} parent=11 // pred_check
        %p320 = pneg %p237
      $region42: #{mask_cnn_1_forward.1} parent=11 // pred_check_branch
        %322 = sbr.rel (%p320) target = $region44
      $region43: #{mask_cnn_1_forward.1} parent=11 // pred_region
        _
      $region44: #{mask_cnn_1_forward.1} parent=11 // pred_fallthru
        _
      // Predicated region
      $region45: #{mask_cnn_1_forward.1} parent=11 // pred_check
        %p323 = pneg %p258
      $region46: #{mask_cnn_1_forward.1} parent=11 // pred_check_branch
        %325 = sbr.rel (%p323) target = $region48
      $region47: #{mask_cnn_1_forward.1} parent=11 // pred_region
        _
      $region48: #{mask_cnn_1_forward.1} parent=11 // pred_fallthru
        _
    $region12: #{mask_cnn_1_forward.1} parent=5 // pred_fallthru
      _
    %p326 = scmp.lt.s32.totalorder %s17, 2
    // Predicated region
    $region49: #{mask_cnn_1_forward.1} parent=5 // pred_check
      %p327 = pneg %p326
    $region50: #{mask_cnn_1_forward.1} parent=5 // pred_check_branch
      %329 = sbr.rel (%p327) target = $region52
    $region51: #{mask_cnn_1_forward.1} parent=5 // pred_region
      // Predicated region
      $region53: #{mask_cnn_1_forward.1} parent=51 // pred_check
        %p330 = pneg %p37
      $region54: #{mask_cnn_1_forward.1} parent=51 // pred_check_branch
        %332 = sbr.rel (%p330) target = $region56
      $region55: #{mask_cnn_1_forward.1} parent=51 // pred_region
        %p333 = scmp.lt.s32.totalorder %s17, 1
        %s334 = scalar_select %p333, %s17, 1
        %s335 = smul.addr %s334, 2
        %s336 = smul.addr %s335, 4
        %s337 = scalar_lea.vmem %s0, %s336
      $region56: #{mask_cnn_1_forward.1} parent=51 // pred_fallthru
        _
      // Predicated region
      $region57: #{mask_cnn_1_forward.1} parent=51 // pred_check
        %p338 = pneg %p63
      $region58: #{mask_cnn_1_forward.1} parent=51 // pred_check_branch
        %340 = sbr.rel (%p338) target = $region60
      $region59: #{mask_cnn_1_forward.1} parent=51 // pred_region
        %p341 = scmp.lt.s32.totalorder %s17, 1
        %s342 = scalar_select %p341, %s17, 1
        %s343 = smul.addr %s342, 2
        %s344 = scalar_lea.vmem %s1, %s343
      $region60: #{mask_cnn_1_forward.1} parent=51 // pred_fallthru
        _
    $region52: #{mask_cnn_1_forward.1} parent=5 // pred_fallthru
      _
    %p345 = scmp.le.s32.totalorder 1, %s17
    %p346 = scmp.lt.s32.totalorder %s17, 3
    %p347 = pnand %p345, %p346
    %p348 = pneg %p347
    // Predicated region
    $region61: #{mask_cnn_1_forward.1} parent=5 // pred_check
      _
    $region62: #{mask_cnn_1_forward.1} parent=5 // pred_check_branch
      %350 = sbr.rel (%p347) target = $region64
    $region63: #{mask_cnn_1_forward.1} parent=5 // pred_region
      %s351 = ssub.s32 %s17, 1
      %p352 = scmp.lt.s32.totalorder %s22, 1
      %s353 = scalar_select %p352, %s22, 1
      %s354 = smul.addr %s353, 2
      %s355 = smul.addr %s354, 4
      %s356 = scalar_lea.vmem %s0, %s355
      %p357 = pneg %p43
      %p358 = pneg %p40
      %p359 = scmp.lt.s32.totalorder %s22, 1
      %s360 = scalar_select %p359, %s22, 1
      %s361 = smul.addr %s360, 2
      %s362 = scalar_lea.vmem %s1, %s361
      %p363 = pneg %p69
      %p364 = pneg %p66
      %p365 = pneg %p90
      %p366 = pneg %p87
      %p367 = pneg %p111
      %p368 = pneg %p108
      %p369 = pneg %p132
      %p370 = pneg %p129
      %p371 = pneg %p153
      %p372 = pneg %p150
      %p373 = pneg %p174
      %p374 = pneg %p171
      %p375 = pneg %p195
      %p376 = pneg %p192
      %p377 = pneg %p216
      %p378 = pneg %p213
      %p379 = pneg %p237
      %p380 = pneg %p234
      %p381 = pneg %p258
      %p382 = pneg %p255
      %p383 = pneg %p284
      %p384 = pneg %p281
      %p385 = scmp.lt.s32.totalorder %s22, 1
      %s386 = scalar_select %p385, %s22, 1
      %s387 = smul.addr %s386, 2
      %s388 = smul.addr %s387, 8
      %s389 = scalar_lea.vmem %s11, %s388
      %p390 = scmp.lt.s32.totalorder %s22, 1
      %s391 = scalar_select %p390, %s22, 1
      %s392 = smul.addr %s391, 2
      %s393 = smul.addr %s392, 4
      %s394 = scalar_lea.vmem %s0, %s393
      %p395 = scmp.lt.s32.totalorder %s22, 1
      %s396 = scalar_select %p395, %s22, 1
      %s397 = smul.addr %s396, 2
      %s398 = scalar_lea.vmem %s1, %s397
      %p399 = scmp.lt.s32.totalorder %s22, 1
      %s400 = scalar_select %p399, %s22, 1
      %s401 = smul.addr %s400, 2
      %s402 = smul.addr %s401, 8
      %s403 = scalar_lea.vmem %s11, %s402
      %v404 = vld [vmem:[%s394] sm:$0xff]
      %v405 = vld [vmem:[%s398] sm:$0x3]
      %v406 = vld [vmem:[%s2] sm:$0xff]
      %v407 = vld [vmem:[%s2 + $0x8] sm:$0xff]
      %v408 = vld [vmem:[%s2 + $0x10] sm:$0x1]
      %v409 = vld [vmem:[%s2 + $0x18] sm:$0x1]
      %v410 = vld [vmem:[%s3] sm:$0xff]
      %v411 = vld [vmem:[%s4] sm:$0xff]
      %v412 = vld [vmem:[%s5] sm:$0xf]
      %v413 = vld [vmem:[%s6] sm:$0xf]
      %v414 = vld [vmem:[%s7] sm:$0xf]
      %v415 = vld [vmem:[%s8] sm:$0xf]
      %v416 = vld [vmem:[%s9] sm:$0xf]
      %v417 = vld [vmem:[%s10] sm:$0xf]
      %v419 = vlaneseq
      %v420 = vshrl.u32 %v419, 7
      %v421 = vsub.s32 0, %v420
      %v422 = vrot.slane %v405, %v421
      %v423 = vlaneseq
      %v424 = vshrl.u32 %v423, 7
      %v425 = vsub.s32 1, %v424
      %v426 = vrot.slane %v405, %v425
      %v429 = vcombine.low %v422, %v426
      %v431 = vmul.f32 %v404, %v429
      %v433 = vcombine.high %v431, %v431
      %435 = vrot.lane.b32.xlu0 %v431, 17
      %v436 = vpop.permute.xlu0 %435
      %437 = vrot.lane.b32.xlu0 %v433, 17
      %v438 = vpop.permute.xlu0 %437
      %v439 = vlaneseq
      %v440 = vand.u32 %v439, 127
      %vm441 = vcmp.lt.s32.totalorder %v440, 17
      %v442 = vsel %vm441, %v436, %v438
      %v443 = vsel %vm441, %v438, %v436
      %v444 = vlaneseq
      %v445 = vshrl.u32 %v444, 7
      %v446 = vsub.s32 0, %v445
      %v447 = vrot.slane %v406, %v446
      %v448 = vlaneseq
      %v449 = vshrl.u32 %v448, 7
      %v450 = vsub.s32 0, %v449
      %v451 = vrot.slane %v407, %v450
      %v452 = vmul.f32 %v443, %v447
      %v453 = vmul.f32 %v442, %v451
      %454 = vst [vmem:[#allocation2] sm:$0xf] %v452
      %455 = vst [vmem:[#allocation2 + $0x8] sm:$0xf] %v453
      %456 = vrot.lane.b32.xlu0 %v431, 16
      %v457 = vpop.permute.xlu0 %456
      %458 = vrot.lane.b32.xlu0 %v433, 16
      %v459 = vpop.permute.xlu0 %458
      %vm460 = vcmp.lt.s32.totalorder %v440, 16
      %v461 = vsel %vm460, %v457, %v459
      %v462 = vsel %vm460, %v459, %v457
      %v463 = vlaneseq
      %v464 = vshrl.u32 %v463, 7
      %v465 = vsub.s32 1, %v464
      %v466 = vrot.slane %v406, %v465
      %v467 = vlaneseq
      %v468 = vshrl.u32 %v467, 7
      %v469 = vsub.s32 1, %v468
      %v470 = vrot.slane %v407, %v469
      %v471 = vmul.f32 %v462, %v466
      %v472 = vmul.f32 %v461, %v470
      %v475 = vrot.slane %v471, 4
      %v476 = vrot.slane %v472, 4
      %479 = vst [vmem:[#allocation2] sm:$0xf0] %v475
      %480 = vst [vmem:[#allocation2 + $0x8] sm:$0xf0] %v476
      %481 = vrot.lane.b32.xlu0 %v431, 15
      %v482 = vpop.permute.xlu0 %481
      %483 = vrot.lane.b32.xlu0 %v433, 15
      %v484 = vpop.permute.xlu0 %483
      %vm485 = vcmp.lt.s32.totalorder %v440, 15
      %v486 = vsel %vm485, %v482, %v484
      %v487 = vsel %vm485, %v484, %v482
      %v488 = vlaneseq
      %v489 = vshrl.u32 %v488, 7
      %v490 = vsub.s32 2, %v489
      %v491 = vrot.slane %v406, %v490
      %v492 = vlaneseq
      %v493 = vshrl.u32 %v492, 7
      %v494 = vsub.s32 2, %v493
      %v495 = vrot.slane %v407, %v494
      %v496 = vmul.f32 %v487, %v491
      %v497 = vmul.f32 %v486, %v495
      %498 = vst [vmem:[#allocation2 + $0x10] sm:$0xf] %v496
      %499 = vst [vmem:[#allocation2 + $0x18] sm:$0xf] %v497
      %500 = vrot.lane.b32.xlu0 %v431, 1
      %v501 = vpop.permute.xlu0 %500
      %502 = vrot.lane.b32.xlu0 %v433, 1
      %v503 = vpop.permute.xlu0 %502
      %vm504 = vcmp.lt.s32.totalorder %v440, 1
      %v505 = vsel %vm504, %v501, %v503
      %v506 = vsel %vm504, %v503, %v501
      %v507 = vlaneseq
      %v508 = vshrl.u32 %v507, 7
      %v509 = vsub.s32 3, %v508
      %v510 = vrot.slane %v406, %v509
      %v511 = vlaneseq
      %v512 = vshrl.u32 %v511, 7
      %v513 = vsub.s32 3, %v512
      %v514 = vrot.slane %v407, %v513
      %v515 = vmul.f32 %v506, %v510
      %v516 = vmul.f32 %v505, %v514
      %v519 = vrot.slane %v515, 4
      %v520 = vrot.slane %v516, 4
      %523 = vst [vmem:[#allocation2 + $0x10] sm:$0xf0] %v519
      %524 = vst [vmem:[#allocation2 + $0x18] sm:$0xf0] %v520
      %v525 = vlaneseq
      %v526 = vshrl.u32 %v525, 7
      %v527 = vsub.s32 4, %v526
      %v528 = vrot.slane %v406, %v527
      %v529 = vlaneseq
      %v530 = vshrl.u32 %v529, 7
      %v531 = vsub.s32 4, %v530
      %v532 = vrot.slane %v407, %v531
      %v535 = vcombine.low %v528, %v532
      %v537 = vmul.f32 %v431, %v535
      %v539 = vcombine.high %v537, %v537
      %541 = vst [vmem:[#allocation2 + $0x20] sm:$0xf] %v537
      %542 = vst [vmem:[#allocation2 + $0x28] sm:$0xf] %v539
      %543 = vrot.lane.b32.xlu0 %v431, 127
      %v544 = vpop.permute.xlu0 %543
      %545 = vrot.lane.b32.xlu0 %v433, 127
      %v546 = vpop.permute.xlu0 %545
      %vm547 = vcmp.lt.s32.totalorder %v440, 127
      %v548 = vsel %vm547, %v544, %v546
      %v549 = vsel %vm547, %v546, %v544
      %v550 = vlaneseq
      %v551 = vshrl.u32 %v550, 7
      %v552 = vsub.s32 5, %v551
      %v553 = vrot.slane %v406, %v552
      %v554 = vlaneseq
      %v555 = vshrl.u32 %v554, 7
      %v556 = vsub.s32 5, %v555
      %v557 = vrot.slane %v407, %v556
      %v558 = vmul.f32 %v548, %v553
      %v559 = vmul.f32 %v549, %v557
      %v562 = vrot.slane %v558, 4
      %v563 = vrot.slane %v559, 4
      %566 = vst [vmem:[#allocation2 + $0x20] sm:$0xf0] %v562
      %567 = vst [vmem:[#allocation2 + $0x28] sm:$0xf0] %v563
      %568 = vrot.lane.b32.xlu0 %v431, 113
      %v569 = vpop.permute.xlu0 %568
      %570 = vrot.lane.b32.xlu0 %v433, 113
      %v571 = vpop.permute.xlu0 %570
      %vm572 = vcmp.lt.s32.totalorder %v440, 113
      %v573 = vsel %vm572, %v569, %v571
      %v574 = vsel %vm572, %v571, %v569
      %v575 = vlaneseq
      %v576 = vshrl.u32 %v575, 7
      %v577 = vsub.s32 6, %v576
      %v578 = vrot.slane %v406, %v577
      %v579 = vlaneseq
      %v580 = vshrl.u32 %v579, 7
      %v581 = vsub.s32 6, %v580
      %v582 = vrot.slane %v407, %v581
      %v583 = vmul.f32 %v573, %v578
      %v584 = vmul.f32 %v574, %v582
      %585 = vst [vmem:[#allocation2 + $0x30] sm:$0xf] %v583
      %586 = vst [vmem:[#allocation2 + $0x38] sm:$0xf] %v584
      %587 = vrot.lane.b32.xlu0 %v431, 112
      %v588 = vpop.permute.xlu0 %587
      %589 = vrot.lane.b32.xlu0 %v433, 112
      %v590 = vpop.permute.xlu0 %589
      %vm591 = vcmp.lt.s32.totalorder %v440, 112
      %v592 = vsel %vm591, %v588, %v590
      %v593 = vsel %vm591, %v590, %v588
      %v594 = vlaneseq
      %v595 = vshrl.u32 %v594, 7
      %v596 = vsub.s32 7, %v595
      %v597 = vrot.slane %v406, %v596
      %v598 = vlaneseq
      %v599 = vshrl.u32 %v598, 7
      %v600 = vsub.s32 7, %v599
      %v601 = vrot.slane %v407, %v600
      %v602 = vmul.f32 %v592, %v597
      %v603 = vmul.f32 %v593, %v601
      %v606 = vrot.slane %v602, 4
      %v607 = vrot.slane %v603, 4
      %610 = vst [vmem:[#allocation2 + $0x30] sm:$0xf0] %v606
      %611 = vst [vmem:[#allocation2 + $0x38] sm:$0xf0] %v607
      %612 = vrot.lane.b32.xlu0 %v431, 111
      %v613 = vpop.permute.xlu0 %612
      %614 = vrot.lane.b32.xlu0 %v433, 111
      %v615 = vpop.permute.xlu0 %614
      %vm616 = vcmp.lt.s32.totalorder %v440, 111
      %v617 = vsel %vm616, %v613, %v615
      %v618 = vsel %vm616, %v615, %v613
      %v619 = vlaneseq
      %v620 = vshrl.u32 %v619, 7
      %v621 = vsub.s32 0, %v620
      %v622 = vrot.slane %v408, %v621
      %v623 = vlaneseq
      %v624 = vshrl.u32 %v623, 7
      %v625 = vsub.s32 0, %v624
      %v626 = vrot.slane %v409, %v625
      %v627 = vmul.f32 %v617, %v622
      %v628 = vmul.f32 %v618, %v626
      %629 = vst [vmem:[#allocation2 + $0x40] sm:$0xf] %v627
      %630 = vst [vmem:[#allocation2 + $0x48] sm:$0xf] %v628
      %v631 = vld [vmem:[#allocation2] sm:$0xff]
      %v632 = vld [vmem:[#allocation2 + $0x8] sm:$0xff]
      %v633 = vld [vmem:[#allocation2 + $0x10] sm:$0xff]
      %v634 = vld [vmem:[#allocation2 + $0x18] sm:$0xff]
      %v635 = vld [vmem:[#allocation2 + $0x20] sm:$0xff]
      %v636 = vld [vmem:[#allocation2 + $0x28] sm:$0xff]
      %v637 = vld [vmem:[#allocation2 + $0x30] sm:$0xff]
      %v638 = vld [vmem:[#allocation2 + $0x38] sm:$0xff]
      %v639 = vld [vmem:[#allocation2 + $0x40] sm:$0xf]
      %v640 = vld [vmem:[#allocation2 + $0x48] sm:$0xf]
      %vm641 = vcmask 293888
      %v643 = vsel %vm641, %v412, 0
      %vm645 = vcmask 1043456
      %v647 = vsel %vm645, %v639, 0
      %v650 = vsel %vm645, %v640, 0
      %652 = vmatprep.subr.mxu0 0.0
      %653 = vmatpush1.msra.mxu0 0.0
      %654 = vmatprep.subr.mxu0 0.0
      %655 = vmatpush1.msra.mxu0 0.0
      %656 = vmatprep.subr.mxu0 0.0
      %657 = vmatpush1.msra.mxu0 0.0
      %658 = vmatprep.subr.mxu0 0.0
      %659 = vmatpush1.msra.mxu0 0.0
      %660 = vmatprep.subr.mxu0 0.0
      %661 = vmatpush1.msra.mxu0 0.0
      %662 = vmatprep.subr.mxu0 0.0
      %663 = vmatpush1.msra.mxu0 0.0
      %664 = vmatprep.subr.mxu0 0.0
      %665 = vmatpush1.msra.mxu0 0.0
      %666 = vmatprep.subr.mxu0 0.0
      %667 = vmatpush1.msra.mxu0 0.0
      %668 = vmatprep.subr.mxu0 0.0
      %669 = vmatpush1.msra.mxu0 0.0
      %670 = vmatprep.subr.mxu0 0.0
      %671 = vmatpush1.msra.mxu0 0.0
      %672 = vmatprep.subr.mxu0 0.0
      %673 = vmatpush1.msra.mxu0 0.0
      %674 = vmatprep.subr.mxu0 %v650
      %675 = vmatpush1.msra.mxu0 %v647
      %676 = vmatprep.subr.mxu0 %v638
      %677 = vmatpush1.msra.mxu0 %v637
      %678 = vmatprep.subr.mxu0 %v636
      %679 = vmatpush1.msra.mxu0 %v635
      %680 = vmatprep.subr.mxu0 %v634
      %681 = vmatpush1.msra.mxu0 %v633
      %682 = vmatprep.subr.mxu0 %v632
      %683 = vmatpush1.msra.mxu0 %v631
      %684 = vmatprep.subr.mxu0 0.0
      %685 = vmatpush2.msra.mxu0 0.0
      %686 = vmatprep.subr.mxu0 0.0
      %687 = vmatpush2.msra.mxu0 0.0
      %688 = vmatprep.subr.mxu0 0.0
      %689 = vmatpush2.msra.mxu0 0.0
      %690 = vmatprep.subr.mxu0 0.0
      %691 = vmatpush2.msra.mxu0 0.0
      %692 = vmatprep.subr.mxu0 0.0
      %693 = vmatpush2.msra.mxu0 0.0
      %694 = vmatprep.subr.mxu0 0.0
      %695 = vmatpush2.msra.mxu0 0.0
      %696 = vmatprep.subr.mxu0 0.0
      %697 = vmatpush2.msra.mxu0 0.0
      %698 = vmatprep.subr.mxu0 0.0
      %699 = vmatpush2.msra.mxu0 0.0
      %700 = vmatprep.subr.mxu0 0.0
      %701 = vmatpush2.msra.mxu0 0.0
      %702 = vmatprep.subr.mxu0 0.0
      %703 = vmatpush2.msra.mxu0 0.0
      %704 = vmatprep.subr.mxu0 0.0
      %705 = vmatpush2.msra.mxu0 0.0
      %706 = vmatprep.subr.mxu0 0.0
      %707 = vmatpush2.msra.mxu0 0.0
      %708 = vmatprep.subr.mxu0 0.0
      %709 = vmatpush2.msra.mxu0 0.0
      %710 = vmatprep.subr.mxu0 0.0
      %711 = vmatpush2.msra.mxu0 0.0
      %712 = vmatprep.subr.mxu0 0.0
      %713 = vmatpush2.msra.mxu0 0.0
      %714 = vmatprep.subr.mxu0 0.0
      %715 = vmatpush2.msra.mxu0 0.0
      %716 = vmatprep.mubr.f32.mxu0 0.0
      %717 = vmatmul.mubr.f32.gmra.mxu0 %v643
      %v718 = vpop.f32.mrf.mxu0
      %v719 = vadd.f32 0.0, %v718
      %v720 = vpop.f32.mrf.mxu0
      %v721 = vadd.f32 0.0, %v720
      %722 = vdwg.mxu0
      %vm723 = vcmask 31744
      %v725 = vsel %vm723, 0.25, 0
      %v728 = vsel %vm645, %v719, 0
      %v731 = vsel %vm645, %v721, 0
      %733 = vmatprep.subr.mxu0 0.0
      %734 = vmatpush1.msra.mxu0 0.0
      %735 = vmatprep.subr.mxu0 0.0
      %736 = vmatpush1.msra.mxu0 0.0
      %737 = vmatprep.subr.mxu0 0.0
      %738 = vmatpush1.msra.mxu0 0.0
      %739 = vmatprep.subr.mxu0 0.0
      %740 = vmatpush1.msra.mxu0 0.0
      %741 = vmatprep.subr.mxu0 0.0
      %742 = vmatpush1.msra.mxu0 0.0
      %743 = vmatprep.subr.mxu0 0.0
      %744 = vmatpush1.msra.mxu0 0.0
      %745 = vmatprep.subr.mxu0 0.0
      %746 = vmatpush1.msra.mxu0 0.0
      %747 = vmatprep.subr.mxu0 0.0
      %748 = vmatpush1.msra.mxu0 0.0
      %749 = vmatprep.subr.mxu0 0.0
      %750 = vmatpush1.msra.mxu0 0.0
      %751 = vmatprep.subr.mxu0 0.0
      %752 = vmatpush1.msra.mxu0 0.0
      %753 = vmatprep.subr.mxu0 0.0
      %754 = vmatpush1.msra.mxu0 0.0
      %755 = vmatprep.subr.mxu0 0.0
      %756 = vmatpush1.msra.mxu0 0.0
      %757 = vmatprep.subr.mxu0 0.0
      %758 = vmatpush1.msra.mxu0 0.0
      %759 = vmatprep.subr.mxu0 0.0
      %760 = vmatpush1.msra.mxu0 0.0
      %761 = vmatprep.subr.mxu0 0.0
      %762 = vmatpush1.msra.mxu0 0.0
      %763 = vmatprep.subr.mxu0 %v731
      %764 = vmatpush1.msra.mxu0 %v728
      %765 = vmatprep.subr.mxu0 0.0
      %766 = vmatpush2.msra.mxu0 0.0
      %767 = vmatprep.subr.mxu0 0.0
      %768 = vmatpush2.msra.mxu0 0.0
      %769 = vmatprep.subr.mxu0 0.0
      %770 = vmatpush2.msra.mxu0 0.0
      %771 = vmatprep.subr.mxu0 0.0
      %772 = vmatpush2.msra.mxu0 0.0
      %773 = vmatprep.subr.mxu0 0.0
      %774 = vmatpush2.msra.mxu0 0.0
      %775 = vmatprep.subr.mxu0 0.0
      %776 = vmatpush2.msra.mxu0 0.0
      %777 = vmatprep.subr.mxu0 0.0
      %778 = vmatpush2.msra.mxu0 0.0
      %779 = vmatprep.subr.mxu0 0.0
      %780 = vmatpush2.msra.mxu0 0.0
      %781 = vmatprep.subr.mxu0 0.0
      %782 = vmatpush2.msra.mxu0 0.0
      %783 = vmatprep.subr.mxu0 0.0
      %784 = vmatpush2.msra.mxu0 0.0
      %785 = vmatprep.subr.mxu0 0.0
      %786 = vmatpush2.msra.mxu0 0.0
      %787 = vmatprep.subr.mxu0 0.0
      %788 = vmatpush2.msra.mxu0 0.0
      %789 = vmatprep.subr.mxu0 0.0
      %790 = vmatpush2.msra.mxu0 0.0
      %791 = vmatprep.subr.mxu0 0.0
      %792 = vmatpush2.msra.mxu0 0.0
      %793 = vmatprep.subr.mxu0 0.0
      %794 = vmatpush2.msra.mxu0 0.0
      %795 = vmatprep.subr.mxu0 0.0
      %796 = vmatpush2.msra.mxu0 0.0
      %797 = vmatprep.mubr.f32.mxu0 0.0
      %798 = vmatmul.mubr.f32.gmra.mxu0 %v725
      %v799 = vpop.f32.mrf.mxu0
      %v800 = vadd.f32 0.0, %v799
      %v801 = vpop.f32.mrf.mxu0
      %v802 = vadd.f32 0.0, %v801
      %803 = vdwg.mxu0
      %v804 = vlaneseq
      %v805 = vshrl.u32 %v804, 7
      %v806 = vsub.s32 0, %v805
      %v807 = vrot.slane %v800, %v806
      %v808 = vlaneseq
      %v809 = vshrl.u32 %v808, 7
      %v810 = vsub.s32 0, %v809
      %v811 = vrot.slane %v802, %v810
      %v812 = vsub.f32 %v719, %v807
      %v813 = vsub.f32 %v721, %v811
      %v814 = vmul.f32 %v812, %v812
      %v815 = vmul.f32 %v813, %v813
      %v817 = vsel %vm645, %v814, 0
      %v820 = vsel %vm645, %v815, 0
      %822 = vmatprep.subr.mxu0 0.0
      %823 = vmatpush1.msra.mxu0 0.0
      %824 = vmatprep.subr.mxu0 0.0
      %825 = vmatpush1.msra.mxu0 0.0
      %826 = vmatprep.subr.mxu0 0.0
      %827 = vmatpush1.msra.mxu0 0.0
      %828 = vmatprep.subr.mxu0 0.0
      %829 = vmatpush1.msra.mxu0 0.0
      %830 = vmatprep.subr.mxu0 0.0
      %831 = vmatpush1.msra.mxu0 0.0
      %832 = vmatprep.subr.mxu0 0.0
      %833 = vmatpush1.msra.mxu0 0.0
      %834 = vmatprep.subr.mxu0 0.0
      %835 = vmatpush1.msra.mxu0 0.0
      %836 = vmatprep.subr.mxu0 0.0
      %837 = vmatpush1.msra.mxu0 0.0
      %838 = vmatprep.subr.mxu0 0.0
      %839 = vmatpush1.msra.mxu0 0.0
      %840 = vmatprep.subr.mxu0 0.0
      %841 = vmatpush1.msra.mxu0 0.0
      %842 = vmatprep.subr.mxu0 0.0
      %843 = vmatpush1.msra.mxu0 0.0
      %844 = vmatprep.subr.mxu0 0.0
      %845 = vmatpush1.msra.mxu0 0.0
      %846 = vmatprep.subr.mxu0 0.0
      %847 = vmatpush1.msra.mxu0 0.0
      %848 = vmatprep.subr.mxu0 0.0
      %849 = vmatpush1.msra.mxu0 0.0
      %850 = vmatprep.subr.mxu0 0.0
      %851 = vmatpush1.msra.mxu0 0.0
      %852 = vmatprep.subr.mxu0 %v820
      %853 = vmatpush1.msra.mxu0 %v817
      %854 = vmatprep.subr.mxu0 0.0
      %855 = vmatpush2.msra.mxu0 0.0
      %856 = vmatprep.subr.mxu0 0.0
      %857 = vmatpush2.msra.mxu0 0.0
      %858 = vmatprep.subr.mxu0 0.0
      %859 = vmatpush2.msra.mxu0 0.0
      %860 = vmatprep.subr.mxu0 0.0
      %861 = vmatpush2.msra.mxu0 0.0
      %862 = vmatprep.subr.mxu0 0.0
      %863 = vmatpush2.msra.mxu0 0.0
      %864 = vmatprep.subr.mxu0 0.0
      %865 = vmatpush2.msra.mxu0 0.0
      %866 = vmatprep.subr.mxu0 0.0
      %867 = vmatpush2.msra.mxu0 0.0
      %868 = vmatprep.subr.mxu0 0.0
      %869 = vmatpush2.msra.mxu0 0.0
      %870 = vmatprep.subr.mxu0 0.0
      %871 = vmatpush2.msra.mxu0 0.0
      %872 = vmatprep.subr.mxu0 0.0
      %873 = vmatpush2.msra.mxu0 0.0
      %874 = vmatprep.subr.mxu0 0.0
      %875 = vmatpush2.msra.mxu0 0.0
      %876 = vmatprep.subr.mxu0 0.0
      %877 = vmatpush2.msra.mxu0 0.0
      %878 = vmatprep.subr.mxu0 0.0
      %879 = vmatpush2.msra.mxu0 0.0
      %880 = vmatprep.subr.mxu0 0.0
      %881 = vmatpush2.msra.mxu0 0.0
      %882 = vmatprep.subr.mxu0 0.0
      %883 = vmatpush2.msra.mxu0 0.0
      %884 = vmatprep.subr.mxu0 0.0
      %885 = vmatpush2.msra.mxu0 0.0
      %886 = vmatprep.mubr.f32.mxu0 0.0
      %887 = vmatmul.mubr.f32.gmra.mxu0 %v725
      %v888 = vpop.f32.mrf.mxu0
      %v889 = vadd.f32 1e-06, %v888
      %v890 = vpop.f32.mrf.mxu0
      %v891 = vadd.f32 1e-06, %v890
      %892 = vdwg.mxu0
      %v893 = vrsqrt.pop %v889
      %v894 = vrsqrt.pop %v891
      %v895 = vlaneseq
      %v896 = vshrl.u32 %v895, 7
      %v897 = vsub.s32 0, %v896
      %v898 = vrot.slane %v893, %v897
      %v899 = vlaneseq
      %v900 = vshrl.u32 %v899, 7
      %v901 = vsub.s32 0, %v900
      %v902 = vrot.slane %v894, %v901
      %v903 = vmul.f32 %v812, %v898
      %v904 = vmul.f32 %v813, %v902
      %906 = vset.pattern.permute.xlu0 0
      %907 = vperm.xlu0 %906, %v416
      %v908 = vpop.permute.xlu0 %907
      %v910 = vmul.f32 %v908, %v903
      %v911 = vmul.f32 %v908, %v904
      %913 = vset.pattern.permute.xlu0 0
      %914 = vperm.xlu0 %913, %v417
      %v915 = vpop.permute.xlu0 %914
      %v917 = vadd.f32 %v910, %v915
      %v918 = vadd.f32 %v911, %v915
      %v919 = vmul.f32 %v917, 0.5
      %v920 = vmul.f32 %v918, 0.5
      %v921 = vmul.f32 %v917, 0.70710677
      %v922 = vmul.f32 %v918, 0.70710677
      %v923 = vand.u32 2147483647, %v921
      %v924 = vand.u32 2147483647, %v922
      %v925 = vmul.f32 %v923, 0.3275911
      %v926 = vmul.f32 %v924, 0.3275911
      %v927 = vadd.f32 %v925, 1.0
      %v928 = vadd.f32 %v926, 1.0
      %v929 = vrcp.pop %v927
      %v930 = vmul.f32 1.0, %v929
      %v931 = vrcp.pop %v928
      %v932 = vmul.f32 1.0, %v931
      %v933 = vmul.f32 %v930, 1.0614054
      %v934 = vmul.f32 %v932, 1.0614054
      %v935 = vadd.f32 %v933, -1.4531521
      %v936 = vadd.f32 %v934, -1.4531521
      %v937 = vmul.f32 %v930, %v935
      %v938 = vmul.f32 %v932, %v936
      %v939 = vadd.f32 %v937, 1.4214138
      %v940 = vadd.f32 %v938, 1.4214138
      %v941 = vmul.f32 %v930, %v939
      %v942 = vmul.f32 %v932, %v940
      %v943 = vadd.f32 %v941, -0.28449672
      %v944 = vadd.f32 %v942, -0.28449672
      %v945 = vmul.f32 %v930, %v943
      %v946 = vmul.f32 %v932, %v944
      %v947 = vadd.f32 %v945, 0.2548296
      %v948 = vadd.f32 %v946, 0.2548296
      %v949 = vmul.f32 %v930, %v947
      %v950 = vmul.f32 %v932, %v948
      %v951 = vsub.f32 0.0, %v923
      %v952 = vsub.f32 0.0, %v924
      %v953 = vmul.f32 %v951, %v923
      %v954 = vmul.f32 %v952, %v924
      %v955 = vmul.f32 %v953, 1.442695
      %v956 = vpow.pop %v955
      %v957 = vmul.f32 %v954, 1.442695
      %v958 = vpow.pop %v957
      %v959 = vmul.f32 %v949, %v956
      %v960 = vmul.f32 %v950, %v958
      %v961 = vsub.f32 1.0, %v959
      %v962 = vsub.f32 1.0, %v960
      %vm963 = vcmp.lt.f32.partialorder %v921, 0.0
      %vm964 = vcmp.lt.f32.partialorder %v922, 0.0
      %v965 = vsub.f32 0.0, %v961
      %v966 = vsub.f32 0.0, %v962
      %v967 = vsel %vm963, %v965, %v961
      %v968 = vsel %vm964, %v966, %v962
      %v969 = vadd.f32 %v967, 1.0
      %v970 = vadd.f32 %v968, 1.0
      %v971 = vmul.f32 %v919, %v969
      %v972 = vmul.f32 %v920, %v970
      %v974 = vcombine.high %v404, %v404
      %v976 = vadd.f32 %v971, %v404
      %v977 = vadd.f32 %v972, %v974
      %v978 = vmul.f32 %v976, %v422
      %v979 = vmul.f32 %v977, %v426
      %980 = vrot.lane.b32.xlu0 %v978, 17
      %v981 = vpop.permute.xlu0 %980
      %982 = vrot.lane.b32.xlu0 %v979, 17
      %v983 = vpop.permute.xlu0 %982
      %v984 = vsel %vm441, %v981, %v983
      %v985 = vsel %vm441, %v983, %v981
      %v986 = vmul.f32 %v985, %v447
      %v987 = vmul.f32 %v984, %v451
      %988 = vst [vmem:[#allocation2] sm:$0xf] %v986
      %989 = vst [vmem:[#allocation2 + $0x8] sm:$0xf] %v987
      %990 = vrot.lane.b32.xlu0 %v978, 16
      %v991 = vpop.permute.xlu0 %990
      %992 = vrot.lane.b32.xlu0 %v979, 16
      %v993 = vpop.permute.xlu0 %992
      %v994 = vsel %vm460, %v991, %v993
      %v995 = vsel %vm460, %v993, %v991
      %v996 = vmul.f32 %v995, %v466
      %v997 = vmul.f32 %v994, %v470
      %v1000 = vrot.slane %v996, 4
      %v1001 = vrot.slane %v997, 4
      %1004 = vst [vmem:[#allocation2] sm:$0xf0] %v1000
      %1005 = vst [vmem:[#allocation2 + $0x8] sm:$0xf0] %v1001
      %1006 = vrot.lane.b32.xlu0 %v978, 15
      %v1007 = vpop.permute.xlu0 %1006
      %1008 = vrot.lane.b32.xlu0 %v979, 15
      %v1009 = vpop.permute.xlu0 %1008
      %v1010 = vsel %vm485, %v1007, %v1009
      %v1011 = vsel %vm485, %v1009, %v1007
      %v1012 = vmul.f32 %v1011, %v491
      %v1013 = vmul.f32 %v1010, %v495
      %1014 = vst [vmem:[#allocation2 + $0x10] sm:$0xf] %v1012
      %1015 = vst [vmem:[#allocation2 + $0x18] sm:$0xf] %v1013
      %1016 = vrot.lane.b32.xlu0 %v978, 1
      %v1017 = vpop.permute.xlu0 %1016
      %1018 = vrot.lane.b32.xlu0 %v979, 1
      %v1019 = vpop.permute.xlu0 %1018
      %v1020 = vsel %vm504, %v1017, %v1019
      %v1021 = vsel %vm504, %v1019, %v1017
      %v1022 = vmul.f32 %v1021, %v510
      %v1023 = vmul.f32 %v1020, %v514
      %v1026 = vrot.slane %v1022, 4
      %v1027 = vrot.slane %v1023, 4
      %1030 = vst [vmem:[#allocation2 + $0x10] sm:$0xf0] %v1026
      %1031 = vst [vmem:[#allocation2 + $0x18] sm:$0xf0] %v1027
      %v1032 = vmul.f32 %v978, %v528
      %v1033 = vmul.f32 %v979, %v532
      %1034 = vst [vmem:[#allocation2 + $0x20] sm:$0xf] %v1032
      %1035 = vst [vmem:[#allocation2 + $0x28] sm:$0xf] %v1033
      %1036 = vrot.lane.b32.xlu0 %v978, 127
      %v1037 = vpop.permute.xlu0 %1036
      %1038 = vrot.lane.b32.xlu0 %v979, 127
      %v1039 = vpop.permute.xlu0 %1038
      %v1040 = vsel %vm547, %v1037, %v1039
      %v1041 = vsel %vm547, %v1039, %v1037
      %v1042 = vmul.f32 %v1040, %v553
      %v1043 = vmul.f32 %v1041, %v557
      %v1046 = vrot.slane %v1042, 4
      %v1047 = vrot.slane %v1043, 4
      %1050 = vst [vmem:[#allocation2 + $0x20] sm:$0xf0] %v1046
      %1051 = vst [vmem:[#allocation2 + $0x28] sm:$0xf0] %v1047
      %1052 = vrot.lane.b32.xlu0 %v978, 113
      %v1053 = vpop.permute.xlu0 %1052
      %1054 = vrot.lane.b32.xlu0 %v979, 113
      %v1055 = vpop.permute.xlu0 %1054
      %v1056 = vsel %vm572, %v1053, %v1055
      %v1057 = vsel %vm572, %v1055, %v1053
      %v1058 = vmul.f32 %v1056, %v578
      %v1059 = vmul.f32 %v1057, %v582
      %1060 = vst [vmem:[#allocation2 + $0x30] sm:$0xf] %v1058
      %1061 = vst [vmem:[#allocation2 + $0x38] sm:$0xf] %v1059
      %1062 = vrot.lane.b32.xlu0 %v978, 112
      %v1063 = vpop.permute.xlu0 %1062
      %1064 = vrot.lane.b32.xlu0 %v979, 112
      %v1065 = vpop.permute.xlu0 %1064
      %v1066 = vsel %vm591, %v1063, %v1065
      %v1067 = vsel %vm591, %v1065, %v1063
      %v1068 = vmul.f32 %v1066, %v597
      %v1069 = vmul.f32 %v1067, %v601
      %v1072 = vrot.slane %v1068, 4
      %v1073 = vrot.slane %v1069, 4
      %1076 = vst [vmem:[#allocation2 + $0x30] sm:$0xf0] %v1072
      %1077 = vst [vmem:[#allocation2 + $0x38] sm:$0xf0] %v1073
      %1078 = vrot.lane.b32.xlu0 %v978, 111
      %v1079 = vpop.permute.xlu0 %1078
      %1080 = vrot.lane.b32.xlu0 %v979, 111
      %v1081 = vpop.permute.xlu0 %1080
      %v1082 = vsel %vm616, %v1079, %v1081
      %v1083 = vsel %vm616, %v1081, %v1079
      %v1084 = vmul.f32 %v1082, %v622
      %v1085 = vmul.f32 %v1083, %v626
      %1086 = vst [vmem:[#allocation2 + $0x40] sm:$0xf] %v1084
      %1087 = vst [vmem:[#allocation2 + $0x48] sm:$0xf] %v1085
      %v1088 = vld [vmem:[#allocation2] sm:$0xff]
      %v1089 = vld [vmem:[#allocation2 + $0x8] sm:$0xff]
      %v1090 = vld [vmem:[#allocation2 + $0x10] sm:$0xff]
      %v1091 = vld [vmem:[#allocation2 + $0x18] sm:$0xff]
      %v1092 = vld [vmem:[#allocation2 + $0x20] sm:$0xff]
      %v1093 = vld [vmem:[#allocation2 + $0x28] sm:$0xff]
      %v1094 = vld [vmem:[#allocation2 + $0x30] sm:$0xff]
      %v1095 = vld [vmem:[#allocation2 + $0x38] sm:$0xff]
      %v1096 = vld [vmem:[#allocation2 + $0x40] sm:$0xf]
      %v1097 = vld [vmem:[#allocation2 + $0x48] sm:$0xf]
      %v1099 = vsel %vm645, %v1096, 0
      %v1102 = vsel %vm645, %v1097, 0
      %1104 = vmatprep.subr.mxu0 0.0
      %1105 = vmatpush1.msra.mxu0 0.0
      %1106 = vmatprep.subr.mxu0 0.0
      %1107 = vmatpush1.msra.mxu0 0.0
      %1108 = vmatprep.subr.mxu0 0.0
      %1109 = vmatpush1.msra.mxu0 0.0
      %1110 = vmatprep.subr.mxu0 0.0
      %1111 = vmatpush1.msra.mxu0 0.0
      %1112 = vmatprep.subr.mxu0 0.0
      %1113 = vmatpush1.msra.mxu0 0.0
      %1114 = vmatprep.subr.mxu0 0.0
      %1115 = vmatpush1.msra.mxu0 0.0
      %1116 = vmatprep.subr.mxu0 0.0
      %1117 = vmatpush1.msra.mxu0 0.0
      %1118 = vmatprep.subr.mxu0 0.0
      %1119 = vmatpush1.msra.mxu0 0.0
      %1120 = vmatprep.subr.mxu0 0.0
      %1121 = vmatpush1.msra.mxu0 0.0
      %1122 = vmatprep.subr.mxu0 0.0
      %1123 = vmatpush1.msra.mxu0 0.0
      %1124 = vmatprep.subr.mxu0 0.0
      %1125 = vmatpush1.msra.mxu0 0.0
      %1126 = vmatprep.subr.mxu0 %v1102
      %1127 = vmatpush1.msra.mxu0 %v1099
      %1128 = vmatprep.subr.mxu0 %v1095
      %1129 = vmatpush1.msra.mxu0 %v1094
      %1130 = vmatprep.subr.mxu0 %v1093
      %1131 = vmatpush1.msra.mxu0 %v1092
      %1132 = vmatprep.subr.mxu0 %v1091
      %1133 = vmatpush1.msra.mxu0 %v1090
      %1134 = vmatprep.subr.mxu0 %v1089
      %1135 = vmatpush1.msra.mxu0 %v1088
      %1136 = vmatprep.subr.mxu0 0.0
      %1137 = vmatpush2.msra.mxu0 0.0
      %1138 = vmatprep.subr.mxu0 0.0
      %1139 = vmatpush2.msra.mxu0 0.0
      %1140 = vmatprep.subr.mxu0 0.0
      %1141 = vmatpush2.msra.mxu0 0.0
      %1142 = vmatprep.subr.mxu0 0.0
      %1143 = vmatpush2.msra.mxu0 0.0
      %1144 = vmatprep.subr.mxu0 0.0
      %1145 = vmatpush2.msra.mxu0 0.0
      %1146 = vmatprep.subr.mxu0 0.0
      %1147 = vmatpush2.msra.mxu0 0.0
      %1148 = vmatprep.subr.mxu0 0.0
      %1149 = vmatpush2.msra.mxu0 0.0
      %1150 = vmatprep.subr.mxu0 0.0
      %1151 = vmatpush2.msra.mxu0 0.0
      %1152 = vmatprep.subr.mxu0 0.0
      %1153 = vmatpush2.msra.mxu0 0.0
      %1154 = vmatprep.subr.mxu0 0.0
      %1155 = vmatpush2.msra.mxu0 0.0
      %1156 = vmatprep.subr.mxu0 0.0
      %1157 = vmatpush2.msra.mxu0 0.0
      %1158 = vmatprep.subr.mxu0 0.0
      %1159 = vmatpush2.msra.mxu0 0.0
      %1160 = vmatprep.subr.mxu0 0.0
      %1161 = vmatpush2.msra.mxu0 0.0
      %1162 = vmatprep.subr.mxu0 0.0
      %1163 = vmatpush2.msra.mxu0 0.0
      %1164 = vmatprep.subr.mxu0 0.0
      %1165 = vmatpush2.msra.mxu0 0.0
      %1166 = vmatprep.subr.mxu0 0.0
      %1167 = vmatpush2.msra.mxu0 0.0
      %1168 = vmatprep.mubr.f32.mxu0 0.0
      %1169 = vmatmul.mubr.f32.gmra.mxu0 %v643
      %v1170 = vpop.f32.mrf.mxu0
      %v1171 = vadd.f32 0.0, %v1170
      %v1172 = vpop.f32.mrf.mxu0
      %v1173 = vadd.f32 0.0, %v1172
      %1174 = vdwg.mxu0
      %v1176 = vsel %vm645, %v1171, 0
      %v1179 = vsel %vm645, %v1173, 0
      %1181 = vmatprep.subr.mxu0 0.0
      %1182 = vmatpush1.msra.mxu0 0.0
      %1183 = vmatprep.subr.mxu0 0.0
      %1184 = vmatpush1.msra.mxu0 0.0
      %1185 = vmatprep.subr.mxu0 0.0
      %1186 = vmatpush1.msra.mxu0 0.0
      %1187 = vmatprep.subr.mxu0 0.0
      %1188 = vmatpush1.msra.mxu0 0.0
      %1189 = vmatprep.subr.mxu0 0.0
      %1190 = vmatpush1.msra.mxu0 0.0
      %1191 = vmatprep.subr.mxu0 0.0
      %1192 = vmatpush1.msra.mxu0 0.0
      %1193 = vmatprep.subr.mxu0 0.0
      %1194 = vmatpush1.msra.mxu0 0.0
      %1195 = vmatprep.subr.mxu0 0.0
      %1196 = vmatpush1.msra.mxu0 0.0
      %1197 = vmatprep.subr.mxu0 0.0
      %1198 = vmatpush1.msra.mxu0 0.0
      %1199 = vmatprep.subr.mxu0 0.0
      %1200 = vmatpush1.msra.mxu0 0.0
      %1201 = vmatprep.subr.mxu0 0.0
      %1202 = vmatpush1.msra.mxu0 0.0
      %1203 = vmatprep.subr.mxu0 0.0
      %1204 = vmatpush1.msra.mxu0 0.0
      %1205 = vmatprep.subr.mxu0 0.0
      %1206 = vmatpush1.msra.mxu0 0.0
      %1207 = vmatprep.subr.mxu0 0.0
      %1208 = vmatpush1.msra.mxu0 0.0
      %1209 = vmatprep.subr.mxu0 0.0
      %1210 = vmatpush1.msra.mxu0 0.0
      %1211 = vmatprep.subr.mxu0 %v1179
      %1212 = vmatpush1.msra.mxu0 %v1176
      %1213 = vmatprep.subr.mxu0 0.0
      %1214 = vmatpush2.msra.mxu0 0.0
      %1215 = vmatprep.subr.mxu0 0.0
      %1216 = vmatpush2.msra.mxu0 0.0
      %1217 = vmatprep.subr.mxu0 0.0
      %1218 = vmatpush2.msra.mxu0 0.0
      %1219 = vmatprep.subr.mxu0 0.0
      %1220 = vmatpush2.msra.mxu0 0.0
      %1221 = vmatprep.subr.mxu0 0.0
      %1222 = vmatpush2.msra.mxu0 0.0
      %1223 = vmatprep.subr.mxu0 0.0
      %1224 = vmatpush2.msra.mxu0 0.0
      %1225 = vmatprep.subr.mxu0 0.0
      %1226 = vmatpush2.msra.mxu0 0.0
      %1227 = vmatprep.subr.mxu0 0.0
      %1228 = vmatpush2.msra.mxu0 0.0
      %1229 = vmatprep.subr.mxu0 0.0
      %1230 = vmatpush2.msra.mxu0 0.0
      %1231 = vmatprep.subr.mxu0 0.0
      %1232 = vmatpush2.msra.mxu0 0.0
      %1233 = vmatprep.subr.mxu0 0.0
      %1234 = vmatpush2.msra.mxu0 0.0
      %1235 = vmatprep.subr.mxu0 0.0
      %1236 = vmatpush2.msra.mxu0 0.0
      %1237 = vmatprep.subr.mxu0 0.0
      %1238 = vmatpush2.msra.mxu0 0.0
      %1239 = vmatprep.subr.mxu0 0.0
      %1240 = vmatpush2.msra.mxu0 0.0
      %1241 = vmatprep.subr.mxu0 0.0
      %1242 = vmatpush2.msra.mxu0 0.0
      %1243 = vmatprep.subr.mxu0 0.0
      %1244 = vmatpush2.msra.mxu0 0.0
      %1245 = vmatprep.mubr.f32.mxu0 0.0
      %1246 = vmatmul.mubr.f32.gmra.mxu0 %v725
      %v1247 = vpop.f32.mrf.mxu0
      %v1248 = vadd.f32 0.0, %v1247
      %v1249 = vpop.f32.mrf.mxu0
      %v1250 = vadd.f32 0.0, %v1249
      %1251 = vdwg.mxu0
      %v1252 = vlaneseq
      %v1253 = vshrl.u32 %v1252, 7
      %v1254 = vsub.s32 0, %v1253
      %v1255 = vrot.slane %v1248, %v1254
      %v1256 = vlaneseq
      %v1257 = vshrl.u32 %v1256, 7
      %v1258 = vsub.s32 0, %v1257
      %v1259 = vrot.slane %v1250, %v1258
      %v1260 = vsub.f32 %v1171, %v1255
      %v1261 = vsub.f32 %v1173, %v1259
      %v1262 = vmul.f32 %v1260, %v1260
      %v1263 = vmul.f32 %v1261, %v1261
      %v1265 = vsel %vm645, %v1262, 0
      %v1268 = vsel %vm645, %v1263, 0
      %1270 = vmatprep.subr.mxu0 0.0
      %1271 = vmatpush1.msra.mxu0 0.0
      %1272 = vmatprep.subr.mxu0 0.0
      %1273 = vmatpush1.msra.mxu0 0.0
      %1274 = vmatprep.subr.mxu0 0.0
      %1275 = vmatpush1.msra.mxu0 0.0
      %1276 = vmatprep.subr.mxu0 0.0
      %1277 = vmatpush1.msra.mxu0 0.0
      %1278 = vmatprep.subr.mxu0 0.0
      %1279 = vmatpush1.msra.mxu0 0.0
      %1280 = vmatprep.subr.mxu0 0.0
      %1281 = vmatpush1.msra.mxu0 0.0
      %1282 = vmatprep.subr.mxu0 0.0
      %1283 = vmatpush1.msra.mxu0 0.0
      %1284 = vmatprep.subr.mxu0 0.0
      %1285 = vmatpush1.msra.mxu0 0.0
      %1286 = vmatprep.subr.mxu0 0.0
      %1287 = vmatpush1.msra.mxu0 0.0
      %1288 = vmatprep.subr.mxu0 0.0
      %1289 = vmatpush1.msra.mxu0 0.0
      %1290 = vmatprep.subr.mxu0 0.0
      %1291 = vmatpush1.msra.mxu0 0.0
      %1292 = vmatprep.subr.mxu0 0.0
      %1293 = vmatpush1.msra.mxu0 0.0
      %1294 = vmatprep.subr.mxu0 0.0
      %1295 = vmatpush1.msra.mxu0 0.0
      %1296 = vmatprep.subr.mxu0 0.0
      %1297 = vmatpush1.msra.mxu0 0.0
      %1298 = vmatprep.subr.mxu0 0.0
      %1299 = vmatpush1.msra.mxu0 0.0
      %1300 = vmatprep.subr.mxu0 %v1268
      %1301 = vmatpush1.msra.mxu0 %v1265
      %1302 = vmatprep.subr.mxu0 0.0
      %1303 = vmatpush2.msra.mxu0 0.0
      %1304 = vmatprep.subr.mxu0 0.0
      %1305 = vmatpush2.msra.mxu0 0.0
      %1306 = vmatprep.subr.mxu0 0.0
      %1307 = vmatpush2.msra.mxu0 0.0
      %1308 = vmatprep.subr.mxu0 0.0
      %1309 = vmatpush2.msra.mxu0 0.0
      %1310 = vmatprep.subr.mxu0 0.0
      %1311 = vmatpush2.msra.mxu0 0.0
      %1312 = vmatprep.subr.mxu0 0.0
      %1313 = vmatpush2.msra.mxu0 0.0
      %1314 = vmatprep.subr.mxu0 0.0
      %1315 = vmatpush2.msra.mxu0 0.0
      %1316 = vmatprep.subr.mxu0 0.0
      %1317 = vmatpush2.msra.mxu0 0.0
      %1318 = vmatprep.subr.mxu0 0.0
      %1319 = vmatpush2.msra.mxu0 0.0
      %1320 = vmatprep.subr.mxu0 0.0
      %1321 = vmatpush2.msra.mxu0 0.0
      %1322 = vmatprep.subr.mxu0 0.0
      %1323 = vmatpush2.msra.mxu0 0.0
      %1324 = vmatprep.subr.mxu0 0.0
      %1325 = vmatpush2.msra.mxu0 0.0
      %1326 = vmatprep.subr.mxu0 0.0
      %1327 = vmatpush2.msra.mxu0 0.0
      %1328 = vmatprep.subr.mxu0 0.0
      %1329 = vmatpush2.msra.mxu0 0.0
      %1330 = vmatprep.subr.mxu0 0.0
      %1331 = vmatpush2.msra.mxu0 0.0
      %1332 = vmatprep.subr.mxu0 0.0
      %1333 = vmatpush2.msra.mxu0 0.0
      %1334 = vmatprep.mubr.f32.mxu0 0.0
      %1335 = vmatmul.mubr.f32.gmra.mxu0 %v725
      %v1336 = vpop.f32.mrf.mxu0
      %v1337 = vadd.f32 1e-06, %v1336
      %v1338 = vpop.f32.mrf.mxu0
      %v1339 = vadd.f32 1e-06, %v1338
      %1340 = vdwg.mxu0
      %v1341 = vrsqrt.pop %v1337
      %v1342 = vrsqrt.pop %v1339
      %v1343 = vlaneseq
      %v1344 = vshrl.u32 %v1343, 7
      %v1345 = vsub.s32 0, %v1344
      %v1346 = vrot.slane %v1341, %v1345
      %v1347 = vlaneseq
      %v1348 = vshrl.u32 %v1347, 7
      %v1349 = vsub.s32 0, %v1348
      %v1350 = vrot.slane %v1342, %v1349
      %v1351 = vmul.f32 %v1260, %v1346
      %v1352 = vmul.f32 %v1261, %v1350
      %1353 = vset.pattern.permute.xlu0 1
      %1354 = vperm.xlu0 %1353, %v416
      %v1355 = vpop.permute.xlu0 %1354
      %v1357 = vmul.f32 %v1355, %v1351
      %v1358 = vmul.f32 %v1355, %v1352
      %1359 = vset.pattern.permute.xlu0 1
      %1360 = vperm.xlu0 %1359, %v417
      %v1361 = vpop.permute.xlu0 %1360
      %v1363 = vadd.f32 %v1357, %v1361
      %v1364 = vadd.f32 %v1358, %v1361
      %v1365 = vmul.f32 %v1363, 0.5
      %v1366 = vmul.f32 %v1364, 0.5
      %v1367 = vmul.f32 %v1363, 0.70710677
      %v1368 = vmul.f32 %v1364, 0.70710677
      %v1369 = vand.u32 2147483647, %v1367
      %v1370 = vand.u32 2147483647, %v1368
      %v1371 = vmul.f32 %v1369, 0.3275911
      %v1372 = vmul.f32 %v1370, 0.3275911
      %v1373 = vadd.f32 %v1371, 1.0
      %v1374 = vadd.f32 %v1372, 1.0
      %v1375 = vrcp.pop %v1373
      %v1376 = vmul.f32 1.0, %v1375
      %v1377 = vrcp.pop %v1374
      %v1378 = vmul.f32 1.0, %v1377
      %v1379 = vmul.f32 %v1376, 1.0614054
      %v1380 = vmul.f32 %v1378, 1.0614054
      %v1381 = vadd.f32 %v1379, -1.4531521
      %v1382 = vadd.f32 %v1380, -1.4531521
      %v1383 = vmul.f32 %v1376, %v1381
      %v1384 = vmul.f32 %v1378, %v1382
      %v1385 = vadd.f32 %v1383, 1.4214138
      %v1386 = vadd.f32 %v1384, 1.4214138
      %v1387 = vmul.f32 %v1376, %v1385
      %v1388 = vmul.f32 %v1378, %v1386
      %v1389 = vadd.f32 %v1387, -0.28449672
      %v1390 = vadd.f32 %v1388, -0.28449672
      %v1391 = vmul.f32 %v1376, %v1389
      %v1392 = vmul.f32 %v1378, %v1390
      %v1393 = vadd.f32 %v1391, 0.2548296
      %v1394 = vadd.f32 %v1392, 0.2548296
      %v1395 = vmul.f32 %v1376, %v1393
      %v1396 = vmul.f32 %v1378, %v1394
      %v1397 = vsub.f32 0.0, %v1369
      %v1398 = vsub.f32 0.0, %v1370
      %v1399 = vmul.f32 %v1397, %v1369
      %v1400 = vmul.f32 %v1398, %v1370
      %v1401 = vmul.f32 %v1399, 1.442695
      %v1402 = vpow.pop %v1401
      %v1403 = vmul.f32 %v1400, 1.442695
      %v1404 = vpow.pop %v1403
      %v1405 = vmul.f32 %v1395, %v1402
      %v1406 = vmul.f32 %v1396, %v1404
      %v1407 = vsub.f32 1.0, %v1405
      %v1408 = vsub.f32 1.0, %v1406
      %vm1409 = vcmp.lt.f32.partialorder %v1367, 0.0
      %vm1410 = vcmp.lt.f32.partialorder %v1368, 0.0
      %v1411 = vsub.f32 0.0, %v1407
      %v1412 = vsub.f32 0.0, %v1408
      %v1413 = vsel %vm1409, %v1411, %v1407
      %v1414 = vsel %vm1410, %v1412, %v1408
      %v1415 = vadd.f32 %v1413, 1.0
      %v1416 = vadd.f32 %v1414, 1.0
      %v1417 = vmul.f32 %v1365, %v1415
      %v1418 = vmul.f32 %v1366, %v1416
      %v1419 = vadd.f32 %v1417, %v976
      %v1420 = vadd.f32 %v1418, %v977
      %v1421 = vmul.f32 %v1419, %v422
      %v1422 = vmul.f32 %v1420, %v426
      %v1424 = vsel %vm723, %v413, 0
      %v1427 = vsel %vm645, %v1421, 0
      %v1430 = vsel %vm645, %v1422, 0
      %1432 = vmatprep.subr.mxu0 0.0
      %1433 = vmatpush1.msra.mxu0 0.0
      %1434 = vmatprep.subr.mxu0 0.0
      %1435 = vmatpush1.msra.mxu0 0.0
      %1436 = vmatprep.subr.mxu0 0.0
      %1437 = vmatpush1.msra.mxu0 0.0
      %1438 = vmatprep.subr.mxu0 0.0
      %1439 = vmatpush1.msra.mxu0 0.0
      %1440 = vmatprep.subr.mxu0 0.0
      %1441 = vmatpush1.msra.mxu0 0.0
      %1442 = vmatprep.subr.mxu0 0.0
      %1443 = vmatpush1.msra.mxu0 0.0
      %1444 = vmatprep.subr.mxu0 0.0
      %1445 = vmatpush1.msra.mxu0 0.0
      %1446 = vmatprep.subr.mxu0 0.0
      %1447 = vmatpush1.msra.mxu0 0.0
      %1448 = vmatprep.subr.mxu0 0.0
      %1449 = vmatpush1.msra.mxu0 0.0
      %1450 = vmatprep.subr.mxu0 0.0
      %1451 = vmatpush1.msra.mxu0 0.0
      %1452 = vmatprep.subr.mxu0 0.0
      %1453 = vmatpush1.msra.mxu0 0.0
      %1454 = vmatprep.subr.mxu0 0.0
      %1455 = vmatpush1.msra.mxu0 0.0
      %1456 = vmatprep.subr.mxu0 0.0
      %1457 = vmatpush1.msra.mxu0 0.0
      %1458 = vmatprep.subr.mxu0 0.0
      %1459 = vmatpush1.msra.mxu0 0.0
      %1460 = vmatprep.subr.mxu0 0.0
      %1461 = vmatpush1.msra.mxu0 0.0
      %1462 = vmatprep.subr.mxu0 %v1430
      %1463 = vmatpush1.msra.mxu0 %v1427
      %1464 = vmatprep.subr.mxu0 0.0
      %1465 = vmatpush2.msra.mxu0 0.0
      %1466 = vmatprep.subr.mxu0 0.0
      %1467 = vmatpush2.msra.mxu0 0.0
      %1468 = vmatprep.subr.mxu0 0.0
      %1469 = vmatpush2.msra.mxu0 0.0
      %1470 = vmatprep.subr.mxu0 0.0
      %1471 = vmatpush2.msra.mxu0 0.0
      %1472 = vmatprep.subr.mxu0 0.0
      %1473 = vmatpush2.msra.mxu0 0.0
      %1474 = vmatprep.subr.mxu0 0.0
      %1475 = vmatpush2.msra.mxu0 0.0
      %1476 = vmatprep.subr.mxu0 0.0
      %1477 = vmatpush2.msra.mxu0 0.0
      %1478 = vmatprep.subr.mxu0 0.0
      %1479 = vmatpush2.msra.mxu0 0.0
      %1480 = vmatprep.subr.mxu0 0.0
      %1481 = vmatpush2.msra.mxu0 0.0
      %1482 = vmatprep.subr.mxu0 0.0
      %1483 = vmatpush2.msra.mxu0 0.0
      %1484 = vmatprep.subr.mxu0 0.0
      %1485 = vmatpush2.msra.mxu0 0.0
      %1486 = vmatprep.subr.mxu0 0.0
      %1487 = vmatpush2.msra.mxu0 0.0
      %1488 = vmatprep.subr.mxu0 0.0
      %1489 = vmatpush2.msra.mxu0 0.0
      %1490 = vmatprep.subr.mxu0 0.0
      %1491 = vmatpush2.msra.mxu0 0.0
      %1492 = vmatprep.subr.mxu0 0.0
      %1493 = vmatpush2.msra.mxu0 0.0
      %1494 = vmatprep.subr.mxu0 0.0
      %1495 = vmatpush2.msra.mxu0 0.0
      %1496 = vmatprep.mubr.f32.mxu0 0.0
      %1497 = vmatmul.mubr.f32.gmra.mxu0 %v1424
      %v1498 = vpop.f32.mrf.mxu0
      %v1499 = vadd.f32 %v1419, %v1498
      %v1500 = vpop.f32.mrf.mxu0
      %v1501 = vadd.f32 %v1420, %v1500
      %1502 = vdwg.mxu0
      %v1504 = vsel %vm645, %v1499, 0
      %v1507 = vsel %vm645, %v1501, 0
      %1509 = vmatprep.subr.mxu0 0.0
      %1510 = vmatpush1.msra.mxu0 0.0
      %1511 = vmatprep.subr.mxu0 0.0
      %1512 = vmatpush1.msra.mxu0 0.0
      %1513 = vmatprep.subr.mxu0 0.0
      %1514 = vmatpush1.msra.mxu0 0.0
      %1515 = vmatprep.subr.mxu0 0.0
      %1516 = vmatpush1.msra.mxu0 0.0
      %1517 = vmatprep.subr.mxu0 0.0
      %1518 = vmatpush1.msra.mxu0 0.0
      %1519 = vmatprep.subr.mxu0 0.0
      %1520 = vmatpush1.msra.mxu0 0.0
      %1521 = vmatprep.subr.mxu0 0.0
      %1522 = vmatpush1.msra.mxu0 0.0
      %1523 = vmatprep.subr.mxu0 0.0
      %1524 = vmatpush1.msra.mxu0 0.0
      %1525 = vmatprep.subr.mxu0 0.0
      %1526 = vmatpush1.msra.mxu0 0.0
      %1527 = vmatprep.subr.mxu0 0.0
      %1528 = vmatpush1.msra.mxu0 0.0
      %1529 = vmatprep.subr.mxu0 0.0
      %1530 = vmatpush1.msra.mxu0 0.0
      %1531 = vmatprep.subr.mxu0 0.0
      %1532 = vmatpush1.msra.mxu0 0.0
      %1533 = vmatprep.subr.mxu0 0.0
      %1534 = vmatpush1.msra.mxu0 0.0
      %1535 = vmatprep.subr.mxu0 0.0
      %1536 = vmatpush1.msra.mxu0 0.0
      %1537 = vmatprep.subr.mxu0 0.0
      %1538 = vmatpush1.msra.mxu0 0.0
      %1539 = vmatprep.subr.mxu0 %v1507
      %1540 = vmatpush1.msra.mxu0 %v1504
      %1541 = vmatprep.subr.mxu0 0.0
      %1542 = vmatpush2.msra.mxu0 0.0
      %1543 = vmatprep.subr.mxu0 0.0
      %1544 = vmatpush2.msra.mxu0 0.0
      %1545 = vmatprep.subr.mxu0 0.0
      %1546 = vmatpush2.msra.mxu0 0.0
      %1547 = vmatprep.subr.mxu0 0.0
      %1548 = vmatpush2.msra.mxu0 0.0
      %1549 = vmatprep.subr.mxu0 0.0
      %1550 = vmatpush2.msra.mxu0 0.0
      %1551 = vmatprep.subr.mxu0 0.0
      %1552 = vmatpush2.msra.mxu0 0.0
      %1553 = vmatprep.subr.mxu0 0.0
      %1554 = vmatpush2.msra.mxu0 0.0
      %1555 = vmatprep.subr.mxu0 0.0
      %1556 = vmatpush2.msra.mxu0 0.0
      %1557 = vmatprep.subr.mxu0 0.0
      %1558 = vmatpush2.msra.mxu0 0.0
      %1559 = vmatprep.subr.mxu0 0.0
      %1560 = vmatpush2.msra.mxu0 0.0
      %1561 = vmatprep.subr.mxu0 0.0
      %1562 = vmatpush2.msra.mxu0 0.0
      %1563 = vmatprep.subr.mxu0 0.0
      %1564 = vmatpush2.msra.mxu0 0.0
      %1565 = vmatprep.subr.mxu0 0.0
      %1566 = vmatpush2.msra.mxu0 0.0
      %1567 = vmatprep.subr.mxu0 0.0
      %1568 = vmatpush2.msra.mxu0 0.0
      %1569 = vmatprep.subr.mxu0 0.0
      %1570 = vmatpush2.msra.mxu0 0.0
      %1571 = vmatprep.subr.mxu0 0.0
      %1572 = vmatpush2.msra.mxu0 0.0
      %1573 = vmatprep.mubr.f32.mxu0 0.0
      %1574 = vmatmul.mubr.f32.gmra.mxu0 %v725
      %v1575 = vpop.f32.mrf.mxu0
      %v1576 = vadd.f32 0.0, %v1575
      %v1577 = vpop.f32.mrf.mxu0
      %v1578 = vadd.f32 0.0, %v1577
      %1579 = vdwg.mxu0
      %v1580 = vlaneseq
      %v1581 = vshrl.u32 %v1580, 7
      %v1582 = vsub.s32 0, %v1581
      %v1583 = vrot.slane %v1576, %v1582
      %v1584 = vlaneseq
      %v1585 = vshrl.u32 %v1584, 7
      %v1586 = vsub.s32 0, %v1585
      %v1587 = vrot.slane %v1578, %v1586
      %v1588 = vsub.f32 %v1499, %v1583
      %v1589 = vsub.f32 %v1501, %v1587
      %v1590 = vmul.f32 %v1588, %v1588
      %v1591 = vmul.f32 %v1589, %v1589
      %v1593 = vsel %vm645, %v1590, 0
      %v1596 = vsel %vm645, %v1591, 0
      %1598 = vmatprep.subr.mxu0 0.0
      %1599 = vmatpush1.msra.mxu0 0.0
      %1600 = vmatprep.subr.mxu0 0.0
      %1601 = vmatpush1.msra.mxu0 0.0
      %1602 = vmatprep.subr.mxu0 0.0
      %1603 = vmatpush1.msra.mxu0 0.0
      %1604 = vmatprep.subr.mxu0 0.0
      %1605 = vmatpush1.msra.mxu0 0.0
      %1606 = vmatprep.subr.mxu0 0.0
      %1607 = vmatpush1.msra.mxu0 0.0
      %1608 = vmatprep.subr.mxu0 0.0
      %1609 = vmatpush1.msra.mxu0 0.0
      %1610 = vmatprep.subr.mxu0 0.0
      %1611 = vmatpush1.msra.mxu0 0.0
      %1612 = vmatprep.subr.mxu0 0.0
      %1613 = vmatpush1.msra.mxu0 0.0
      %1614 = vmatprep.subr.mxu0 0.0
      %1615 = vmatpush1.msra.mxu0 0.0
      %1616 = vmatprep.subr.mxu0 0.0
      %1617 = vmatpush1.msra.mxu0 0.0
      %1618 = vmatprep.subr.mxu0 0.0
      %1619 = vmatpush1.msra.mxu0 0.0
      %1620 = vmatprep.subr.mxu0 0.0
      %1621 = vmatpush1.msra.mxu0 0.0
      %1622 = vmatprep.subr.mxu0 0.0
      %1623 = vmatpush1.msra.mxu0 0.0
      %1624 = vmatprep.subr.mxu0 0.0
      %1625 = vmatpush1.msra.mxu0 0.0
      %1626 = vmatprep.subr.mxu0 0.0
      %1627 = vmatpush1.msra.mxu0 0.0
      %1628 = vmatprep.subr.mxu0 %v1596
      %1629 = vmatpush1.msra.mxu0 %v1593
      %1630 = vmatprep.subr.mxu0 0.0
      %1631 = vmatpush2.msra.mxu0 0.0
      %1632 = vmatprep.subr.mxu0 0.0
      %1633 = vmatpush2.msra.mxu0 0.0
      %1634 = vmatprep.subr.mxu0 0.0
      %1635 = vmatpush2.msra.mxu0 0.0
      %1636 = vmatprep.subr.mxu0 0.0
      %1637 = vmatpush2.msra.mxu0 0.0
      %1638 = vmatprep.subr.mxu0 0.0
      %1639 = vmatpush2.msra.mxu0 0.0
      %1640 = vmatprep.subr.mxu0 0.0
      %1641 = vmatpush2.msra.mxu0 0.0
      %1642 = vmatprep.subr.mxu0 0.0
      %1643 = vmatpush2.msra.mxu0 0.0
      %1644 = vmatprep.subr.mxu0 0.0
      %1645 = vmatpush2.msra.mxu0 0.0
      %1646 = vmatprep.subr.mxu0 0.0
      %1647 = vmatpush2.msra.mxu0 0.0
      %1648 = vmatprep.subr.mxu0 0.0
      %1649 = vmatpush2.msra.mxu0 0.0
      %1650 = vmatprep.subr.mxu0 0.0
      %1651 = vmatpush2.msra.mxu0 0.0
      %1652 = vmatprep.subr.mxu0 0.0
      %1653 = vmatpush2.msra.mxu0 0.0
      %1654 = vmatprep.subr.mxu0 0.0
      %1655 = vmatpush2.msra.mxu0 0.0
      %1656 = vmatprep.subr.mxu0 0.0
      %1657 = vmatpush2.msra.mxu0 0.0
      %1658 = vmatprep.subr.mxu0 0.0
      %1659 = vmatpush2.msra.mxu0 0.0
      %1660 = vmatprep.subr.mxu0 0.0
      %1661 = vmatpush2.msra.mxu0 0.0
      %1662 = vmatprep.mubr.f32.mxu0 0.0
      %1663 = vmatmul.mubr.f32.gmra.mxu0 %v725
      %v1664 = vpop.f32.mrf.mxu0
      %v1665 = vadd.f32 1e-06, %v1664
      %v1666 = vpop.f32.mrf.mxu0
      %v1667 = vadd.f32 1e-06, %v1666
      %1668 = vdwg.mxu0
      %v1669 = vrsqrt.pop %v1665
      %v1670 = vrsqrt.pop %v1667
      %v1671 = vlaneseq
      %v1672 = vshrl.u32 %v1671, 7
      %v1673 = vsub.s32 0, %v1672
      %v1674 = vrot.slane %v1669, %v1673
      %v1675 = vlaneseq
      %v1676 = vshrl.u32 %v1675, 7
      %v1677 = vsub.s32 0, %v1676
      %v1678 = vrot.slane %v1670, %v1677
      %v1679 = vmul.f32 %v1588, %v1674
      %v1680 = vmul.f32 %v1589, %v1678
      %1681 = vset.pattern.permute.xlu0 2
      %1682 = vperm.xlu0 %1681, %v416
      %v1683 = vpop.permute.xlu0 %1682
      %v1685 = vmul.f32 %v1683, %v1679
      %v1686 = vmul.f32 %v1683, %v1680
      %1687 = vset.pattern.permute.xlu0 2
      %1688 = vperm.xlu0 %1687, %v417
      %v1689 = vpop.permute.xlu0 %1688
      %v1691 = vadd.f32 %v1685, %v1689
      %v1692 = vadd.f32 %v1686, %v1689
      %v1693 = vmul.f32 %v1691, 0.5
      %v1694 = vmul.f32 %v1692, 0.5
      %v1695 = vmul.f32 %v1691, 0.70710677
      %v1696 = vmul.f32 %v1692, 0.70710677
      %v1697 = vand.u32 2147483647, %v1695
      %v1698 = vand.u32 2147483647, %v1696
      %v1699 = vmul.f32 %v1697, 0.3275911
      %v1700 = vmul.f32 %v1698, 0.3275911
      %v1701 = vadd.f32 %v1699, 1.0
      %v1702 = vadd.f32 %v1700, 1.0
      %v1703 = vrcp.pop %v1701
      %v1704 = vmul.f32 1.0, %v1703
      %v1705 = vrcp.pop %v1702
      %v1706 = vmul.f32 1.0, %v1705
      %v1707 = vmul.f32 %v1704, 1.0614054
      %v1708 = vmul.f32 %v1706, 1.0614054
      %v1709 = vadd.f32 %v1707, -1.4531521
      %v1710 = vadd.f32 %v1708, -1.4531521
      %v1711 = vmul.f32 %v1704, %v1709
      %v1712 = vmul.f32 %v1706, %v1710
      %v1713 = vadd.f32 %v1711, 1.4214138
      %v1714 = vadd.f32 %v1712, 1.4214138
      %v1715 = vmul.f32 %v1704, %v1713
      %v1716 = vmul.f32 %v1706, %v1714
      %v1717 = vadd.f32 %v1715, -0.28449672
      %v1718 = vadd.f32 %v1716, -0.28449672
      %v1719 = vmul.f32 %v1704, %v1717
      %v1720 = vmul.f32 %v1706, %v1718
      %v1721 = vadd.f32 %v1719, 0.2548296
      %v1722 = vadd.f32 %v1720, 0.2548296
      %v1723 = vmul.f32 %v1704, %v1721
      %v1724 = vmul.f32 %v1706, %v1722
      %v1725 = vsub.f32 0.0, %v1697
      %v1726 = vsub.f32 0.0, %v1698
      %v1727 = vmul.f32 %v1725, %v1697
      %v1728 = vmul.f32 %v1726, %v1698
      %v1729 = vmul.f32 %v1727, 1.442695
      %v1730 = vpow.pop %v1729
      %v1731 = vmul.f32 %v1728, 1.442695
      %v1732 = vpow.pop %v1731
      %v1733 = vmul.f32 %v1723, %v1730
      %v1734 = vmul.f32 %v1724, %v1732
      %v1735 = vsub.f32 1.0, %v1733
      %v1736 = vsub.f32 1.0, %v1734
      %vm1737 = vcmp.lt.f32.partialorder %v1695, 0.0
      %vm1738 = vcmp.lt.f32.partialorder %v1696, 0.0
      %v1739 = vsub.f32 0.0, %v1735
      %v1740 = vsub.f32 0.0, %v1736
      %v1741 = vsel %vm1737, %v1739, %v1735
      %v1742 = vsel %vm1738, %v1740, %v1736
      %v1743 = vadd.f32 %v1741, 1.0
      %v1744 = vadd.f32 %v1742, 1.0
      %v1745 = vmul.f32 %v1693, %v1743
      %v1746 = vmul.f32 %v1694, %v1744
      %1747 = vrot.lane.b32.xlu0 %v404, 17
      %v1748 = vpop.permute.xlu0 %1747
      %1749 = vrot.lane.b32.xlu0 %v974, 17
      %v1750 = vpop.permute.xlu0 %1749
      %v1751 = vsel %vm441, %v1748, %v1750
      %v1752 = vsel %vm441, %v1750, %v1748
      %v1753 = vmul.f32 %v1752, %v447
      %v1754 = vmul.f32 %v1751, %v451
      %1755 = vst [vmem:[#allocation2] sm:$0xf] %v1753
      %1756 = vst [vmem:[#allocation2 + $0x8] sm:$0xf] %v1754
      %1757 = vrot.lane.b32.xlu0 %v404, 16
      %v1758 = vpop.permute.xlu0 %1757
      %1759 = vrot.lane.b32.xlu0 %v974, 16
      %v1760 = vpop.permute.xlu0 %1759
      %v1761 = vsel %vm460, %v1758, %v1760
      %v1762 = vsel %vm460, %v1760, %v1758
      %v1763 = vmul.f32 %v1762, %v466
      %v1764 = vmul.f32 %v1761, %v470
      %v1767 = vrot.slane %v1763, 4
      %v1768 = vrot.slane %v1764, 4
      %1771 = vst [vmem:[#allocation2] sm:$0xf0] %v1767
      %1772 = vst [vmem:[#allocation2 + $0x8] sm:$0xf0] %v1768
      %1773 = vrot.lane.b32.xlu0 %v404, 15
      %v1774 = vpop.permute.xlu0 %1773
      %1775 = vrot.lane.b32.xlu0 %v974, 15
      %v1776 = vpop.permute.xlu0 %1775
      %v1777 = vsel %vm485, %v1774, %v1776
      %v1778 = vsel %vm485, %v1776, %v1774
      %v1779 = vmul.f32 %v1778, %v491
      %v1780 = vmul.f32 %v1777, %v495
      %1781 = vst [vmem:[#allocation2 + $0x10] sm:$0xf] %v1779
      %1782 = vst [vmem:[#allocation2 + $0x18] sm:$0xf] %v1780
      %1783 = vrot.lane.b32.xlu0 %v404, 1
      %v1784 = vpop.permute.xlu0 %1783
      %1785 = vrot.lane.b32.xlu0 %v974, 1
      %v1786 = vpop.permute.xlu0 %1785
      %v1787 = vsel %vm504, %v1784, %v1786
      %v1788 = vsel %vm504, %v1786, %v1784
      %v1789 = vmul.f32 %v1788, %v510
      %v1790 = vmul.f32 %v1787, %v514
      %v1793 = vrot.slane %v1789, 4
      %v1794 = vrot.slane %v1790, 4
      %1797 = vst [vmem:[#allocation2 + $0x10] sm:$0xf0] %v1793
      %1798 = vst [vmem:[#allocation2 + $0x18] sm:$0xf0] %v1794
      %v1799 = vmul.f32 %v404, %v535
      %v1801 = vcombine.high %v1799, %v1799
      %1803 = vst [vmem:[#allocation2 + $0x20] sm:$0xf] %v1799
      %1804 = vst [vmem:[#allocation2 + $0x28] sm:$0xf] %v1801
      %1805 = vrot.lane.b32.xlu0 %v404, 127
      %v1806 = vpop.permute.xlu0 %1805
      %1807 = vrot.lane.b32.xlu0 %v974, 127
      %v1808 = vpop.permute.xlu0 %1807
      %v1809 = vsel %vm547, %v1806, %v1808
      %v1810 = vsel %vm547, %v1808, %v1806
      %v1811 = vmul.f32 %v1809, %v553
      %v1812 = vmul.f32 %v1810, %v557
      %v1815 = vrot.slane %v1811, 4
      %v1816 = vrot.slane %v1812, 4
      %1819 = vst [vmem:[#allocation2 + $0x20] sm:$0xf0] %v1815
      %1820 = vst [vmem:[#allocation2 + $0x28] sm:$0xf0] %v1816
      %1821 = vrot.lane.b32.xlu0 %v404, 113
      %v1822 = vpop.permute.xlu0 %1821
      %1823 = vrot.lane.b32.xlu0 %v974, 113
      %v1824 = vpop.permute.xlu0 %1823
      %v1825 = vsel %vm572, %v1822, %v1824
      %v1826 = vsel %vm572, %v1824, %v1822
      %v1827 = vmul.f32 %v1825, %v578
      %v1828 = vmul.f32 %v1826, %v582
      %1829 = vst [vmem:[#allocation2 + $0x30] sm:$0xf] %v1827
      %1830 = vst [vmem:[#allocation2 + $0x38] sm:$0xf] %v1828
      %1831 = vrot.lane.b32.xlu0 %v404, 112
      %v1832 = vpop.permute.xlu0 %1831
      %1833 = vrot.lane.b32.xlu0 %v974, 112
      %v1834 = vpop.permute.xlu0 %1833
      %v1835 = vsel %vm591, %v1832, %v1834
      %v1836 = vsel %vm591, %v1834, %v1832
      %v1837 = vmul.f32 %v1835, %v597
      %v1838 = vmul.f32 %v1836, %v601
      %v1841 = vrot.slane %v1837, 4
      %v1842 = vrot.slane %v1838, 4
      %1845 = vst [vmem:[#allocation2 + $0x30] sm:$0xf0] %v1841
      %1846 = vst [vmem:[#allocation2 + $0x38] sm:$0xf0] %v1842
      %1847 = vrot.lane.b32.xlu0 %v404, 111
      %v1848 = vpop.permute.xlu0 %1847
      %1849 = vrot.lane.b32.xlu0 %v974, 111
      %v1850 = vpop.permute.xlu0 %1849
      %v1851 = vsel %vm616, %v1848, %v1850
      %v1852 = vsel %vm616, %v1850, %v1848
      %v1853 = vmul.f32 %v1851, %v622
      %v1854 = vmul.f32 %v1852, %v626
      %1855 = vst [vmem:[#allocation2 + $0x40] sm:$0xf] %v1853
      %1856 = vst [vmem:[#allocation2 + $0x48] sm:$0xf] %v1854
      %v1857 = vld [vmem:[#allocation2] sm:$0xff]
      %v1858 = vld [vmem:[#allocation2 + $0x8] sm:$0xff]
      %v1859 = vld [vmem:[#allocation2 + $0x10] sm:$0xff]
      %v1860 = vld [vmem:[#allocation2 + $0x18] sm:$0xff]
      %v1861 = vld [vmem:[#allocation2 + $0x20] sm:$0xff]
      %v1862 = vld [vmem:[#allocation2 + $0x28] sm:$0xff]
      %v1863 = vld [vmem:[#allocation2 + $0x30] sm:$0xff]
      %v1864 = vld [vmem:[#allocation2 + $0x38] sm:$0xff]
      %v1865 = vld [vmem:[#allocation2 + $0x40] sm:$0xf]
      %v1866 = vld [vmem:[#allocation2 + $0x48] sm:$0xf]
      %v1868 = vsel %vm641, %v414, 0
      %v1871 = vsel %vm645, %v1865, 0
      %v1874 = vsel %vm645, %v1866, 0
      %1876 = vmatprep.subr.mxu0 0.0
      %1877 = vmatpush1.msra.mxu0 0.0
      %1878 = vmatprep.subr.mxu0 0.0
      %1879 = vmatpush1.msra.mxu0 0.0
      %1880 = vmatprep.subr.mxu0 0.0
      %1881 = vmatpush1.msra.mxu0 0.0
      %1882 = vmatprep.subr.mxu0 0.0
      %1883 = vmatpush1.msra.mxu0 0.0
      %1884 = vmatprep.subr.mxu0 0.0
      %1885 = vmatpush1.msra.mxu0 0.0
      %1886 = vmatprep.subr.mxu0 0.0
      %1887 = vmatpush1.msra.mxu0 0.0
      %1888 = vmatprep.subr.mxu0 0.0
      %1889 = vmatpush1.msra.mxu0 0.0
      %1890 = vmatprep.subr.mxu0 0.0
      %1891 = vmatpush1.msra.mxu0 0.0
      %1892 = vmatprep.subr.mxu0 0.0
      %1893 = vmatpush1.msra.mxu0 0.0
      %1894 = vmatprep.subr.mxu0 0.0
      %1895 = vmatpush1.msra.mxu0 0.0
      %1896 = vmatprep.subr.mxu0 0.0
      %1897 = vmatpush1.msra.mxu0 0.0
      %1898 = vmatprep.subr.mxu0 %v1874
      %1899 = vmatpush1.msra.mxu0 %v1871
      %1900 = vmatprep.subr.mxu0 %v1864
      %1901 = vmatpush1.msra.mxu0 %v1863
      %1902 = vmatprep.subr.mxu0 %v1862
      %1903 = vmatpush1.msra.mxu0 %v1861
      %1904 = vmatprep.subr.mxu0 %v1860
      %1905 = vmatpush1.msra.mxu0 %v1859
      %1906 = vmatprep.subr.mxu0 %v1858
      %1907 = vmatpush1.msra.mxu0 %v1857
      %1908 = vmatprep.subr.mxu0 0.0
      %1909 = vmatpush2.msra.mxu0 0.0
      %1910 = vmatprep.subr.mxu0 0.0
      %1911 = vmatpush2.msra.mxu0 0.0
      %1912 = vmatprep.subr.mxu0 0.0
      %1913 = vmatpush2.msra.mxu0 0.0
      %1914 = vmatprep.subr.mxu0 0.0
      %1915 = vmatpush2.msra.mxu0 0.0
      %1916 = vmatprep.subr.mxu0 0.0
      %1917 = vmatpush2.msra.mxu0 0.0
      %1918 = vmatprep.subr.mxu0 0.0
      %1919 = vmatpush2.msra.mxu0 0.0
      %1920 = vmatprep.subr.mxu0 0.0
      %1921 = vmatpush2.msra.mxu0 0.0
      %1922 = vmatprep.subr.mxu0 0.0
      %1923 = vmatpush2.msra.mxu0 0.0
      %1924 = vmatprep.subr.mxu0 0.0
      %1925 = vmatpush2.msra.mxu0 0.0
      %1926 = vmatprep.subr.mxu0 0.0
      %1927 = vmatpush2.msra.mxu0 0.0
      %1928 = vmatprep.subr.mxu0 0.0
      %1929 = vmatpush2.msra.mxu0 0.0
      %1930 = vmatprep.subr.mxu0 0.0
      %1931 = vmatpush2.msra.mxu0 0.0
      %1932 = vmatprep.subr.mxu0 0.0
      %1933 = vmatpush2.msra.mxu0 0.0
      %1934 = vmatprep.subr.mxu0 0.0
      %1935 = vmatpush2.msra.mxu0 0.0
      %1936 = vmatprep.subr.mxu0 0.0
      %1937 = vmatpush2.msra.mxu0 0.0
      %1938 = vmatprep.subr.mxu0 0.0
      %1939 = vmatpush2.msra.mxu0 0.0
      %1940 = vmatprep.mubr.f32.mxu0 0.0
      %1941 = vmatmul.mubr.f32.gmra.mxu0 %v1868
      %v1942 = vpop.f32.mrf.mxu0
      %v1943 = vadd.f32 0.0, %v1942
      %v1944 = vpop.f32.mrf.mxu0
      %v1945 = vadd.f32 0.0, %v1944
      %1946 = vdwg.mxu0
      %v1948 = vlaneseq
      %v1949 = vshrl.u32 %v1948, 7
      %v1950 = vsub.s32 0, %v1949
      %v1951 = vrot.slane %v410, %v1950
      %v1952 = vlaneseq
      %v1953 = vshrl.u32 %v1952, 7
      %v1954 = vsub.s32 4, %v1953
      %v1955 = vrot.slane %v410, %v1954
      %v1958 = vlaneseq
      %v1959 = vshrl.u32 %v1958, 7
      %v1960 = vsub.s32 0, %v1959
      %v1961 = vrot.slane %v1951, %v1960
      %v1962 = vlaneseq
      %v1963 = vshrl.u32 %v1962, 7
      %v1964 = vsub.s32 0, %v1963
      %v1965 = vrot.slane %v1955, %v1964
      %v1966 = vmul.f32 %v1943, %v1961
      %v1967 = vmul.f32 %v1945, %v1965
      %1968 = vrot.lane.b32.xlu0 %v1943, 1
      %v1969 = vpop.permute.xlu0 %1968
      %1970 = vrot.lane.b32.xlu0 %v1945, 1
      %v1971 = vpop.permute.xlu0 %1970
      %v1972 = vsel %vm504, %v1969, %v1971
      %v1973 = vsel %vm504, %v1971, %v1969
      %v1974 = vlaneseq
      %v1975 = vshrl.u32 %v1974, 7
      %v1976 = vsub.s32 1, %v1975
      %v1977 = vrot.slane %v410, %v1976
      %v1978 = vlaneseq
      %v1979 = vshrl.u32 %v1978, 7
      %v1980 = vsub.s32 5, %v1979
      %v1981 = vrot.slane %v410, %v1980
      %v1984 = vlaneseq
      %v1985 = vshrl.u32 %v1984, 7
      %v1986 = vsub.s32 1, %v1985
      %v1987 = vrot.slane %v1977, %v1986
      %v1988 = vlaneseq
      %v1989 = vshrl.u32 %v1988, 7
      %v1990 = vsub.s32 1, %v1989
      %v1991 = vrot.slane %v1981, %v1990
      %v1992 = vmul.f32 %v1973, %v1987
      %v1993 = vmul.f32 %v1972, %v1991
      %v1994 = vadd.f32 %v1966, %v1992
      %v1995 = vadd.f32 %v1967, %v1993
      %1996 = vrot.lane.b32.xlu0 %v1943, 16
      %v1997 = vpop.permute.xlu0 %1996
      %1998 = vrot.lane.b32.xlu0 %v1945, 16
      %v1999 = vpop.permute.xlu0 %1998
      %v2000 = vsel %vm460, %v1997, %v1999
      %v2001 = vsel %vm460, %v1999, %v1997
      %v2002 = vlaneseq
      %v2003 = vshrl.u32 %v2002, 7
      %v2004 = vsub.s32 2, %v2003
      %v2005 = vrot.slane %v410, %v2004
      %v2006 = vlaneseq
      %v2007 = vshrl.u32 %v2006, 7
      %v2008 = vsub.s32 6, %v2007
      %v2009 = vrot.slane %v410, %v2008
      %v2012 = vlaneseq
      %v2013 = vshrl.u32 %v2012, 7
      %v2014 = vsub.s32 2, %v2013
      %v2015 = vrot.slane %v2005, %v2014
      %v2016 = vlaneseq
      %v2017 = vshrl.u32 %v2016, 7
      %v2018 = vsub.s32 2, %v2017
      %v2019 = vrot.slane %v2009, %v2018
      %v2020 = vmul.f32 %v2001, %v2015
      %v2021 = vmul.f32 %v2000, %v2019
      %v2022 = vadd.f32 %v1994, %v2020
      %v2023 = vadd.f32 %v1995, %v2021
      %2024 = vrot.lane.b32.xlu0 %v1943, 17
      %v2025 = vpop.permute.xlu0 %2024
      %2026 = vrot.lane.b32.xlu0 %v1945, 17
      %v2027 = vpop.permute.xlu0 %2026
      %v2028 = vsel %vm441, %v2025, %v2027
      %v2029 = vsel %vm441, %v2027, %v2025
      %v2030 = vlaneseq
      %v2031 = vshrl.u32 %v2030, 7
      %v2032 = vsub.s32 3, %v2031
      %v2033 = vrot.slane %v410, %v2032
      %v2034 = vlaneseq
      %v2035 = vshrl.u32 %v2034, 7
      %v2036 = vsub.s32 7, %v2035
      %v2037 = vrot.slane %v410, %v2036
      %v2040 = vlaneseq
      %v2041 = vshrl.u32 %v2040, 7
      %v2042 = vsub.s32 3, %v2041
      %v2043 = vrot.slane %v2033, %v2042
      %v2044 = vlaneseq
      %v2045 = vshrl.u32 %v2044, 7
      %v2046 = vsub.s32 3, %v2045
      %v2047 = vrot.slane %v2037, %v2046
      %v2048 = vmul.f32 %v2029, %v2043
      %v2049 = vmul.f32 %v2028, %v2047
      %v2050 = vadd.f32 %v2022, %v2048
      %v2051 = vadd.f32 %v2023, %v2049
      %v2053 = vsel %vm645, %v2050, 0
      %v2056 = vsel %vm645, %v2051, 0
      %2058 = vmatprep.subr.mxu0 0.0
      %2059 = vmatpush1.msra.mxu0 0.0
      %2060 = vmatprep.subr.mxu0 0.0
      %2061 = vmatpush1.msra.mxu0 0.0
      %2062 = vmatprep.subr.mxu0 0.0
      %2063 = vmatpush1.msra.mxu0 0.0
      %2064 = vmatprep.subr.mxu0 0.0
      %2065 = vmatpush1.msra.mxu0 0.0
      %2066 = vmatprep.subr.mxu0 0.0
      %2067 = vmatpush1.msra.mxu0 0.0
      %2068 = vmatprep.subr.mxu0 0.0
      %2069 = vmatpush1.msra.mxu0 0.0
      %2070 = vmatprep.subr.mxu0 0.0
      %2071 = vmatpush1.msra.mxu0 0.0
      %2072 = vmatprep.subr.mxu0 0.0
      %2073 = vmatpush1.msra.mxu0 0.0
      %2074 = vmatprep.subr.mxu0 0.0
      %2075 = vmatpush1.msra.mxu0 0.0
      %2076 = vmatprep.subr.mxu0 0.0
      %2077 = vmatpush1.msra.mxu0 0.0
      %2078 = vmatprep.subr.mxu0 0.0
      %2079 = vmatpush1.msra.mxu0 0.0
      %2080 = vmatprep.subr.mxu0 0.0
      %2081 = vmatpush1.msra.mxu0 0.0
      %2082 = vmatprep.subr.mxu0 0.0
      %2083 = vmatpush1.msra.mxu0 0.0
      %2084 = vmatprep.subr.mxu0 0.0
      %2085 = vmatpush1.msra.mxu0 0.0
      %2086 = vmatprep.subr.mxu0 0.0
      %2087 = vmatpush1.msra.mxu0 0.0
      %2088 = vmatprep.subr.mxu0 %v2056
      %2089 = vmatpush1.msra.mxu0 %v2053
      %2090 = vmatprep.subr.mxu0 0.0
      %2091 = vmatpush2.msra.mxu0 0.0
      %2092 = vmatprep.subr.mxu0 0.0
      %2093 = vmatpush2.msra.mxu0 0.0
      %2094 = vmatprep.subr.mxu0 0.0
      %2095 = vmatpush2.msra.mxu0 0.0
      %2096 = vmatprep.subr.mxu0 0.0
      %2097 = vmatpush2.msra.mxu0 0.0
      %2098 = vmatprep.subr.mxu0 0.0
      %2099 = vmatpush2.msra.mxu0 0.0
      %2100 = vmatprep.subr.mxu0 0.0
      %2101 = vmatpush2.msra.mxu0 0.0
      %2102 = vmatprep.subr.mxu0 0.0
      %2103 = vmatpush2.msra.mxu0 0.0
      %2104 = vmatprep.subr.mxu0 0.0
      %2105 = vmatpush2.msra.mxu0 0.0
      %2106 = vmatprep.subr.mxu0 0.0
      %2107 = vmatpush2.msra.mxu0 0.0
      %2108 = vmatprep.subr.mxu0 0.0
      %2109 = vmatpush2.msra.mxu0 0.0
      %2110 = vmatprep.subr.mxu0 0.0
      %2111 = vmatpush2.msra.mxu0 0.0
      %2112 = vmatprep.subr.mxu0 0.0
      %2113 = vmatpush2.msra.mxu0 0.0
      %2114 = vmatprep.subr.mxu0 0.0
      %2115 = vmatpush2.msra.mxu0 0.0
      %2116 = vmatprep.subr.mxu0 0.0
      %2117 = vmatpush2.msra.mxu0 0.0
      %2118 = vmatprep.subr.mxu0 0.0
      %2119 = vmatpush2.msra.mxu0 0.0
      %2120 = vmatprep.subr.mxu0 0.0
      %2121 = vmatpush2.msra.mxu0 0.0
      %2122 = vmatprep.mubr.f32.mxu0 0.0
      %2123 = vmatmul.mubr.f32.gmra.mxu0 %v725
      %v2124 = vpop.f32.mrf.mxu0
      %v2125 = vadd.f32 0.0, %v2124
      %v2126 = vpop.f32.mrf.mxu0
      %v2127 = vadd.f32 0.0, %v2126
      %2128 = vdwg.mxu0
      %v2129 = vlaneseq
      %v2130 = vshrl.u32 %v2129, 7
      %v2131 = vsub.s32 0, %v2130
      %v2132 = vrot.slane %v2125, %v2131
      %v2133 = vlaneseq
      %v2134 = vshrl.u32 %v2133, 7
      %v2135 = vsub.s32 0, %v2134
      %v2136 = vrot.slane %v2127, %v2135
      %v2137 = vsub.f32 %v2050, %v2132
      %v2138 = vsub.f32 %v2051, %v2136
      %v2139 = vmul.f32 %v2137, %v2137
      %v2140 = vmul.f32 %v2138, %v2138
      %v2142 = vsel %vm645, %v2139, 0
      %v2145 = vsel %vm645, %v2140, 0
      %2147 = vmatprep.subr.mxu0 0.0
      %2148 = vmatpush1.msra.mxu0 0.0
      %2149 = vmatprep.subr.mxu0 0.0
      %2150 = vmatpush1.msra.mxu0 0.0
      %2151 = vmatprep.subr.mxu0 0.0
      %2152 = vmatpush1.msra.mxu0 0.0
      %2153 = vmatprep.subr.mxu0 0.0
      %2154 = vmatpush1.msra.mxu0 0.0
      %2155 = vmatprep.subr.mxu0 0.0
      %2156 = vmatpush1.msra.mxu0 0.0
      %2157 = vmatprep.subr.mxu0 0.0
      %2158 = vmatpush1.msra.mxu0 0.0
      %2159 = vmatprep.subr.mxu0 0.0
      %2160 = vmatpush1.msra.mxu0 0.0
      %2161 = vmatprep.subr.mxu0 0.0
      %2162 = vmatpush1.msra.mxu0 0.0
      %2163 = vmatprep.subr.mxu0 0.0
      %2164 = vmatpush1.msra.mxu0 0.0
      %2165 = vmatprep.subr.mxu0 0.0
      %2166 = vmatpush1.msra.mxu0 0.0
      %2167 = vmatprep.subr.mxu0 0.0
      %2168 = vmatpush1.msra.mxu0 0.0
      %2169 = vmatprep.subr.mxu0 0.0
      %2170 = vmatpush1.msra.mxu0 0.0
      %2171 = vmatprep.subr.mxu0 0.0
      %2172 = vmatpush1.msra.mxu0 0.0
      %2173 = vmatprep.subr.mxu0 0.0
      %2174 = vmatpush1.msra.mxu0 0.0
      %2175 = vmatprep.subr.mxu0 0.0
      %2176 = vmatpush1.msra.mxu0 0.0
      %2177 = vmatprep.subr.mxu0 %v2145
      %2178 = vmatpush1.msra.mxu0 %v2142
      %2179 = vmatprep.subr.mxu0 0.0
      %2180 = vmatpush2.msra.mxu0 0.0
      %2181 = vmatprep.subr.mxu0 0.0
      %2182 = vmatpush2.msra.mxu0 0.0
      %2183 = vmatprep.subr.mxu0 0.0
      %2184 = vmatpush2.msra.mxu0 0.0
      %2185 = vmatprep.subr.mxu0 0.0
      %2186 = vmatpush2.msra.mxu0 0.0
      %2187 = vmatprep.subr.mxu0 0.0
      %2188 = vmatpush2.msra.mxu0 0.0
      %2189 = vmatprep.subr.mxu0 0.0
      %2190 = vmatpush2.msra.mxu0 0.0
      %2191 = vmatprep.subr.mxu0 0.0
      %2192 = vmatpush2.msra.mxu0 0.0
      %2193 = vmatprep.subr.mxu0 0.0
      %2194 = vmatpush2.msra.mxu0 0.0
      %2195 = vmatprep.subr.mxu0 0.0
      %2196 = vmatpush2.msra.mxu0 0.0
      %2197 = vmatprep.subr.mxu0 0.0
      %2198 = vmatpush2.msra.mxu0 0.0
      %2199 = vmatprep.subr.mxu0 0.0
      %2200 = vmatpush2.msra.mxu0 0.0
      %2201 = vmatprep.subr.mxu0 0.0
      %2202 = vmatpush2.msra.mxu0 0.0
      %2203 = vmatprep.subr.mxu0 0.0
      %2204 = vmatpush2.msra.mxu0 0.0
      %2205 = vmatprep.subr.mxu0 0.0
      %2206 = vmatpush2.msra.mxu0 0.0
      %2207 = vmatprep.subr.mxu0 0.0
      %2208 = vmatpush2.msra.mxu0 0.0
      %2209 = vmatprep.subr.mxu0 0.0
      %2210 = vmatpush2.msra.mxu0 0.0
      %2211 = vmatprep.mubr.f32.mxu0 0.0
      %2212 = vmatmul.mubr.f32.gmra.mxu0 %v725
      %v2213 = vpop.f32.mrf.mxu0
      %v2214 = vadd.f32 1e-06, %v2213
      %v2215 = vpop.f32.mrf.mxu0
      %v2216 = vadd.f32 1e-06, %v2215
      %2217 = vdwg.mxu0
      %v2218 = vrsqrt.pop %v2214
      %v2219 = vrsqrt.pop %v2216
      %v2220 = vlaneseq
      %v2221 = vshrl.u32 %v2220, 7
      %v2222 = vsub.s32 0, %v2221
      %v2223 = vrot.slane %v2218, %v2222
      %v2224 = vlaneseq
      %v2225 = vshrl.u32 %v2224, 7
      %v2226 = vsub.s32 0, %v2225
      %v2227 = vrot.slane %v2219, %v2226
      %v2228 = vmul.f32 %v2137, %v2223
      %v2229 = vmul.f32 %v2138, %v2227
      %2230 = vset.pattern.permute.xlu0 3
      %2231 = vperm.xlu0 %2230, %v416
      %v2232 = vpop.permute.xlu0 %2231
      %v2234 = vmul.f32 %v2232, %v2228
      %v2235 = vmul.f32 %v2232, %v2229
      %2236 = vset.pattern.permute.xlu0 3
      %2237 = vperm.xlu0 %2236, %v417
      %v2238 = vpop.permute.xlu0 %2237
      %v2240 = vadd.f32 %v2234, %v2238
      %v2241 = vadd.f32 %v2235, %v2238
      %v2242 = vmul.f32 %v2240, 0.5
      %v2243 = vmul.f32 %v2241, 0.5
      %v2244 = vmul.f32 %v2240, 0.70710677
      %v2245 = vmul.f32 %v2241, 0.70710677
      %v2246 = vand.u32 2147483647, %v2244
      %v2247 = vand.u32 2147483647, %v2245
      %v2248 = vmul.f32 %v2246, 0.3275911
      %v2249 = vmul.f32 %v2247, 0.3275911
      %v2250 = vadd.f32 %v2248, 1.0
      %v2251 = vadd.f32 %v2249, 1.0
      %v2252 = vrcp.pop %v2250
      %v2253 = vmul.f32 1.0, %v2252
      %v2254 = vrcp.pop %v2251
      %v2255 = vmul.f32 1.0, %v2254
      %v2256 = vmul.f32 %v2253, 1.0614054
      %v2257 = vmul.f32 %v2255, 1.0614054
      %v2258 = vadd.f32 %v2256, -1.4531521
      %v2259 = vadd.f32 %v2257, -1.4531521
      %v2260 = vmul.f32 %v2253, %v2258
      %v2261 = vmul.f32 %v2255, %v2259
      %v2262 = vadd.f32 %v2260, 1.4214138
      %v2263 = vadd.f32 %v2261, 1.4214138
      %v2264 = vmul.f32 %v2253, %v2262
      %v2265 = vmul.f32 %v2255, %v2263
      %v2266 = vadd.f32 %v2264, -0.28449672
      %v2267 = vadd.f32 %v2265, -0.28449672
      %v2268 = vmul.f32 %v2253, %v2266
      %v2269 = vmul.f32 %v2255, %v2267
      %v2270 = vadd.f32 %v2268, 0.2548296
      %v2271 = vadd.f32 %v2269, 0.2548296
      %v2272 = vmul.f32 %v2253, %v2270
      %v2273 = vmul.f32 %v2255, %v2271
      %v2274 = vsub.f32 0.0, %v2246
      %v2275 = vsub.f32 0.0, %v2247
      %v2276 = vmul.f32 %v2274, %v2246
      %v2277 = vmul.f32 %v2275, %v2247
      %v2278 = vmul.f32 %v2276, 1.442695
      %v2279 = vpow.pop %v2278
      %v2280 = vmul.f32 %v2277, 1.442695
      %v2281 = vpow.pop %v2280
      %v2282 = vmul.f32 %v2272, %v2279
      %v2283 = vmul.f32 %v2273, %v2281
      %v2284 = vsub.f32 1.0, %v2282
      %v2285 = vsub.f32 1.0, %v2283
      %vm2286 = vcmp.lt.f32.partialorder %v2244, 0.0
      %vm2287 = vcmp.lt.f32.partialorder %v2245, 0.0
      %v2288 = vsub.f32 0.0, %v2284
      %v2289 = vsub.f32 0.0, %v2285
      %v2290 = vsel %vm2286, %v2288, %v2284
      %v2291 = vsel %vm2287, %v2289, %v2285
      %v2292 = vadd.f32 %v2290, 1.0
      %v2293 = vadd.f32 %v2291, 1.0
      %v2294 = vmul.f32 %v2242, %v2292
      %v2295 = vmul.f32 %v2243, %v2293
      %2296 = vrot.lane.b32.xlu0 %v2294, 17
      %v2297 = vpop.permute.xlu0 %2296
      %2298 = vrot.lane.b32.xlu0 %v2295, 17
      %v2299 = vpop.permute.xlu0 %2298
      %v2300 = vsel %vm441, %v2297, %v2299
      %v2301 = vsel %vm441, %v2299, %v2297
      %v2302 = vmul.f32 %v2301, %v447
      %v2303 = vmul.f32 %v2300, %v451
      %2304 = vst [vmem:[#allocation2] sm:$0xf] %v2302
      %2305 = vst [vmem:[#allocation2 + $0x8] sm:$0xf] %v2303
      %2306 = vrot.lane.b32.xlu0 %v2294, 16
      %v2307 = vpop.permute.xlu0 %2306
      %2308 = vrot.lane.b32.xlu0 %v2295, 16
      %v2309 = vpop.permute.xlu0 %2308
      %v2310 = vsel %vm460, %v2307, %v2309
      %v2311 = vsel %vm460, %v2309, %v2307
      %v2312 = vmul.f32 %v2311, %v466
      %v2313 = vmul.f32 %v2310, %v470
      %v2316 = vrot.slane %v2312, 4
      %v2317 = vrot.slane %v2313, 4
      %2320 = vst [vmem:[#allocation2] sm:$0xf0] %v2316
      %2321 = vst [vmem:[#allocation2 + $0x8] sm:$0xf0] %v2317
      %2322 = vrot.lane.b32.xlu0 %v2294, 15
      %v2323 = vpop.permute.xlu0 %2322
      %2324 = vrot.lane.b32.xlu0 %v2295, 15
      %v2325 = vpop.permute.xlu0 %2324
      %v2326 = vsel %vm485, %v2323, %v2325
      %v2327 = vsel %vm485, %v2325, %v2323
      %v2328 = vmul.f32 %v2327, %v491
      %v2329 = vmul.f32 %v2326, %v495
      %2330 = vst [vmem:[#allocation2 + $0x10] sm:$0xf] %v2328
      %2331 = vst [vmem:[#allocation2 + $0x18] sm:$0xf] %v2329
      %2332 = vrot.lane.b32.xlu0 %v2294, 1
      %v2333 = vpop.permute.xlu0 %2332
      %2334 = vrot.lane.b32.xlu0 %v2295, 1
      %v2335 = vpop.permute.xlu0 %2334
      %v2336 = vsel %vm504, %v2333, %v2335
      %v2337 = vsel %vm504, %v2335, %v2333
      %v2338 = vmul.f32 %v2337, %v510
      %v2339 = vmul.f32 %v2336, %v514
      %v2342 = vrot.slane %v2338, 4
      %v2343 = vrot.slane %v2339, 4
      %2346 = vst [vmem:[#allocation2 + $0x10] sm:$0xf0] %v2342
      %2347 = vst [vmem:[#allocation2 + $0x18] sm:$0xf0] %v2343
      %v2348 = vmul.f32 %v2294, %v528
      %v2349 = vmul.f32 %v2295, %v532
      %2350 = vst [vmem:[#allocation2 + $0x20] sm:$0xf] %v2348
      %2351 = vst [vmem:[#allocation2 + $0x28] sm:$0xf] %v2349
      %2352 = vrot.lane.b32.xlu0 %v2294, 127
      %v2353 = vpop.permute.xlu0 %2352
      %2354 = vrot.lane.b32.xlu0 %v2295, 127
      %v2355 = vpop.permute.xlu0 %2354
      %v2356 = vsel %vm547, %v2353, %v2355
      %v2357 = vsel %vm547, %v2355, %v2353
      %v2358 = vmul.f32 %v2356, %v553
      %v2359 = vmul.f32 %v2357, %v557
      %v2362 = vrot.slane %v2358, 4
      %v2363 = vrot.slane %v2359, 4
      %2366 = vst [vmem:[#allocation2 + $0x20] sm:$0xf0] %v2362
      %2367 = vst [vmem:[#allocation2 + $0x28] sm:$0xf0] %v2363
      %2368 = vrot.lane.b32.xlu0 %v2294, 113
      %v2369 = vpop.permute.xlu0 %2368
      %2370 = vrot.lane.b32.xlu0 %v2295, 113
      %v2371 = vpop.permute.xlu0 %2370
      %v2372 = vsel %vm572, %v2369, %v2371
      %v2373 = vsel %vm572, %v2371, %v2369
      %v2374 = vmul.f32 %v2372, %v578
      %v2375 = vmul.f32 %v2373, %v582
      %2376 = vst [vmem:[#allocation2 + $0x30] sm:$0xf] %v2374
      %2377 = vst [vmem:[#allocation2 + $0x38] sm:$0xf] %v2375
      %2378 = vrot.lane.b32.xlu0 %v2294, 112
      %v2379 = vpop.permute.xlu0 %2378
      %2380 = vrot.lane.b32.xlu0 %v2295, 112
      %v2381 = vpop.permute.xlu0 %2380
      %v2382 = vsel %vm591, %v2379, %v2381
      %v2383 = vsel %vm591, %v2381, %v2379
      %v2384 = vmul.f32 %v2382, %v597
      %v2385 = vmul.f32 %v2383, %v601
      %v2388 = vrot.slane %v2384, 4
      %v2389 = vrot.slane %v2385, 4
      %2392 = vst [vmem:[#allocation2 + $0x30] sm:$0xf0] %v2388
      %2393 = vst [vmem:[#allocation2 + $0x38] sm:$0xf0] %v2389
      %2394 = vrot.lane.b32.xlu0 %v2294, 111
      %v2395 = vpop.permute.xlu0 %2394
      %2396 = vrot.lane.b32.xlu0 %v2295, 111
      %v2397 = vpop.permute.xlu0 %2396
      %v2398 = vsel %vm616, %v2395, %v2397
      %v2399 = vsel %vm616, %v2397, %v2395
      %v2400 = vmul.f32 %v2398, %v622
      %v2401 = vmul.f32 %v2399, %v626
      %2402 = vst [vmem:[#allocation2 + $0x40] sm:$0xf] %v2400
      %2403 = vst [vmem:[#allocation2 + $0x48] sm:$0xf] %v2401
      %v2404 = vld [vmem:[#allocation2] sm:$0xff]
      %v2405 = vld [vmem:[#allocation2 + $0x8] sm:$0xff]
      %v2406 = vld [vmem:[#allocation2 + $0x10] sm:$0xff]
      %v2407 = vld [vmem:[#allocation2 + $0x18] sm:$0xff]
      %v2408 = vld [vmem:[#allocation2 + $0x20] sm:$0xff]
      %v2409 = vld [vmem:[#allocation2 + $0x28] sm:$0xff]
      %v2410 = vld [vmem:[#allocation2 + $0x30] sm:$0xff]
      %v2411 = vld [vmem:[#allocation2 + $0x38] sm:$0xff]
      %v2412 = vld [vmem:[#allocation2 + $0x40] sm:$0xf]
      %v2413 = vld [vmem:[#allocation2 + $0x48] sm:$0xf]
      %v2415 = vsel %vm641, %v415, 0
      %v2418 = vsel %vm645, %v2412, 0
      %v2421 = vsel %vm645, %v2413, 0
      %2423 = vmatprep.subr.mxu0 0.0
      %2424 = vmatpush1.msra.mxu0 0.0
      %2425 = vmatprep.subr.mxu0 0.0
      %2426 = vmatpush1.msra.mxu0 0.0
      %2427 = vmatprep.subr.mxu0 0.0
      %2428 = vmatpush1.msra.mxu0 0.0
      %2429 = vmatprep.subr.mxu0 0.0
      %2430 = vmatpush1.msra.mxu0 0.0
      %2431 = vmatprep.subr.mxu0 0.0
      %2432 = vmatpush1.msra.mxu0 0.0
      %2433 = vmatprep.subr.mxu0 0.0
      %2434 = vmatpush1.msra.mxu0 0.0
      %2435 = vmatprep.subr.mxu0 0.0
      %2436 = vmatpush1.msra.mxu0 0.0
      %2437 = vmatprep.subr.mxu0 0.0
      %2438 = vmatpush1.msra.mxu0 0.0
      %2439 = vmatprep.subr.mxu0 0.0
      %2440 = vmatpush1.msra.mxu0 0.0
      %2441 = vmatprep.subr.mxu0 0.0
      %2442 = vmatpush1.msra.mxu0 0.0
      %2443 = vmatprep.subr.mxu0 0.0
      %2444 = vmatpush1.msra.mxu0 0.0
      %2445 = vmatprep.subr.mxu0 %v2421
      %2446 = vmatpush1.msra.mxu0 %v2418
      %2447 = vmatprep.subr.mxu0 %v2411
      %2448 = vmatpush1.msra.mxu0 %v2410
      %2449 = vmatprep.subr.mxu0 %v2409
      %2450 = vmatpush1.msra.mxu0 %v2408
      %2451 = vmatprep.subr.mxu0 %v2407
      %2452 = vmatpush1.msra.mxu0 %v2406
      %2453 = vmatprep.subr.mxu0 %v2405
      %2454 = vmatpush1.msra.mxu0 %v2404
      %2455 = vmatprep.subr.mxu0 0.0
      %2456 = vmatpush2.msra.mxu0 0.0
      %2457 = vmatprep.subr.mxu0 0.0
      %2458 = vmatpush2.msra.mxu0 0.0
      %2459 = vmatprep.subr.mxu0 0.0
      %2460 = vmatpush2.msra.mxu0 0.0
      %2461 = vmatprep.subr.mxu0 0.0
      %2462 = vmatpush2.msra.mxu0 0.0
      %2463 = vmatprep.subr.mxu0 0.0
      %2464 = vmatpush2.msra.mxu0 0.0
      %2465 = vmatprep.subr.mxu0 0.0
      %2466 = vmatpush2.msra.mxu0 0.0
      %2467 = vmatprep.subr.mxu0 0.0
      %2468 = vmatpush2.msra.mxu0 0.0
      %2469 = vmatprep.subr.mxu0 0.0
      %2470 = vmatpush2.msra.mxu0 0.0
      %2471 = vmatprep.subr.mxu0 0.0
      %2472 = vmatpush2.msra.mxu0 0.0
      %2473 = vmatprep.subr.mxu0 0.0
      %2474 = vmatpush2.msra.mxu0 0.0
      %2475 = vmatprep.subr.mxu0 0.0
      %2476 = vmatpush2.msra.mxu0 0.0
      %2477 = vmatprep.subr.mxu0 0.0
      %2478 = vmatpush2.msra.mxu0 0.0
      %2479 = vmatprep.subr.mxu0 0.0
      %2480 = vmatpush2.msra.mxu0 0.0
      %2481 = vmatprep.subr.mxu0 0.0
      %2482 = vmatpush2.msra.mxu0 0.0
      %2483 = vmatprep.subr.mxu0 0.0
      %2484 = vmatpush2.msra.mxu0 0.0
      %2485 = vmatprep.subr.mxu0 0.0
      %2486 = vmatpush2.msra.mxu0 0.0
      %2487 = vmatprep.mubr.f32.mxu0 0.0
      %2488 = vmatmul.mubr.f32.gmra.mxu0 %v2415
      %v2489 = vpop.f32.mrf.mxu0
      %v2490 = vadd.f32 0.0, %v2489
      %v2491 = vpop.f32.mrf.mxu0
      %v2492 = vadd.f32 0.0, %v2491
      %2493 = vdwg.mxu0
      %2495 = vrot.lane.b32.xlu0 %v411, 124
      %v2496 = vpop.permute.xlu0 %2495
      %v2497 = vsel %vm723, %v2496, 0
      %v2500 = vsel %vm645, %v2490, 0
      %v2503 = vsel %vm645, %v2492, 0
      %2505 = vmatprep.subr.mxu0 0.0
      %2506 = vmatpush1.msra.mxu0 0.0
      %2507 = vmatprep.subr.mxu0 0.0
      %2508 = vmatpush1.msra.mxu0 0.0
      %2509 = vmatprep.subr.mxu0 0.0
      %2510 = vmatpush1.msra.mxu0 0.0
      %2511 = vmatprep.subr.mxu0 0.0
      %2512 = vmatpush1.msra.mxu0 0.0
      %2513 = vmatprep.subr.mxu0 0.0
      %2514 = vmatpush1.msra.mxu0 0.0
      %2515 = vmatprep.subr.mxu0 0.0
      %2516 = vmatpush1.msra.mxu0 0.0
      %2517 = vmatprep.subr.mxu0 0.0
      %2518 = vmatpush1.msra.mxu0 0.0
      %2519 = vmatprep.subr.mxu0 0.0
      %2520 = vmatpush1.msra.mxu0 0.0
      %2521 = vmatprep.subr.mxu0 0.0
      %2522 = vmatpush1.msra.mxu0 0.0
      %2523 = vmatprep.subr.mxu0 0.0
      %2524 = vmatpush1.msra.mxu0 0.0
      %2525 = vmatprep.subr.mxu0 0.0
      %2526 = vmatpush1.msra.mxu0 0.0
      %2527 = vmatprep.subr.mxu0 0.0
      %2528 = vmatpush1.msra.mxu0 0.0
      %2529 = vmatprep.subr.mxu0 0.0
      %2530 = vmatpush1.msra.mxu0 0.0
      %2531 = vmatprep.subr.mxu0 0.0
      %2532 = vmatpush1.msra.mxu0 0.0
      %2533 = vmatprep.subr.mxu0 0.0
      %2534 = vmatpush1.msra.mxu0 0.0
      %2535 = vmatprep.subr.mxu0 %v2503
      %2536 = vmatpush1.msra.mxu0 %v2500
      %2537 = vmatprep.subr.mxu0 0.0
      %2538 = vmatpush2.msra.mxu0 0.0
      %2539 = vmatprep.subr.mxu0 0.0
      %2540 = vmatpush2.msra.mxu0 0.0
      %2541 = vmatprep.subr.mxu0 0.0
      %2542 = vmatpush2.msra.mxu0 0.0
      %2543 = vmatprep.subr.mxu0 0.0
      %2544 = vmatpush2.msra.mxu0 0.0
      %2545 = vmatprep.subr.mxu0 0.0
      %2546 = vmatpush2.msra.mxu0 0.0
      %2547 = vmatprep.subr.mxu0 0.0
      %2548 = vmatpush2.msra.mxu0 0.0
      %2549 = vmatprep.subr.mxu0 0.0
      %2550 = vmatpush2.msra.mxu0 0.0
      %2551 = vmatprep.subr.mxu0 0.0
      %2552 = vmatpush2.msra.mxu0 0.0
      %2553 = vmatprep.subr.mxu0 0.0
      %2554 = vmatpush2.msra.mxu0 0.0
      %2555 = vmatprep.subr.mxu0 0.0
      %2556 = vmatpush2.msra.mxu0 0.0
      %2557 = vmatprep.subr.mxu0 0.0
      %2558 = vmatpush2.msra.mxu0 0.0
      %2559 = vmatprep.subr.mxu0 0.0
      %2560 = vmatpush2.msra.mxu0 0.0
      %2561 = vmatprep.subr.mxu0 0.0
      %2562 = vmatpush2.msra.mxu0 0.0
      %2563 = vmatprep.subr.mxu0 0.0
      %2564 = vmatpush2.msra.mxu0 0.0
      %2565 = vmatprep.subr.mxu0 0.0
      %2566 = vmatpush2.msra.mxu0 0.0
      %2567 = vmatprep.subr.mxu0 0.0
      %2568 = vmatpush2.msra.mxu0 0.0
      %2569 = vmatprep.mubr.f32.mxu0 0.0
      %2570 = vmatmul.mubr.f32.gmra.mxu0 %v2497
      %v2571 = vpop.f32.mrf.mxu0
      %v2572 = vadd.f32 0.0, %v2571
      %v2573 = vpop.f32.mrf.mxu0
      %v2574 = vadd.f32 0.0, %v2573
      %2575 = vdwg.mxu0
      %v2576 = vsel %vm723, %v411, 0
      %v2579 = vsel %vm645, %v1745, 0
      %v2582 = vsel %vm645, %v1746, 0
      %2584 = vmatprep.subr.mxu0 0.0
      %2585 = vmatpush1.msra.mxu0 0.0
      %2586 = vmatprep.subr.mxu0 0.0
      %2587 = vmatpush1.msra.mxu0 0.0
      %2588 = vmatprep.subr.mxu0 0.0
      %2589 = vmatpush1.msra.mxu0 0.0
      %2590 = vmatprep.subr.mxu0 0.0
      %2591 = vmatpush1.msra.mxu0 0.0
      %2592 = vmatprep.subr.mxu0 0.0
      %2593 = vmatpush1.msra.mxu0 0.0
      %2594 = vmatprep.subr.mxu0 0.0
      %2595 = vmatpush1.msra.mxu0 0.0
      %2596 = vmatprep.subr.mxu0 0.0
      %2597 = vmatpush1.msra.mxu0 0.0
      %2598 = vmatprep.subr.mxu0 0.0
      %2599 = vmatpush1.msra.mxu0 0.0
      %2600 = vmatprep.subr.mxu0 0.0
      %2601 = vmatpush1.msra.mxu0 0.0
      %2602 = vmatprep.subr.mxu0 0.0
      %2603 = vmatpush1.msra.mxu0 0.0
      %2604 = vmatprep.subr.mxu0 0.0
      %2605 = vmatpush1.msra.mxu0 0.0
      %2606 = vmatprep.subr.mxu0 0.0
      %2607 = vmatpush1.msra.mxu0 0.0
      %2608 = vmatprep.subr.mxu0 0.0
      %2609 = vmatpush1.msra.mxu0 0.0
      %2610 = vmatprep.subr.mxu0 0.0
      %2611 = vmatpush1.msra.mxu0 0.0
      %2612 = vmatprep.subr.mxu0 0.0
      %2613 = vmatpush1.msra.mxu0 0.0
      %2614 = vmatprep.subr.mxu0 %v2582
      %2615 = vmatpush1.msra.mxu0 %v2579
      %2616 = vmatprep.subr.mxu0 0.0
      %2617 = vmatpush2.msra.mxu0 0.0
      %2618 = vmatprep.subr.mxu0 0.0
      %2619 = vmatpush2.msra.mxu0 0.0
      %2620 = vmatprep.subr.mxu0 0.0
      %2621 = vmatpush2.msra.mxu0 0.0
      %2622 = vmatprep.subr.mxu0 0.0
      %2623 = vmatpush2.msra.mxu0 0.0
      %2624 = vmatprep.subr.mxu0 0.0
      %2625 = vmatpush2.msra.mxu0 0.0
      %2626 = vmatprep.subr.mxu0 0.0
      %2627 = vmatpush2.msra.mxu0 0.0
      %2628 = vmatprep.subr.mxu0 0.0
      %2629 = vmatpush2.msra.mxu0 0.0
      %2630 = vmatprep.subr.mxu0 0.0
      %2631 = vmatpush2.msra.mxu0 0.0
      %2632 = vmatprep.subr.mxu0 0.0
      %2633 = vmatpush2.msra.mxu0 0.0
      %2634 = vmatprep.subr.mxu0 0.0
      %2635 = vmatpush2.msra.mxu0 0.0
      %2636 = vmatprep.subr.mxu0 0.0
      %2637 = vmatpush2.msra.mxu0 0.0
      %2638 = vmatprep.subr.mxu0 0.0
      %2639 = vmatpush2.msra.mxu0 0.0
      %2640 = vmatprep.subr.mxu0 0.0
      %2641 = vmatpush2.msra.mxu0 0.0
      %2642 = vmatprep.subr.mxu0 0.0
      %2643 = vmatpush2.msra.mxu0 0.0
      %2644 = vmatprep.subr.mxu0 0.0
      %2645 = vmatpush2.msra.mxu0 0.0
      %2646 = vmatprep.subr.mxu0 0.0
      %2647 = vmatpush2.msra.mxu0 0.0
      %2648 = vmatprep.mubr.f32.mxu0 0.0
      %2649 = vmatmul.mubr.f32.gmra.mxu0 %v2576
      %v2650 = vpop.f32.mrf.mxu0
      %v2651 = vadd.f32 %v2572, %v2650
      %v2652 = vpop.f32.mrf.mxu0
      %v2653 = vadd.f32 %v2574, %v2652
      %2654 = vdwg.mxu0
      %v2655 = vmul.f32 %v2651, %v422
      %v2656 = vmul.f32 %v2653, %v426
      %2657 = vst [vmem:[%s403] sm:$0xff] %v2655
      %2658 = vst [vmem:[%s403 + $0x8] sm:$0xff] %v2656
      %p2659 = scmp.lt.s32.totalorder %s22, 1
      %s2660 = scalar_select %p2659, %s22, 1
      %s2661 = smul.addr %s2660, 2
      %s2662 = smul.addr %s2661, 8
      %s2663 = scalar_lea.vmem %s11, %s2662
      // Predicated region
      $region65: #{mask_cnn_1_forward.1} parent=63 // pred_check
        %p2664 = pneg %p281
      $region66: #{mask_cnn_1_forward.1} parent=63 // pred_check_branch
        %2666 = sbr.rel (%p2664) target = $region68
      $region67: #{mask_cnn_1_forward.1} parent=63 // pred_region
        _
      $region68: #{mask_cnn_1_forward.1} parent=63 // pred_fallthru
        _
    $region64: #{mask_cnn_1_forward.1} parent=5 // pred_fallthru
      _
    %p2667 = scmp.le.s32.totalorder 2, %s17
    // Predicated region
    $region69: #{mask_cnn_1_forward.1} parent=5 // pred_check
      %p2668 = pneg %p2667
    $region70: #{mask_cnn_1_forward.1} parent=5 // pred_check_branch
      %2670 = sbr.rel (%p2668) target = $region72
    $region71: #{mask_cnn_1_forward.1} parent=5 // pred_region
      %s2671 = ssub.s32 %s17, 2
      // Predicated region
      $region73: #{mask_cnn_1_forward.1} parent=71 // pred_check
        %p2672 = pneg %p287
      $region74: #{mask_cnn_1_forward.1} parent=71 // pred_check_branch
        %2674 = sbr.rel (%p2672) target = $region76
      $region75: #{mask_cnn_1_forward.1} parent=71 // pred_region
        %p2675 = scmp.lt.s32.totalorder %s23, 1
        %s2676 = scalar_select %p2675, %s23, 1
        %s2677 = smul.addr %s2676, 2
        %s2678 = smul.addr %s2677, 8
        %s2679 = scalar_lea.vmem %s11, %s2678
      $region76: #{mask_cnn_1_forward.1} parent=71 // pred_fallthru
        _
    $region72: #{mask_cnn_1_forward.1} parent=5 // pred_fallthru
      _
  $region6: #{mask_cnn_1_forward.1} parent=0 // loop_footer
    %s21 = sadd.s32 1, %s17
  $region7: #{mask_cnn_1_forward.1} parent=0 // loop_footer_branch
    %16 = sbr.rel target = $region3
  $region8: #{mask_cnn_1_forward.1} parent=0 // loop_exit
    _

</llo_original>
